<compile_context>
chip_gen: v5e
topology: v5e:2x2
jax: 0.10.0
libtpu: 0.0.40
codegen_flags: <defaults>
</compile_context>

<pallas_src>
import numpy as np
import jax
import jax.numpy as jnp
from jax.experimental import pallas as pl
from jax.experimental.pallas import tpu as pltpu

BN_EPS = 1e-5
C_PAD = 8          # input channels padded 3 -> 8 (matches zero-padded w1 rows)
H1_PAD = 128       # conv1 output channels padded 64 -> 128 (lane-dense, K=128 for conv2)
OUT_PAD = 128      # head output padded 9 -> 128 (lane-dense final store)


def _ceil_div(a, b):
    return -(-a // b)


# ---------------------------------------------------------------------------
# Fused kernel: point MLP + running max over point tiles + FC head
# ---------------------------------------------------------------------------
def stn3d_kernel(x_ref,
                 w1_ref, t1_ref, w2_ref, t2_ref, w3_ref, t3_ref,
                 w4_ref, t4_ref, w5_ref, t5_ref, w6_ref, t6_ref,
                 out_ref, gmax_ref):
    n = pl.program_id(1)
    n_last = pl.num_programs(1) - 1

    @pl.when(n == 0)
    def _():
        gmax_ref[...] = jnp.full_like(gmax_ref, -jnp.inf)

    Bb, TN, C = x_ref.shape
    x = x_ref[...].reshape(Bb * TN, C)                       # bf16 (rows, 8)

    # conv1..conv3 (1x1) as matmuls; bias+BN already folded into (W', t').
    h = jnp.dot(x, w1_ref[...], preferred_element_type=jnp.float32)
    h = jnp.maximum(h + t1_ref[...], 0.0)                    # (rows, 128)
    h = jnp.dot(h.astype(jnp.bfloat16), w2_ref[...],
                preferred_element_type=jnp.float32)
    h = jnp.maximum(h + t2_ref[...], 0.0)                    # (rows, 128)
    # conv3: bias + ReLU deferred past the max-pool (monotone -> exact).
    h = jnp.dot(h.astype(jnp.bfloat16), w3_ref[...],
                preferred_element_type=jnp.float32)          # (rows, 1024) raw

    # running max-pool over the point tiles (exact: duplicates from padding
    # never change the max).
    tile_max = jnp.max(h.reshape(Bb, TN, 1024), axis=1)      # (Bb, 1024)
    gmax_ref[...] = jnp.maximum(gmax_ref[...], tile_max)

    # FC head on the last point tile only.
    @pl.when(n == n_last)
    def _():
        # deferred conv3 bias + ReLU (once per batch block, not per tile)
        g = jnp.maximum(gmax_ref[...] + t3_ref[...], 0.0)    # (Bb, 1024) f32
        g = jnp.dot(g.astype(jnp.bfloat16), w4_ref[...],
                    preferred_element_type=jnp.float32)
        g = jnp.maximum(g + t4_ref[...], 0.0)
        g = jnp.dot(g.astype(jnp.bfloat16), w5_ref[...],
                    preferred_element_type=jnp.float32)
        g = jnp.maximum(g + t5_ref[...], 0.0)
        out = jnp.dot(g.astype(jnp.bfloat16), w6_ref[...],
                      preferred_element_type=jnp.float32)     # (Bb, 128)
        out_ref[0] = out + t6_ref[...]                        # bias + identity folded


# ---------------------------------------------------------------------------
# Parameter construction (deterministic, synthetic, PyTorch-like)
# ---------------------------------------------------------------------------
def make_params(key, input_chann=3):
    dims = [(input_chann, 64), (64, 128), (128, 1024),       # conv1..conv3
            (1024, 512), (512, 256), (256, 9)]               # fc1..fc3
    p = {}
    for i, (cin, cout) in enumerate(dims, start=1):
        key, kw, kb = jax.random.split(key, 3)
        bound = 1.0 / np.sqrt(cin)
        p[f"w{i}"] = jax.random.uniform(kw, (cin, cout), jnp.float32, -bound, bound)
        p[f"b{i}"] = jax.random.uniform(kb, (cout,), jnp.float32, -bound, bound)
    bn_dims = [64, 128, 1024, 512, 256]                      # bn1..bn5
    for i, c in enumerate(bn_dims, start=1):
        key, kg, kb2, km, kv = jax.random.split(key, 5)
        p[f"gamma{i}"] = 1.0 + 0.1 * jax.random.normal(kg, (c,), jnp.float32)
        p[f"beta{i}"]  = 0.1 * jax.random.normal(kb2, (c,), jnp.float32)
        p[f"mean{i}"]  = 0.1 * jax.random.normal(km, (c,), jnp.float32)
        p[f"var{i}"]   = jax.random.uniform(kv, (c,), jnp.float32, 0.5, 1.5)
    return p


def fold_params(p):
    """Fold bias + inference-mode BN into (W', t'); pad for MXU/lane density;
    bf16 weights, f32 shifts."""
    f = {}
    for i in range(1, 6):                                    # layers with BN
        scale = p[f"gamma{i}"] / jnp.sqrt(p[f"var{i}"] + BN_EPS)
        shift = p[f"beta{i}"] - p[f"mean{i}"] * scale
        f[f"w{i}"] = p[f"w{i}"] * scale[None, :]
        f[f"t{i}"] = (p[f"b{i}"] * scale + shift)[None, :]
    iden = jnp.array([1, 0, 0, 0, 1, 0, 0, 0, 1], jnp.float32)
    f["w6"] = p["w6"]
    f["t6"] = (p["b6"] + iden)[None, :]

    # conv1: pad K rows 3 -> C_PAD (zero rows match zero-padded x channels)
    # and output columns 64 -> H1_PAD (exact: w2's matching input rows are 0
    # and t1's padded entries are 0, so padded h1 columns contribute nothing).
    f["w1"] = jnp.pad(f["w1"], ((0, C_PAD - f["w1"].shape[0]),
                                (0, H1_PAD - f["w1"].shape[1])))
    f["t1"] = jnp.pad(f["t1"], ((0, 0), (0, H1_PAD - f["t1"].shape[1])))
    f["w2"] = jnp.pad(f["w2"], ((0, H1_PAD - f["w2"].shape[0]), (0, 0)))

    # head: pad output columns 9 -> OUT_PAD so the final store is lane-dense.
    f["w6"] = jnp.pad(f["w6"], ((0, 0), (0, OUT_PAD - f["w6"].shape[1])))
    f["t6"] = jnp.pad(f["t6"], ((0, 0), (0, OUT_PAD - f["t6"].shape[1])))

    for i in range(1, 7):
        f[f"w{i}"] = f[f"w{i}"].astype(jnp.bfloat16)
    return f


# ---------------------------------------------------------------------------
# Wrapper
# ---------------------------------------------------------------------------
def _resident_spec(arr):
    """Constant-index, single-buffered (resident) operand."""
    try:
        return pl.BlockSpec(arr.shape, lambda b, n: (0, 0),
                            pipeline_mode=pl.Buffered(1))
    except TypeError:                                        # older jax fallback
        return pl.BlockSpec(arr.shape, lambda b, n: (0, 0))


def stn3d_forward(x_ncw, params, *, target_rows=2048, max_point_tile=2048,
                  vmem_limit_bytes=48 * 1024 * 1024):
    """x_ncw: (B, C_in=3, N) float32, same convention as the PyTorch module."""
    B, C_in, N = x_ncw.shape
    fp = fold_params(params)

    # NCW -> (B, N, C); zero-pad channels to C_PAD (matches zero-padded w1 rows).
    x = jnp.transpose(x_ncw, (0, 2, 1))
    x = jnp.pad(x, ((0, 0), (0, 0), (0, C_PAD - C_in)))

    # Point tile: whole point axis if it fits, otherwise 2048-point tiles.
    # Per-step VMEM at rows=2048 is ~14-16 MiB (incl. the 8->128 lane-padded
    # x block and the (rows,1024) f32 conv3 output), well under the explicit
    # 48 MiB limit on every generation.
    if N <= max_point_tile:
        TN = max(8, _ceil_div(N, 8) * 8)
    else:
        TN = max_point_tile
    N_pad = _ceil_div(N, TN) * TN

    # Batch block: fill ~target_rows MXU rows per grid step, but always keep
    # >= 2 batch blocks when B >= 2 so both v7x TensorCores get work on the
    # "parallel" batch axis.
    Bb = max(1, min(B, target_rows // TN))
    if B >= 2:
        Bb = min(Bb, _ceil_div(B, 2))
    B_pad = _ceil_div(B, Bb) * Bb

    # Pad points / batches by replication (exact under the max-pool; padded
    # batch rows are sliced off below).
    if N_pad != N:
        x = jnp.concatenate(
            [x, jnp.broadcast_to(x[:, :1, :], (B, N_pad - N, C_PAD))], axis=1)
    if B_pad != B:
        x = jnp.concatenate(
            [x, jnp.broadcast_to(x[:1], (B_pad - B, N_pad, C_PAD))], axis=0)
    x = x.astype(jnp.bfloat16)

    n_bblk = B_pad // Bb
    n_nblk = N_pad // TN

    out = pl.pallas_call(
        stn3d_kernel,
        out_shape=jax.ShapeDtypeStruct((n_bblk, Bb, OUT_PAD), jnp.float32),
        grid=(n_bblk, n_nblk),
        in_specs=[
            pl.BlockSpec((Bb, TN, C_PAD), lambda b, n: (b, n, 0)),
            _resident_spec(fp["w1"]), _resident_spec(fp["t1"]),
            _resident_spec(fp["w2"]), _resident_spec(fp["t2"]),
            _resident_spec(fp["w3"]), _resident_spec(fp["t3"]),
            _resident_spec(fp["w4"]), _resident_spec(fp["t4"]),
            _resident_spec(fp["w5"]), _resident_spec(fp["t5"]),
            _resident_spec(fp["w6"]), _resident_spec(fp["t6"]),
        ],
        out_specs=pl.BlockSpec((1, Bb, OUT_PAD), lambda b, n: (b, 0, 0)),
        scratch_shapes=[pltpu.VMEM((Bb, 1024), jnp.float32)],
        compiler_params=pltpu.CompilerParams(
            dimension_semantics=("parallel", "arbitrary"),
            vmem_limit_bytes=vmem_limit_bytes),
    )(x,
      fp["w1"], fp["t1"], fp["w2"], fp["t2"], fp["w3"], fp["t3"],
      fp["w4"], fp["t4"], fp["w5"], fp["t5"], fp["w6"], fp["t6"])

    return out.reshape(B_pad, OUT_PAD)[:B, :9].reshape(B, 3, 3)


# ---------------------------------------------------------------------------
# Pure-JAX f32 reference (faithful to the PyTorch module, un-folded params)
# ---------------------------------------------------------------------------
def stn3d_reference(x_ncw, p):
    B = x_ncw.shape[0]

    def bn(v, i):
        scale = p[f"gamma{i}"] / jnp.sqrt(p[f"var{i}"] + BN_EPS)
        shift = p[f"beta{i}"] - p[f"mean{i}"] * scale
        return v * scale + shift

    h = jnp.transpose(x_ncw, (0, 2, 1))                       # (B, N, 3)
    h = jnp.maximum(bn(h @ p["w1"] + p["b1"], 1), 0.0)
    h = jnp.maximum(bn(h @ p["w2"] + p["b2"], 2), 0.0)
    h = jnp.maximum(bn(h @ p["w3"] + p["b3"], 3), 0.0)
    g = jnp.max(h, axis=1)                                    # (B, 1024)
    g = jnp.maximum(bn(g @ p["w4"] + p["b4"], 4), 0.0)
    g = jnp.maximum(bn(g @ p["w5"] + p["b5"], 5), 0.0)
    out = g @ p["w6"] + p["b6"]
    iden = jnp.array([1, 0, 0, 0, 1, 0, 0, 0, 1], jnp.float32)[None, :]
    return (out + iden).reshape(B, 3, 3)


if __name__ == "__main__":
    key = jax.random.PRNGKey(0)
    key, kx, kp = jax.random.split(key, 3)

    B, C_in, N = 2, 3, 16            # small synthetic shapes (num_points=16)
    x = jax.random.normal(kx, (B, C_in, N), jnp.float32)
    params = make_params(kp, input_chann=C_in)

    out = jax.block_until_ready(stn3d_forward(x, params))
    ref = jax.block_until_ready(stn3d_reference(x, params))

    assert out.shape == (B, 3, 3), out.shape
    # bf16 matmul inputs vs. pure-f32 reference -> slightly relaxed tolerance.
    np.testing.assert_allclose(np.asarray(out), np.asarray(ref), rtol=3e-2, atol=3e-2)
    print("KERNEL_OK")
</pallas_src>

<mosaic_0001>
module attributes {stable_mosaic.version = 11 : i64} {
  func.func @stn3d_kernel(%arg0: i32, %arg1: i32, %arg2: memref<1x16x8xbf16, #tpu.memory_space<vmem>>, %arg3: memref<8x128xbf16, #tpu.memory_space<vmem>>, %arg4: memref<1x128xf32, #tpu.memory_space<vmem>>, %arg5: memref<128x128xbf16, #tpu.memory_space<vmem>>, %arg6: memref<1x128xf32, #tpu.memory_space<vmem>>, %arg7: memref<128x1024xbf16, #tpu.memory_space<vmem>>, %arg8: memref<1x1024xf32, #tpu.memory_space<vmem>>, %arg9: memref<1024x512xbf16, #tpu.memory_space<vmem>>, %arg10: memref<1x512xf32, #tpu.memory_space<vmem>>, %arg11: memref<512x256xbf16, #tpu.memory_space<vmem>>, %arg12: memref<1x256xf32, #tpu.memory_space<vmem>>, %arg13: memref<256x128xbf16, #tpu.memory_space<vmem>>, %arg14: memref<1x128xf32, #tpu.memory_space<vmem>>, %arg15: memref<1x1x128xf32, #tpu.memory_space<vmem>>, %arg16: memref<1x1024xf32, #tpu.memory_space<vmem>>) attributes {dimension_semantics = [#tpu.dimension_semantics<parallel>, #tpu.dimension_semantics<arbitrary>], iteration_bounds = array<i64: 2, 1>, scalar_prefetch = 0 : i64, scratch_operands = 1 : i64, tpu.core_type = #tpu.core_type<tc>, window_params = [{transform_indices = @transform_0, window_bounds = array<i64: 1, 16, 8>}, {pipeline_mode = #tpu.pipeline_mode<synchronous>, transform_indices = @transform_1, window_bounds = array<i64: 8, 128>}, {pipeline_mode = #tpu.pipeline_mode<synchronous>, transform_indices = @transform_2, window_bounds = array<i64: 1, 128>}, {pipeline_mode = #tpu.pipeline_mode<synchronous>, transform_indices = @transform_3, window_bounds = array<i64: 128, 128>}, {pipeline_mode = #tpu.pipeline_mode<synchronous>, transform_indices = @transform_4, window_bounds = array<i64: 1, 128>}, {pipeline_mode = #tpu.pipeline_mode<synchronous>, transform_indices = @transform_5, window_bounds = array<i64: 128, 1024>}, {pipeline_mode = #tpu.pipeline_mode<synchronous>, transform_indices = @transform_6, window_bounds = array<i64: 1, 1024>}, {pipeline_mode = #tpu.pipeline_mode<synchronous>, transform_indices = @transform_7, window_bounds = array<i64: 1024, 512>}, {pipeline_mode = #tpu.pipeline_mode<synchronous>, transform_indices = @transform_8, window_bounds = array<i64: 1, 512>}, {pipeline_mode = #tpu.pipeline_mode<synchronous>, transform_indices = @transform_9, window_bounds = array<i64: 512, 256>}, {pipeline_mode = #tpu.pipeline_mode<synchronous>, transform_indices = @transform_10, window_bounds = array<i64: 1, 256>}, {pipeline_mode = #tpu.pipeline_mode<synchronous>, transform_indices = @transform_11, window_bounds = array<i64: 256, 128>}, {pipeline_mode = #tpu.pipeline_mode<synchronous>, transform_indices = @transform_12, window_bounds = array<i64: 1, 128>}, {transform_indices = @transform_13, window_bounds = array<i64: 1, 1, 128>}]} {
    %c0_i32 = arith.constant 0 : i32
    %0 = arith.cmpi eq, %arg1, %c0_i32 : i32
    %1 = arith.extui %0 : i1 to i32
    %c0_i32_0 = arith.constant 0 : i32
    %2 = arith.cmpi ne, %1, %c0_i32_0 : i32
    scf.if %2 {
      %cst_24 = arith.constant 0xFF800000 : f32
      %31 = vector.broadcast %cst_24 : f32 to vector<1x1024xf32>
      %c0_25 = arith.constant 0 : index
      %c0_26 = arith.constant 0 : index
      %32 = vector.load %arg16[%c0_25, %c0_26] : memref<1x1024xf32, #tpu.memory_space<vmem>>, vector<1x1024xf32>
      tpu.vector_store %arg16[%c0_25, %c0_26], %31 {strides = array<i32>} : memref<1x1024xf32, #tpu.memory_space<vmem>>, vector<1x1024xf32>,
    } else {
    }
    %c0 = arith.constant 0 : index
    %c0_1 = arith.constant 0 : index
    %c0_2 = arith.constant 0 : index
    %3 = vector.load %arg2[%c0, %c0_1, %c0_2] : memref<1x16x8xbf16, #tpu.memory_space<vmem>>, vector<1x16x8xbf16>
    %4 = vector.shape_cast %3 : vector<1x16x8xbf16> to vector<16x8xbf16>
    %c0_3 = arith.constant 0 : index
    %c0_4 = arith.constant 0 : index
    %5 = vector.load %arg3[%c0_3, %c0_4] : memref<8x128xbf16, #tpu.memory_space<vmem>>, vector<8x128xbf16>
    %cst = arith.constant dense<0.000000e+00> : vector<16x128xf32>
    %6 = tpu.matmul %4, %5, %cst {dimension_numbers = #tpu.dot_dimension_numbers<[1], [0], [0], [1], [0, 0, 1, 1], [], []>} : vector<16x8xbf16>, vector<8x128xbf16>, vector<16x128xf32> -> vector<16x128xf32>
    %c0_5 = arith.constant 0 : index
    %c0_6 = arith.constant 0 : index
    %7 = vector.load %arg4[%c0_5, %c0_6] : memref<1x128xf32, #tpu.memory_space<vmem>>, vector<1x128xf32>
    %8 = vector.broadcast %7 : vector<1x128xf32> to vector<16x128xf32>
    %9 = arith.addf %6, %8 : vector<16x128xf32>
    %cst_7 = arith.constant 0.000000e+00 : f32
    %10 = vector.broadcast %cst_7 : f32 to vector<16x128xf32>
    %11 = arith.maximumf %9, %10 : vector<16x128xf32>
    %12 = arith.truncf %11 : vector<16x128xf32> to vector<16x128xbf16>
    %c0_8 = arith.constant 0 : index
    %c0_9 = arith.constant 0 : index
    %13 = vector.load %arg5[%c0_8, %c0_9] : memref<128x128xbf16, #tpu.memory_space<vmem>>, vector<128x128xbf16>
    %cst_10 = arith.constant dense<0.000000e+00> : vector<16x128xf32>
    %14 = tpu.matmul %12, %13, %cst_10 {dimension_numbers = #tpu.dot_dimension_numbers<[1], [0], [0], [1], [0, 0, 1, 1], [], []>} : vector<16x128xbf16>, vector<128x128xbf16>, vector<16x128xf32> -> vector<16x128xf32>
    %c0_11 = arith.constant 0 : index
    %c0_12 = arith.constant 0 : index
    %15 = vector.load %arg6[%c0_11, %c0_12] : memref<1x128xf32, #tpu.memory_space<vmem>>, vector<1x128xf32>
    %16 = vector.broadcast %15 : vector<1x128xf32> to vector<16x128xf32>
    %17 = arith.addf %14, %16 : vector<16x128xf32>
    %cst_13 = arith.constant 0.000000e+00 : f32
    %18 = vector.broadcast %cst_13 : f32 to vector<16x128xf32>
    %19 = arith.maximumf %17, %18 : vector<16x128xf32>
    %20 = arith.truncf %19 : vector<16x128xf32> to vector<16x128xbf16>
    %c0_14 = arith.constant 0 : index
    %c0_15 = arith.constant 0 : index
    %21 = vector.load %arg7[%c0_14, %c0_15] : memref<128x1024xbf16, #tpu.memory_space<vmem>>, vector<128x1024xbf16>
    %cst_16 = arith.constant dense<0.000000e+00> : vector<16x1024xf32>
    %22 = tpu.matmul %20, %21, %cst_16 {dimension_numbers = #tpu.dot_dimension_numbers<[1], [0], [0], [1], [0, 0, 1, 1], [], []>} : vector<16x128xbf16>, vector<128x1024xbf16>, vector<16x1024xf32> -> vector<16x1024xf32>
    %23 = vector.shape_cast %22 : vector<16x1024xf32> to vector<1x16x1024xf32>
    %cst_17 = arith.constant dense<0xFF800000> : vector<1x1024xf32>
    %24 = vector.multi_reduction <maximumf>, %23, %cst_17 [1] : vector<1x16x1024xf32> to vector<1x1024xf32>
    %c0_18 = arith.constant 0 : index
    %c0_19 = arith.constant 0 : index
    %25 = vector.load %arg16[%c0_18, %c0_19] : memref<1x1024xf32, #tpu.memory_space<vmem>>, vector<1x1024xf32>
    %26 = arith.maximumf %25, %24 : vector<1x1024xf32>
    %c0_20 = arith.constant 0 : index
    %c0_21 = arith.constant 0 : index
    %27 = vector.load %arg16[%c0_20, %c0_21] : memref<1x1024xf32, #tpu.memory_space<vmem>>, vector<1x1024xf32>
    tpu.vector_store %arg16[%c0_20, %c0_21], %26 {strides = array<i32>} : memref<1x1024xf32, #tpu.memory_space<vmem>>, vector<1x1024xf32>,
    %c0_i32_22 = arith.constant 0 : i32
    %28 = arith.cmpi eq, %arg1, %c0_i32_22 : i32
    %29 = arith.extui %28 : i1 to i32
    %c0_i32_23 = arith.constant 0 : i32
    %30 = arith.cmpi ne, %29, %c0_i32_23 : i32
    scf.if %30 {
      %c0_24 = arith.constant 0 : index
      %c0_25 = arith.constant 0 : index
      %31 = vector.load %arg16[%c0_24, %c0_25] : memref<1x1024xf32, #tpu.memory_space<vmem>>, vector<1x1024xf32>
      %c0_26 = arith.constant 0 : index
      %c0_27 = arith.constant 0 : index
      %32 = vector.load %arg8[%c0_26, %c0_27] : memref<1x1024xf32, #tpu.memory_space<vmem>>, vector<1x1024xf32>
      %33 = arith.addf %31, %32 : vector<1x1024xf32>
      %cst_28 = arith.constant 0.000000e+00 : f32
      %34 = vector.broadcast %cst_28 : f32 to vector<1x1024xf32>
      %35 = arith.maximumf %33, %34 : vector<1x1024xf32>
      %36 = arith.truncf %35 : vector<1x1024xf32> to vector<1x1024xbf16>
      %c0_29 = arith.constant 0 : index
      %c0_30 = arith.constant 0 : index
      %37 = vector.load %arg9[%c0_29, %c0_30] : memref<1024x512xbf16, #tpu.memory_space<vmem>>, vector<1024x512xbf16>
      %cst_31 = arith.constant dense<0.000000e+00> : vector<1x512xf32>
      %38 = tpu.matmul %36, %37, %cst_31 {dimension_numbers = #tpu.dot_dimension_numbers<[1], [0], [0], [1], [0, 0, 1, 1], [], []>} : vector<1x1024xbf16>, vector<1024x512xbf16>, vector<1x512xf32> -> vector<1x512xf32>
      %c0_32 = arith.constant 0 : index
      %c0_33 = arith.constant 0 : index
      %39 = vector.load %arg10[%c0_32, %c0_33] : memref<1x512xf32, #tpu.memory_space<vmem>>, vector<1x512xf32>
      %40 = arith.addf %38, %39 : vector<1x512xf32>
      %cst_34 = arith.constant 0.000000e+00 : f32
      %41 = vector.broadcast %cst_34 : f32 to vector<1x512xf32>
      %42 = arith.maximumf %40, %41 : vector<1x512xf32>
      %43 = arith.truncf %42 : vector<1x512xf32> to vector<1x512xbf16>
      %c0_35 = arith.constant 0 : index
      %c0_36 = arith.constant 0 : index
      %44 = vector.load %arg11[%c0_35, %c0_36] : memref<512x256xbf16, #tpu.memory_space<vmem>>, vector<512x256xbf16>
      %cst_37 = arith.constant dense<0.000000e+00> : vector<1x256xf32>
      %45 = tpu.matmul %43, %44, %cst_37 {dimension_numbers = #tpu.dot_dimension_numbers<[1], [0], [0], [1], [0, 0, 1, 1], [], []>} : vector<1x512xbf16>, vector<512x256xbf16>, vector<1x256xf32> -> vector<1x256xf32>
      %c0_38 = arith.constant 0 : index
      %c0_39 = arith.constant 0 : index
      %46 = vector.load %arg12[%c0_38, %c0_39] : memref<1x256xf32, #tpu.memory_space<vmem>>, vector<1x256xf32>
      %47 = arith.addf %45, %46 : vector<1x256xf32>
      %cst_40 = arith.constant 0.000000e+00 : f32
      %48 = vector.broadcast %cst_40 : f32 to vector<1x256xf32>
      %49 = arith.maximumf %47, %48 : vector<1x256xf32>
      %50 = arith.truncf %49 : vector<1x256xf32> to vector<1x256xbf16>
      %c0_41 = arith.constant 0 : index
      %c0_42 = arith.constant 0 : index
      %51 = vector.load %arg13[%c0_41, %c0_42] : memref<256x128xbf16, #tpu.memory_space<vmem>>, vector<256x128xbf16>
      %cst_43 = arith.constant dense<0.000000e+00> : vector<1x128xf32>
      %52 = tpu.matmul %50, %51, %cst_43 {dimension_numbers = #tpu.dot_dimension_numbers<[1], [0], [0], [1], [0, 0, 1, 1], [], []>} : vector<1x256xbf16>, vector<256x128xbf16>, vector<1x128xf32> -> vector<1x128xf32>
      %c0_44 = arith.constant 0 : index
      %c0_45 = arith.constant 0 : index
      %53 = vector.load %arg14[%c0_44, %c0_45] : memref<1x128xf32, #tpu.memory_space<vmem>>, vector<1x128xf32>
      %54 = arith.addf %52, %53 : vector<1x128xf32>
      %c0_46 = arith.constant 0 : index
      %c0_47 = arith.constant 0 : index
      %c0_48 = arith.constant 0 : index
      %55 = vector.load %arg15[%c0_46, %c0_47, %c0_48] : memref<1x1x128xf32, #tpu.memory_space<vmem>>, vector<1x1x128xf32>
      %56 = vector.shape_cast %55 : vector<1x1x128xf32> to vector<1x128xf32>
      %57 = vector.shape_cast %54 : vector<1x128xf32> to vector<1x1x128xf32>
      tpu.vector_store %arg15[%c0_46, %c0_47, %c0_48], %57 {strides = array<i32>} : memref<1x1x128xf32, #tpu.memory_space<vmem>>, vector<1x1x128xf32>,
    } else {
    }
    return
  }
  func.func @transform_0(%arg0: i32, %arg1: i32) -> (i32, i32, i32) {
    %c0_i32 = arith.constant 0 : i32
    %c0_i32_0 = arith.constant 0 : i32
    return %arg0, %arg1, %c0_i32 : i32, i32, i32
  }
  func.func @transform_1(%arg0: i32, %arg1: i32) -> (i32, i32) {
    %c0_i32 = arith.constant 0 : i32
    %c0_i32_0 = arith.constant 0 : i32
    %c0_i32_1 = arith.constant 0 : i32
    return %c0_i32, %c0_i32_0 : i32, i32
  }
  func.func @transform_2(%arg0: i32, %arg1: i32) -> (i32, i32) {
    %c0_i32 = arith.constant 0 : i32
    %c0_i32_0 = arith.constant 0 : i32
    %c0_i32_1 = arith.constant 0 : i32
    return %c0_i32, %c0_i32_0 : i32, i32
  }
  func.func @transform_3(%arg0: i32, %arg1: i32) -> (i32, i32) {
    %c0_i32 = arith.constant 0 : i32
    %c0_i32_0 = arith.constant 0 : i32
    %c0_i32_1 = arith.constant 0 : i32
    return %c0_i32, %c0_i32_0 : i32, i32
  }
  func.func @transform_4(%arg0: i32, %arg1: i32) -> (i32, i32) {
    %c0_i32 = arith.constant 0 : i32
    %c0_i32_0 = arith.constant 0 : i32
    %c0_i32_1 = arith.constant 0 : i32
    return %c0_i32, %c0_i32_0 : i32, i32
  }
  func.func @transform_5(%arg0: i32, %arg1: i32) -> (i32, i32) {
    %c0_i32 = arith.constant 0 : i32
    %c0_i32_0 = arith.constant 0 : i32
    %c0_i32_1 = arith.constant 0 : i32
    return %c0_i32, %c0_i32_0 : i32, i32
  }
  func.func @transform_6(%arg0: i32, %arg1: i32) -> (i32, i32) {
    %c0_i32 = arith.constant 0 : i32
    %c0_i32_0 = arith.constant 0 : i32
    %c0_i32_1 = arith.constant 0 : i32
    return %c0_i32, %c0_i32_0 : i32, i32
  }
  func.func @transform_7(%arg0: i32, %arg1: i32) -> (i32, i32) {
    %c0_i32 = arith.constant 0 : i32
    %c0_i32_0 = arith.constant 0 : i32
    %c0_i32_1 = arith.constant 0 : i32
    return %c0_i32, %c0_i32_0 : i32, i32
  }
  func.func @transform_8(%arg0: i32, %arg1: i32) -> (i32, i32) {
    %c0_i32 = arith.constant 0 : i32
    %c0_i32_0 = arith.constant 0 : i32
    %c0_i32_1 = arith.constant 0 : i32
    return %c0_i32, %c0_i32_0 : i32, i32
  }
  func.func @transform_9(%arg0: i32, %arg1: i32) -> (i32, i32) {
    %c0_i32 = arith.constant 0 : i32
    %c0_i32_0 = arith.constant 0 : i32
    %c0_i32_1 = arith.constant 0 : i32
    return %c0_i32, %c0_i32_0 : i32, i32
  }
  func.func @transform_10(%arg0: i32, %arg1: i32) -> (i32, i32) {
    %c0_i32 = arith.constant 0 : i32
    %c0_i32_0 = arith.constant 0 : i32
    %c0_i32_1 = arith.constant 0 : i32
    return %c0_i32, %c0_i32_0 : i32, i32
  }
  func.func @transform_11(%arg0: i32, %arg1: i32) -> (i32, i32) {
    %c0_i32 = arith.constant 0 : i32
    %c0_i32_0 = arith.constant 0 : i32
    %c0_i32_1 = arith.constant 0 : i32
    return %c0_i32, %c0_i32_0 : i32, i32
  }
  func.func @transform_12(%arg0: i32, %arg1: i32) -> (i32, i32) {
    %c0_i32 = arith.constant 0 : i32
    %c0_i32_0 = arith.constant 0 : i32
    %c0_i32_1 = arith.constant 0 : i32
    return %c0_i32, %c0_i32_0 : i32, i32
  }
  func.func @transform_13(%arg0: i32, %arg1: i32) -> (i32, i32, i32) {
    %c0_i32 = arith.constant 0 : i32
    %c0_i32_0 = arith.constant 0 : i32
    %c0_i32_1 = arith.constant 0 : i32
    return %arg0, %c0_i32, %c0_i32_0 : i32, i32, i32
  }
}

</mosaic_0001>

<llo_original>
// kernel: tpu_custom_call.1
$region0: #{tpu_custom_call.1}
  #allocation0 [shape = 'u32[]', space=smem, size = 0x4, offset = 0x4, fixed_abs, tag = 'smem constant byte address 0x4 - core index']
  #allocation1 [shape = 'u32[72,128]{1,0:T(1,128)}', space=vmem, size = 0x9000, scoped, tag = 'internal scratch']
  #allocation2 [shape = 'f32[1,1024]{1,0:T(1,128)}', space=vmem, size = 0x1000, scoped, tag = 'scratch operand']
  %s0 = inlined_call_operand.vmem [shape: bf16[2,16,8], index: 0, kind: input, shape index: {}]
  %s1 = inlined_call_operand.vmem [shape: bf16[8,128], index: 1, kind: input, shape index: {}]
  %s2 = inlined_call_operand.vmem [shape: f32[1,128], index: 2, kind: input, shape index: {}]
  %s3 = inlined_call_operand.hbm [shape: bf16[128,128], index: 3, kind: input, shape index: {}]
  %s4 = inlined_call_operand.vmem [shape: f32[1,128], index: 4, kind: input, shape index: {}]
  %s5 = inlined_call_operand.hbm [shape: bf16[128,1024], index: 5, kind: input, shape index: {}]
  %s6 = inlined_call_operand.vmem [shape: f32[1,1024], index: 6, kind: input, shape index: {}]
  %s7 = inlined_call_operand.hbm [shape: bf16[1024,512], index: 7, kind: input, shape index: {}]
  %s8 = inlined_call_operand.vmem [shape: f32[1,512], index: 8, kind: input, shape index: {}]
  %s9 = inlined_call_operand.hbm [shape: bf16[512,256], index: 9, kind: input, shape index: {}]
  %s10 = inlined_call_operand.vmem [shape: f32[1,256], index: 10, kind: input, shape index: {}]
  %s11 = inlined_call_operand.hbm [shape: bf16[256,128], index: 11, kind: input, shape index: {}]
  %s12 = inlined_call_operand.vmem [shape: f32[1,128], index: 12, kind: input, shape index: {}]
  %s13 = inlined_call_operand.hbm [shape: f32[2,1,128], index: 13, kind: output, shape index: {}]
  %s14 = sld [smem:[#allocation0]]
  $region113: #{tpu_custom_call.1} parent=0
    _
  %s16 = ssub.s32 1, %s14
  %s17 = scalar_select 0, %s16, %s14
  $region1: #{tpu_custom_call.1} parent=0
    #allocation3 [shape = 'u8[32768]{0}', space=vmem, size = 0x8000, scoped, tag = 'input window, operand 3, single buffered']
    #allocation4 [shape = 's32[2]{0}', space=sflag, size = 0x8, scoped, tag = 'scoped memory for tpu_custom_call.1']
    #allocation5 [shape = 's32[2]{0}', space=sflag, size = 0x8, scoped, tag = 'scoped memory for tpu_custom_call.1']
    #allocation6 [shape = 'u8[262144]{0}', space=vmem, size = 0x40000, scoped, tag = 'input window, operand 5, single buffered']
    #allocation7 [shape = 's32[1]{0}', space=sflag, size = 0x4, scoped, tag = 'scoped memory for tpu_custom_call.1']
    #allocation8 [shape = 'u8[1048576]{0}', space=vmem, size = 0x100000, scoped, tag = 'input window, operand 7, single buffered']
    #allocation9 [shape = 'u8[262144]{0}', space=vmem, size = 0x40000, scoped, tag = 'input window, operand 9, single buffered']
    #allocation10 [shape = 's32[1]{0}', space=sflag, size = 0x4, scoped, tag = 'scoped memory for tpu_custom_call.1']
    #allocation11 [shape = 'u8[65536]{0}', space=vmem, size = 0x10000, scoped, tag = 'input window, operand 11, single buffered']
    #allocation12 [shape = 'u8[1024]{0}', space=vmem, size = 0x400, scoped, tag = 'output window, operand 0']
    %18 = vsyncpa [#allocation4], 0
    %19 = vsyncpa [#allocation7], 0
    %20 = vsyncpa [#allocation10], 0
    %21 = vsyncpa [#allocation5], 0
    %s22 = scalar_lea.sflag [#allocation5], 1
    %23 = vsyncpa %s22, 0
    loop: start=0, step=1, limit=4
    $region2: #{tpu_custom_call.1} parent=1 // loop_pre_header
      _
    $region3: #{tpu_custom_call.1} parent=1 // loop_header
      %s25 = sphi 0, %s29
      %p26 = scmp.ge.s32.totalorder %s25, 4
      %s32 = sphi 0, %s44
      %s33 = sphi 0, %s40
      %s34 = sphi 0, %s32
      %s35 = sphi 0, %s33
      %s36 = sphi 0, %s34
      %s37 = sphi 0, %s35
      %s49 = sphi 0, %s51
      %s52 = sphi 0, %s49
      %s53 = sphi 0, %s52
      %s69 = sphi 0, %s53
      %s73 = sphi 0, %s73
      %s75 = sphi 0, %s73
      %s76 = sphi 0, %s75
      %s90 = sphi 0, %s76
      %s94 = sphi 0, %s94
      %s96 = sphi 0, %s94
      %s97 = sphi 0, %s96
      %s111 = sphi 0, %s97
      %s115 = sphi 0, %s115
      %s117 = sphi 0, %s115
      %s118 = sphi 0, %s117
      %s132 = sphi 0, %s118
      %s136 = sphi 0, %s136
      %s138 = sphi 0, %s136
      %s139 = sphi 0, %s138
      %s153 = sphi 0, %s139
      %s157 = sphi 0, %s157
      %s159 = sphi 0, %s157
      %s160 = sphi 0, %s159
      %s174 = sphi 0, %s160
      %s178 = sphi 0, %s178
      %s180 = sphi 0, %s178
      %s181 = sphi 0, %s180
      %s195 = sphi 0, %s181
      %s199 = sphi 0, %s199
      %s201 = sphi 0, %s199
      %s202 = sphi 0, %s201
      %s216 = sphi 0, %s202
      %s220 = sphi 0, %s220
      %s222 = sphi 0, %s220
      %s223 = sphi 0, %s222
      %s237 = sphi 0, %s223
      %s241 = sphi 0, %s241
      %s243 = sphi 0, %s241
      %s244 = sphi 0, %s243
      %s258 = sphi 0, %s244
      %s262 = sphi 0, %s262
      %s264 = sphi 0, %s262
      %s265 = sphi 0, %s264
      %s279 = sphi 0, %s265
      %s283 = sphi 0, %s283
      %s285 = sphi 0, %s283
      %s286 = sphi 0, %s285
      %s300 = sphi 0, %s286
      %s304 = sphi 0, %s304
      %s306 = sphi 0, %s304
      %s307 = sphi 0, %s306
      %s321 = sphi 0, %s307
      %s327 = sphi 0, %s329
      %s330 = sphi 0, %s327
      %s331 = sphi 0, %s330
      %s347 = sphi 0, %s331
    $region4: #{tpu_custom_call.1} parent=1 // loop_header_branch
      %28 = sbr.rel (%p26) target = $region8
    $region5: #{tpu_custom_call.1} parent=1 // loop_body
      %s30 = ssub.s32 %s25, 1
      %s31 = ssub.s32 %s25, 2
      %s38 = sadd.s32 1, %s33
      %p39 = scmp.ge.s32.totalorder %s38, 1
      %s40 = scalar_select %p39, 0, %s38
      %s41 = sadd.s32 1, %s32
      %s42 = scalar_select %p39, %s41, %s32
      %p43 = scmp.ge.s32.totalorder %s42, 2
      %s44 = scalar_select %p43, 0, %s42
      %s45 = ssub.s32 %s32, %s44
      %s46 = ssub.s32 %s33, %s40
      %s47 = sor.u32 %s45, %s46
      %p48 = scmp.eq.s32.totalorder %s47, 0
      %s50 = sadd.s32 %s49, 1
      %s51 = scalar_select %p48, %s49, %s50
      %p54 = pneg %p48
      %p55 = scmp.eq.s32.totalorder %s25, 1
      %p56 = por %p54, %p55
      %p57 = scmp.ne.s32.totalorder %s49, %s52
      %p58 = scmp.eq.s32.totalorder %s25, 0
      %p59 = por %p57, %p58
      %p60 = scmp.ne.s32.totalorder %s49, %s52
      %p61 = scmp.eq.s32.totalorder %s30, 1
      %p62 = por %p60, %p61
      %p63 = scmp.ne.s32.totalorder %s52, %s53
      %p64 = scmp.eq.s32.totalorder %s30, 0
      %p65 = por %p63, %p64
      %p66 = scmp.ne.s32.totalorder %s52, %s53
      %p67 = scmp.eq.s32.totalorder %s31, 1
      %p68 = por %p66, %p67
      %p70 = scmp.ne.s32.totalorder %s53, %s69
      %p71 = scmp.eq.s32.totalorder %s31, 0
      %p72 = por %p70, %p71
      %s74 = sadd.s32 %s73, 1
      %p77 = scmp.eq.s32.totalorder %s25, 1
      %p78 = scmp.ne.s32.totalorder %s73, %s75
      %p79 = scmp.eq.s32.totalorder %s25, 0
      %p80 = por %p78, %p79
      %p81 = scmp.ne.s32.totalorder %s73, %s75
      %p82 = scmp.eq.s32.totalorder %s30, 1
      %p83 = por %p81, %p82
      %p84 = scmp.ne.s32.totalorder %s75, %s76
      %p85 = scmp.eq.s32.totalorder %s30, 0
      %p86 = por %p84, %p85
      %p87 = scmp.ne.s32.totalorder %s75, %s76
      %p88 = scmp.eq.s32.totalorder %s31, 1
      %p89 = por %p87, %p88
      %p91 = scmp.ne.s32.totalorder %s76, %s90
      %p92 = scmp.eq.s32.totalorder %s31, 0
      %p93 = por %p91, %p92
      %s95 = sadd.s32 %s94, 1
      %p98 = scmp.eq.s32.totalorder %s25, 1
      %p99 = scmp.ne.s32.totalorder %s94, %s96
      %p100 = scmp.eq.s32.totalorder %s25, 0
      %p101 = por %p99, %p100
      %p102 = scmp.ne.s32.totalorder %s94, %s96
      %p103 = scmp.eq.s32.totalorder %s30, 1
      %p104 = por %p102, %p103
      %p105 = scmp.ne.s32.totalorder %s96, %s97
      %p106 = scmp.eq.s32.totalorder %s30, 0
      %p107 = por %p105, %p106
      %p108 = scmp.ne.s32.totalorder %s96, %s97
      %p109 = scmp.eq.s32.totalorder %s31, 1
      %p110 = por %p108, %p109
      %p112 = scmp.ne.s32.totalorder %s97, %s111
      %p113 = scmp.eq.s32.totalorder %s31, 0
      %p114 = por %p112, %p113
      %s116 = sadd.s32 %s115, 1
      %p119 = scmp.eq.s32.totalorder %s25, 1
      %p120 = scmp.ne.s32.totalorder %s115, %s117
      %p121 = scmp.eq.s32.totalorder %s25, 0
      %p122 = por %p120, %p121
      %p123 = scmp.ne.s32.totalorder %s115, %s117
      %p124 = scmp.eq.s32.totalorder %s30, 1
      %p125 = por %p123, %p124
      %p126 = scmp.ne.s32.totalorder %s117, %s118
      %p127 = scmp.eq.s32.totalorder %s30, 0
      %p128 = por %p126, %p127
      %p129 = scmp.ne.s32.totalorder %s117, %s118
      %p130 = scmp.eq.s32.totalorder %s31, 1
      %p131 = por %p129, %p130
      %p133 = scmp.ne.s32.totalorder %s118, %s132
      %p134 = scmp.eq.s32.totalorder %s31, 0
      %p135 = por %p133, %p134
      %s137 = sadd.s32 %s136, 1
      %p140 = scmp.eq.s32.totalorder %s25, 1
      %p141 = scmp.ne.s32.totalorder %s136, %s138
      %p142 = scmp.eq.s32.totalorder %s25, 0
      %p143 = por %p141, %p142
      %p144 = scmp.ne.s32.totalorder %s136, %s138
      %p145 = scmp.eq.s32.totalorder %s30, 1
      %p146 = por %p144, %p145
      %p147 = scmp.ne.s32.totalorder %s138, %s139
      %p148 = scmp.eq.s32.totalorder %s30, 0
      %p149 = por %p147, %p148
      %p150 = scmp.ne.s32.totalorder %s138, %s139
      %p151 = scmp.eq.s32.totalorder %s31, 1
      %p152 = por %p150, %p151
      %p154 = scmp.ne.s32.totalorder %s139, %s153
      %p155 = scmp.eq.s32.totalorder %s31, 0
      %p156 = por %p154, %p155
      %s158 = sadd.s32 %s157, 1
      %p161 = scmp.eq.s32.totalorder %s25, 1
      %p162 = scmp.ne.s32.totalorder %s157, %s159
      %p163 = scmp.eq.s32.totalorder %s25, 0
      %p164 = por %p162, %p163
      %p165 = scmp.ne.s32.totalorder %s157, %s159
      %p166 = scmp.eq.s32.totalorder %s30, 1
      %p167 = por %p165, %p166
      %p168 = scmp.ne.s32.totalorder %s159, %s160
      %p169 = scmp.eq.s32.totalorder %s30, 0
      %p170 = por %p168, %p169
      %p171 = scmp.ne.s32.totalorder %s159, %s160
      %p172 = scmp.eq.s32.totalorder %s31, 1
      %p173 = por %p171, %p172
      %p175 = scmp.ne.s32.totalorder %s160, %s174
      %p176 = scmp.eq.s32.totalorder %s31, 0
      %p177 = por %p175, %p176
      %s179 = sadd.s32 %s178, 1
      %p182 = scmp.eq.s32.totalorder %s25, 1
      %p183 = scmp.ne.s32.totalorder %s178, %s180
      %p184 = scmp.eq.s32.totalorder %s25, 0
      %p185 = por %p183, %p184
      %p186 = scmp.ne.s32.totalorder %s178, %s180
      %p187 = scmp.eq.s32.totalorder %s30, 1
      %p188 = por %p186, %p187
      %p189 = scmp.ne.s32.totalorder %s180, %s181
      %p190 = scmp.eq.s32.totalorder %s30, 0
      %p191 = por %p189, %p190
      %p192 = scmp.ne.s32.totalorder %s180, %s181
      %p193 = scmp.eq.s32.totalorder %s31, 1
      %p194 = por %p192, %p193
      %p196 = scmp.ne.s32.totalorder %s181, %s195
      %p197 = scmp.eq.s32.totalorder %s31, 0
      %p198 = por %p196, %p197
      %s200 = sadd.s32 %s199, 1
      %p203 = scmp.eq.s32.totalorder %s25, 1
      %p204 = scmp.ne.s32.totalorder %s199, %s201
      %p205 = scmp.eq.s32.totalorder %s25, 0
      %p206 = por %p204, %p205
      %p207 = scmp.ne.s32.totalorder %s199, %s201
      %p208 = scmp.eq.s32.totalorder %s30, 1
      %p209 = por %p207, %p208
      %p210 = scmp.ne.s32.totalorder %s201, %s202
      %p211 = scmp.eq.s32.totalorder %s30, 0
      %p212 = por %p210, %p211
      %p213 = scmp.ne.s32.totalorder %s201, %s202
      %p214 = scmp.eq.s32.totalorder %s31, 1
      %p215 = por %p213, %p214
      %p217 = scmp.ne.s32.totalorder %s202, %s216
      %p218 = scmp.eq.s32.totalorder %s31, 0
      %p219 = por %p217, %p218
      %s221 = sadd.s32 %s220, 1
      %p224 = scmp.eq.s32.totalorder %s25, 1
      %p225 = scmp.ne.s32.totalorder %s220, %s222
      %p226 = scmp.eq.s32.totalorder %s25, 0
      %p227 = por %p225, %p226
      %p228 = scmp.ne.s32.totalorder %s220, %s222
      %p229 = scmp.eq.s32.totalorder %s30, 1
      %p230 = por %p228, %p229
      %p231 = scmp.ne.s32.totalorder %s222, %s223
      %p232 = scmp.eq.s32.totalorder %s30, 0
      %p233 = por %p231, %p232
      %p234 = scmp.ne.s32.totalorder %s222, %s223
      %p235 = scmp.eq.s32.totalorder %s31, 1
      %p236 = por %p234, %p235
      %p238 = scmp.ne.s32.totalorder %s223, %s237
      %p239 = scmp.eq.s32.totalorder %s31, 0
      %p240 = por %p238, %p239
      %s242 = sadd.s32 %s241, 1
      %p245 = scmp.eq.s32.totalorder %s25, 1
      %p246 = scmp.ne.s32.totalorder %s241, %s243
      %p247 = scmp.eq.s32.totalorder %s25, 0
      %p248 = por %p246, %p247
      %p249 = scmp.ne.s32.totalorder %s241, %s243
      %p250 = scmp.eq.s32.totalorder %s30, 1
      %p251 = por %p249, %p250
      %p252 = scmp.ne.s32.totalorder %s243, %s244
      %p253 = scmp.eq.s32.totalorder %s30, 0
      %p254 = por %p252, %p253
      %p255 = scmp.ne.s32.totalorder %s243, %s244
      %p256 = scmp.eq.s32.totalorder %s31, 1
      %p257 = por %p255, %p256
      %p259 = scmp.ne.s32.totalorder %s244, %s258
      %p260 = scmp.eq.s32.totalorder %s31, 0
      %p261 = por %p259, %p260
      %s263 = sadd.s32 %s262, 1
      %p266 = scmp.eq.s32.totalorder %s25, 1
      %p267 = scmp.ne.s32.totalorder %s262, %s264
      %p268 = scmp.eq.s32.totalorder %s25, 0
      %p269 = por %p267, %p268
      %p270 = scmp.ne.s32.totalorder %s262, %s264
      %p271 = scmp.eq.s32.totalorder %s30, 1
      %p272 = por %p270, %p271
      %p273 = scmp.ne.s32.totalorder %s264, %s265
      %p274 = scmp.eq.s32.totalorder %s30, 0
      %p275 = por %p273, %p274
      %p276 = scmp.ne.s32.totalorder %s264, %s265
      %p277 = scmp.eq.s32.totalorder %s31, 1
      %p278 = por %p276, %p277
      %p280 = scmp.ne.s32.totalorder %s265, %s279
      %p281 = scmp.eq.s32.totalorder %s31, 0
      %p282 = por %p280, %p281
      %s284 = sadd.s32 %s283, 1
      %p287 = scmp.eq.s32.totalorder %s25, 1
      %p288 = scmp.ne.s32.totalorder %s283, %s285
      %p289 = scmp.eq.s32.totalorder %s25, 0
      %p290 = por %p288, %p289
      %p291 = scmp.ne.s32.totalorder %s283, %s285
      %p292 = scmp.eq.s32.totalorder %s30, 1
      %p293 = por %p291, %p292
      %p294 = scmp.ne.s32.totalorder %s285, %s286
      %p295 = scmp.eq.s32.totalorder %s30, 0
      %p296 = por %p294, %p295
      %p297 = scmp.ne.s32.totalorder %s285, %s286
      %p298 = scmp.eq.s32.totalorder %s31, 1
      %p299 = por %p297, %p298
      %p301 = scmp.ne.s32.totalorder %s286, %s300
      %p302 = scmp.eq.s32.totalorder %s31, 0
      %p303 = por %p301, %p302
      %s305 = sadd.s32 %s304, 1
      %p308 = scmp.eq.s32.totalorder %s25, 1
      %p309 = scmp.ne.s32.totalorder %s304, %s306
      %p310 = scmp.eq.s32.totalorder %s25, 0
      %p311 = por %p309, %p310
      %p312 = scmp.ne.s32.totalorder %s304, %s306
      %p313 = scmp.eq.s32.totalorder %s30, 1
      %p314 = por %p312, %p313
      %p315 = scmp.ne.s32.totalorder %s306, %s307
      %p316 = scmp.eq.s32.totalorder %s30, 0
      %p317 = por %p315, %p316
      %p318 = scmp.ne.s32.totalorder %s306, %s307
      %p319 = scmp.eq.s32.totalorder %s31, 1
      %p320 = por %p318, %p319
      %p322 = scmp.ne.s32.totalorder %s307, %s321
      %p323 = scmp.eq.s32.totalorder %s31, 0
      %p324 = por %p322, %p323
      %s325 = ssub.s32 %s32, %s44
      %p326 = scmp.eq.s32.totalorder %s325, 0
      %s328 = sadd.s32 %s327, 1
      %s329 = scalar_select %p326, %s327, %s328
      %p332 = pneg %p326
      %p333 = scmp.eq.s32.totalorder %s25, 1
      %p334 = por %p332, %p333
      %p335 = scmp.ne.s32.totalorder %s327, %s330
      %p336 = scmp.eq.s32.totalorder %s25, 0
      %p337 = por %p335, %p336
      %p338 = scmp.ne.s32.totalorder %s327, %s330
      %p339 = scmp.eq.s32.totalorder %s30, 1
      %p340 = por %p338, %p339
      %p341 = scmp.ne.s32.totalorder %s330, %s331
      %p342 = scmp.eq.s32.totalorder %s30, 0
      %p343 = por %p341, %p342
      %p344 = scmp.ne.s32.totalorder %s330, %s331
      %p345 = scmp.eq.s32.totalorder %s31, 1
      %p346 = por %p344, %p345
      %p348 = scmp.ne.s32.totalorder %s331, %s347
      %p349 = scmp.eq.s32.totalorder %s31, 0
      %p350 = por %p348, %p349
      %p351 = scmp.le.s32.totalorder 1, %s25
      %p352 = scmp.lt.s32.totalorder %s25, 3
      %p353 = pnand %p351, %p352
      %p354 = pneg %p353
      // Predicated region
      $region9: #{tpu_custom_call.1} parent=5 // pred_check
        _
      $region10: #{tpu_custom_call.1} parent=5 // pred_check_branch
        %356 = sbr.rel (%p353) target = $region12
      $region11: #{tpu_custom_call.1} parent=5 // pred_region
        %s357 = ssub.s32 %s25, 1
        // Predicated region
        $region13: #{tpu_custom_call.1} parent=11 // pred_check
          %p358 = pneg %p86
        $region14: #{tpu_custom_call.1} parent=11 // pred_check_branch
          %360 = sbr.rel (%p358) target = $region16
        $region15: #{tpu_custom_call.1} parent=11 // pred_region
          _
        $region16: #{tpu_custom_call.1} parent=11 // pred_fallthru
          _
        // Predicated region
        $region17: #{tpu_custom_call.1} parent=11 // pred_check
          %p361 = pneg %p107
        $region18: #{tpu_custom_call.1} parent=11 // pred_check_branch
          %363 = sbr.rel (%p361) target = $region20
        $region19: #{tpu_custom_call.1} parent=11 // pred_region
          _
        $region20: #{tpu_custom_call.1} parent=11 // pred_fallthru
          _
        // Predicated region
        $region21: #{tpu_custom_call.1} parent=11 // pred_check
          %p364 = pneg %p128
        $region22: #{tpu_custom_call.1} parent=11 // pred_check_branch
          %366 = sbr.rel (%p364) target = $region24
        $region23: #{tpu_custom_call.1} parent=11 // pred_region
          %368 = vsyncadd [#allocation4], 0
          %s369 = sshll.u32 %s3, 4
          %s370 = int_to_ptr.hbm [resolvable:$true] %s369
          %s371 = sshll.u32 [#allocation3], 4
          %s372 = int_to_ptr.vmem [resolvable:$true] %s371
          %377 = dma.hbm_to_vmem [thread:$0]  %s370, 1024, %s372, [#allocation4], 64, 64, 4
        $region24: #{tpu_custom_call.1} parent=11 // pred_fallthru
          _
        // Predicated region
        $region25: #{tpu_custom_call.1} parent=11 // pred_check
          %p378 = pneg %p149
        $region26: #{tpu_custom_call.1} parent=11 // pred_check_branch
          %380 = sbr.rel (%p378) target = $region28
        $region27: #{tpu_custom_call.1} parent=11 // pred_region
          _
        $region28: #{tpu_custom_call.1} parent=11 // pred_fallthru
          _
        // Predicated region
        $region29: #{tpu_custom_call.1} parent=11 // pred_check
          %p381 = pneg %p170
        $region30: #{tpu_custom_call.1} parent=11 // pred_check_branch
          %383 = sbr.rel (%p381) target = $region32
        $region31: #{tpu_custom_call.1} parent=11 // pred_region
          %385 = vsyncadd [#allocation7], 0
          %s386 = sshll.u32 %s5, 4
          %s387 = int_to_ptr.hbm [resolvable:$true] %s386
          %s388 = sshll.u32 [#allocation6], 4
          %s389 = int_to_ptr.vmem [resolvable:$true] %s388
          %394 = dma.hbm_to_vmem [thread:$0]  %s387, 8192, %s389, [#allocation7], 512, 512, 32
        $region32: #{tpu_custom_call.1} parent=11 // pred_fallthru
          _
        // Predicated region
        $region33: #{tpu_custom_call.1} parent=11 // pred_check
          %p395 = pneg %p191
        $region34: #{tpu_custom_call.1} parent=11 // pred_check_branch
          %397 = sbr.rel (%p395) target = $region36
        $region35: #{tpu_custom_call.1} parent=11 // pred_region
          _
        $region36: #{tpu_custom_call.1} parent=11 // pred_fallthru
          _
        // Predicated region
        $region37: #{tpu_custom_call.1} parent=11 // pred_check
          %p398 = pneg %p212
        $region38: #{tpu_custom_call.1} parent=11 // pred_check_branch
          %400 = sbr.rel (%p398) target = $region40
        $region39: #{tpu_custom_call.1} parent=11 // pred_region
          %402 = vsyncadd [#allocation7], 0
          %s403 = sshll.u32 %s7, 4
          %s404 = int_to_ptr.hbm [resolvable:$true] %s403
          %s405 = sshll.u32 [#allocation8], 4
          %s406 = int_to_ptr.vmem [resolvable:$true] %s405
          %411 = dma.hbm_to_vmem [thread:$0]  %s404, 32768, %s406, [#allocation7], 256, 256, 16
        $region40: #{tpu_custom_call.1} parent=11 // pred_fallthru
          _
        // Predicated region
        $region41: #{tpu_custom_call.1} parent=11 // pred_check
          %p412 = pneg %p233
        $region42: #{tpu_custom_call.1} parent=11 // pred_check_branch
          %414 = sbr.rel (%p412) target = $region44
        $region43: #{tpu_custom_call.1} parent=11 // pred_region
          _
        $region44: #{tpu_custom_call.1} parent=11 // pred_fallthru
          _
        // Predicated region
        $region45: #{tpu_custom_call.1} parent=11 // pred_check
          %p415 = pneg %p254
        $region46: #{tpu_custom_call.1} parent=11 // pred_check_branch
          %417 = sbr.rel (%p415) target = $region48
        $region47: #{tpu_custom_call.1} parent=11 // pred_region
          %419 = vsyncadd [#allocation10], 0
          %s420 = sshll.u32 %s9, 4
          %s421 = int_to_ptr.hbm [resolvable:$true] %s420
          %s422 = sshll.u32 [#allocation9], 4
          %s423 = int_to_ptr.vmem [resolvable:$true] %s422
          %428 = dma.hbm_to_vmem [thread:$0]  %s421, 8192, %s423, [#allocation10], 128, 128, 8
        $region48: #{tpu_custom_call.1} parent=11 // pred_fallthru
          _
        // Predicated region
        $region49: #{tpu_custom_call.1} parent=11 // pred_check
          %p429 = pneg %p275
        $region50: #{tpu_custom_call.1} parent=11 // pred_check_branch
          %431 = sbr.rel (%p429) target = $region52
        $region51: #{tpu_custom_call.1} parent=11 // pred_region
          _
        $region52: #{tpu_custom_call.1} parent=11 // pred_fallthru
          _
        // Predicated region
        $region53: #{tpu_custom_call.1} parent=11 // pred_check
          %p432 = pneg %p296
        $region54: #{tpu_custom_call.1} parent=11 // pred_check_branch
          %434 = sbr.rel (%p432) target = $region56
        $region55: #{tpu_custom_call.1} parent=11 // pred_region
          %436 = vsyncadd [#allocation10], 0
          %s437 = sshll.u32 %s11, 4
          %s438 = int_to_ptr.hbm [resolvable:$true] %s437
          %s439 = sshll.u32 [#allocation11], 4
          %s440 = int_to_ptr.vmem [resolvable:$true] %s439
          %445 = dma.hbm_to_vmem [thread:$0]  %s438, 2048, %s440, [#allocation10], 64, 64, 4
        $region56: #{tpu_custom_call.1} parent=11 // pred_fallthru
          _
        // Predicated region
        $region57: #{tpu_custom_call.1} parent=11 // pred_check
          %p446 = pneg %p317
        $region58: #{tpu_custom_call.1} parent=11 // pred_check_branch
          %448 = sbr.rel (%p446) target = $region60
        $region59: #{tpu_custom_call.1} parent=11 // pred_region
          _
        $region60: #{tpu_custom_call.1} parent=11 // pred_fallthru
          _
      $region12: #{tpu_custom_call.1} parent=5 // pred_fallthru
        _
      %p449 = scmp.lt.s32.totalorder %s25, 2
      // Predicated region
      $region61: #{tpu_custom_call.1} parent=5 // pred_check
        %p450 = pneg %p449
      $region62: #{tpu_custom_call.1} parent=5 // pred_check_branch
        %452 = sbr.rel (%p450) target = $region64
      $region63: #{tpu_custom_call.1} parent=5 // pred_region
        // Predicated region
        $region65: #{tpu_custom_call.1} parent=63 // pred_check
          %p453 = pneg %p59
        $region66: #{tpu_custom_call.1} parent=63 // pred_check_branch
          %455 = sbr.rel (%p453) target = $region68
        $region67: #{tpu_custom_call.1} parent=63 // pred_region
          %s456 = smul.u32 2, %s33
          %p457 = scmp.lt.s32.totalorder %s32, 1
          %s458 = scalar_select %p457, %s32, 1
          %p459 = scmp.lt.s32.totalorder %s456, 1
          %s460 = scalar_select %p459, %s456, 1
          %s461 = smul.addr %s458, 2
          %s462 = sadd.s32 %s460, %s461
          %s463 = smul.addr %s462, 4
          %s464 = scalar_lea.vmem %s0, %s463
          %s465 = smul.u32 2, %s33
        $region68: #{tpu_custom_call.1} parent=63 // pred_fallthru
          _
      $region64: #{tpu_custom_call.1} parent=5 // pred_fallthru
        _
      %p466 = scmp.le.s32.totalorder 1, %s25
      %p467 = scmp.lt.s32.totalorder %s25, 3
      %p468 = pnand %p466, %p467
      %p469 = pneg %p468
      // Predicated region
      $region69: #{tpu_custom_call.1} parent=5 // pred_check
        _
      $region70: #{tpu_custom_call.1} parent=5 // pred_check_branch
        %471 = sbr.rel (%p468) target = $region72
      $region71: #{tpu_custom_call.1} parent=5 // pred_region
        %s472 = ssub.s32 %s25, 1
        // Predicated region
        $region73: #{tpu_custom_call.1} parent=71 // pred_check
          %p473 = pneg %p128
        $region74: #{tpu_custom_call.1} parent=71 // pred_check_branch
          %475 = sbr.rel (%p473) target = $region76
        $region75: #{tpu_custom_call.1} parent=71 // pred_region
          %477 = dma.done [#allocation4], 1024
        $region76: #{tpu_custom_call.1} parent=71 // pred_fallthru
          _
        // Predicated region
        $region77: #{tpu_custom_call.1} parent=71 // pred_check
          %p478 = pneg %p170
        $region78: #{tpu_custom_call.1} parent=71 // pred_check_branch
          %480 = sbr.rel (%p478) target = $region80
        $region79: #{tpu_custom_call.1} parent=71 // pred_region
          %482 = dma.done [#allocation7], 8192
        $region80: #{tpu_custom_call.1} parent=71 // pred_fallthru
          _
        // Predicated region
        $region81: #{tpu_custom_call.1} parent=71 // pred_check
          %p483 = pneg %p212
        $region82: #{tpu_custom_call.1} parent=71 // pred_check_branch
          %485 = sbr.rel (%p483) target = $region84
        $region83: #{tpu_custom_call.1} parent=71 // pred_region
          %487 = dma.done [#allocation7], 32768
        $region84: #{tpu_custom_call.1} parent=71 // pred_fallthru
          _
        // Predicated region
        $region85: #{tpu_custom_call.1} parent=71 // pred_check
          %p488 = pneg %p254
        $region86: #{tpu_custom_call.1} parent=71 // pred_check_branch
          %490 = sbr.rel (%p488) target = $region88
        $region87: #{tpu_custom_call.1} parent=71 // pred_region
          %492 = dma.done [#allocation10], 8192
        $region88: #{tpu_custom_call.1} parent=71 // pred_fallthru
          _
        // Predicated region
        $region89: #{tpu_custom_call.1} parent=71 // pred_check
          %p493 = pneg %p296
        $region90: #{tpu_custom_call.1} parent=71 // pred_check_branch
          %495 = sbr.rel (%p493) target = $region92
        $region91: #{tpu_custom_call.1} parent=71 // pred_region
          %497 = dma.done [#allocation10], 2048
        $region92: #{tpu_custom_call.1} parent=71 // pred_fallthru
          _
        %s498 = smul.u32 2, %s35
        %p499 = scmp.lt.s32.totalorder %s34, 1
        %s500 = scalar_select %p499, %s34, 1
        %p501 = scmp.lt.s32.totalorder %s498, 1
        %s502 = scalar_select %p501, %s498, 1
        %s503 = smul.addr %s500, 2
        %s504 = sadd.s32 %s502, %s503
        %s505 = smul.addr %s504, 4
        %s506 = scalar_lea.vmem %s0, %s505
        %p507 = pneg %p65
        %p508 = pneg %p62
        %p509 = pneg %p86
        %p510 = pneg %p83
        %p511 = pneg %p107
        %p512 = pneg %p104
        %p513 = pneg %p128
        %p514 = pneg %p125
        %p515 = pneg %p149
        %p516 = pneg %p146
        %p517 = pneg %p170
        %p518 = pneg %p167
        %p519 = pneg %p191
        %p520 = pneg %p188
        %p521 = pneg %p212
        %p522 = pneg %p209
        %p523 = pneg %p233
        %p524 = pneg %p230
        %p525 = pneg %p254
        %p526 = pneg %p251
        %p527 = pneg %p275
        %p528 = pneg %p272
        %p529 = pneg %p296
        %p530 = pneg %p293
        %p531 = pneg %p317
        %p532 = pneg %p314
        %p533 = pneg %p343
        %p534 = pneg %p340
        %s535 = sand.u32 %s330, 1
        %s536 = scalar_lea.sflag [#allocation5], %s535
        %s537 = sand.u32 %s330, 1
        %s538 = scalar_lea.vmem [#allocation12], %s537
        %s539 = smul.u32 2, %s35
        %p540 = scmp.lt.s32.totalorder %s34, 1
        %s541 = scalar_select %p540, %s34, 1
        %p542 = scmp.lt.s32.totalorder %s539, 1
        %s543 = scalar_select %p542, %s539, 1
        %s544 = smul.addr %s541, 2
        %s545 = sadd.s32 %s543, %s544
        %s546 = smul.addr %s545, 4
        %s547 = scalar_lea.vmem %s0, %s546
        %s548 = smul.u32 2, %s35
        %p550 = scmp.eq.s32.totalorder %s35, 0
        // Predicated region
        $region93: #{tpu_custom_call.1} parent=71 // pred_check
          %p551 = pneg %p550
        $region94: #{tpu_custom_call.1} parent=71 // pred_check_branch
          %553 = sbr.rel (%p551) target = $region96
        $region95: #{tpu_custom_call.1} parent=71 // pred_region
          %554 = vst [vmem:[#allocation2] sm:$0xff] -inf
        $region96: #{tpu_custom_call.1} parent=71 // pred_fallthru
          _
        %v555 = vld [vmem:[%s547] sm:$0xf]
        %v556 = vld [vmem:[%s547 + $0x4] sm:$0xf]
        %v557 = vld [vmem:[%s1] sm:$0xf]
        %v558 = vld [vmem:[%s2] sm:$0x1]
        %v560 = vperm.slane %v558, 0
        %v564 = vunpack.c.l.b16 %v555
        %v565 = vunpack.c.l.b16 %v556
        %v566 = vpack.c.b16 %v565, %v564
        %vm567 = vcmask 64512
        %v569 = vsel %vm567, %v566, 0
        %vm571 = vcmask 1043456
        %v573 = vsel %vm571, %v557, 0
        %575 = vmatpush.bf16.msra.mxu0 0
        %576 = vmatpush.bf16.msra.mxu0 0
        %577 = vmatpush.bf16.msra.mxu0 0
        %578 = vmatpush.bf16.msra.mxu0 0
        %579 = vmatpush.bf16.msra.mxu0 0
        %580 = vmatpush.bf16.msra.mxu0 0
        %581 = vmatpush.bf16.msra.mxu0 0
        %582 = vmatpush.bf16.msra.mxu0 %v573
        %583 = vmatmul.bf16.gmra.mxu0 %v569
        %v584 = vpop.f32.mrf.mxu0
        %v585 = vadd.f32 %v560, %v584
        %v586 = vpop.f32.mrf.mxu0
        %v587 = vadd.f32 %v560, %v586
        %588 = vdwg.mxu0
        %v589 = vmax.f32 %v585, 0.0
        %v590 = vmax.f32 %v587, 0.0
        %v591 = vpack.c.bf16 %v590, %v589
        %v592 = vld [vmem:[#allocation3] sm:$0xf]
        %v593 = vld [vmem:[#allocation3 + $0x4] sm:$0xf]
        %v594 = vld [vmem:[#allocation3 + $0x8] sm:$0xf]
        %v595 = vld [vmem:[#allocation3 + $0xc] sm:$0xf]
        %v596 = vld [vmem:[#allocation3 + $0x10] sm:$0xf]
        %v597 = vld [vmem:[#allocation3 + $0x14] sm:$0xf]
        %v598 = vld [vmem:[#allocation3 + $0x18] sm:$0xf]
        %v599 = vld [vmem:[#allocation3 + $0x1c] sm:$0xf]
        %v600 = vld [vmem:[#allocation3 + $0x20] sm:$0xf]
        %v601 = vld [vmem:[#allocation3 + $0x24] sm:$0xf]
        %v602 = vld [vmem:[#allocation3 + $0x28] sm:$0xf]
        %v603 = vld [vmem:[#allocation3 + $0x2c] sm:$0xf]
        %v604 = vld [vmem:[#allocation3 + $0x30] sm:$0xf]
        %v605 = vld [vmem:[#allocation3 + $0x34] sm:$0xf]
        %v606 = vld [vmem:[#allocation3 + $0x38] sm:$0xf]
        %v607 = vld [vmem:[#allocation3 + $0x3c] sm:$0xf]
        %v608 = vld [vmem:[%s4] sm:$0x1]
        %v610 = vperm.slane %v608, 0
        %v628 = vunpack.c.l.b16 %v592
        %v629 = vunpack.c.l.b16 %v593
        %v630 = vunpack.c.l.b16 %v594
        %v631 = vunpack.c.l.b16 %v595
        %v632 = vunpack.c.l.b16 %v596
        %v633 = vunpack.c.l.b16 %v597
        %v634 = vunpack.c.l.b16 %v598
        %v635 = vunpack.c.l.b16 %v599
        %v636 = vunpack.c.l.b16 %v600
        %v637 = vunpack.c.l.b16 %v601
        %v638 = vunpack.c.l.b16 %v602
        %v639 = vunpack.c.l.b16 %v603
        %v640 = vunpack.c.l.b16 %v604
        %v641 = vunpack.c.l.b16 %v605
        %v642 = vunpack.c.l.b16 %v606
        %v643 = vunpack.c.l.b16 %v607
        %v644 = vpack.c.b16 %v629, %v628
        %v645 = vpack.c.b16 %v631, %v630
        %v646 = vpack.c.b16 %v633, %v632
        %v647 = vpack.c.b16 %v635, %v634
        %v648 = vpack.c.b16 %v637, %v636
        %v649 = vpack.c.b16 %v639, %v638
        %v650 = vpack.c.b16 %v641, %v640
        %v651 = vpack.c.b16 %v643, %v642
        %660 = vmatpush.bf16.msra.mxu0 %v651
        %661 = vmatpush.bf16.msra.mxu0 %v650
        %662 = vmatpush.bf16.msra.mxu0 %v649
        %663 = vmatpush.bf16.msra.mxu0 %v648
        %664 = vmatpush.bf16.msra.mxu0 %v647
        %665 = vmatpush.bf16.msra.mxu0 %v646
        %666 = vmatpush.bf16.msra.mxu0 %v645
        %667 = vmatpush.bf16.msra.mxu0 %v644
        %668 = vmatmul.bf16.gmra.mxu0 %v591
        %v669 = vpop.f32.mrf.mxu0
        %v670 = vadd.f32 %v610, %v669
        %v671 = vpop.f32.mrf.mxu0
        %v672 = vadd.f32 %v610, %v671
        %673 = vdwg.mxu0
        %v674 = vmax.f32 %v670, 0.0
        %v675 = vmax.f32 %v672, 0.0
        %v676 = vpack.c.bf16 %v675, %v674
        %v677 = vld [vmem:[#allocation6] sm:$0xff]
        %v678 = vld [vmem:[#allocation6 + $0x8] sm:$0xff]
        %v679 = vld [vmem:[#allocation6 + $0x10] sm:$0xff]
        %v680 = vld [vmem:[#allocation6 + $0x18] sm:$0xff]
        %v681 = vld [vmem:[#allocation6 + $0x20] sm:$0xff]
        %v682 = vld [vmem:[#allocation6 + $0x28] sm:$0xff]
        %v683 = vld [vmem:[#allocation6 + $0x30] sm:$0xff]
        %v684 = vld [vmem:[#allocation6 + $0x38] sm:$0xff]
        %v685 = vld [vmem:[#allocation6 + $0x40] sm:$0xff]
        %v686 = vld [vmem:[#allocation6 + $0x48] sm:$0xff]
        %v687 = vld [vmem:[#allocation6 + $0x50] sm:$0xff]
        %v688 = vld [vmem:[#allocation6 + $0x58] sm:$0xff]
        %v689 = vld [vmem:[#allocation6 + $0x60] sm:$0xff]
        %v690 = vld [vmem:[#allocation6 + $0x68] sm:$0xff]
        %v691 = vld [vmem:[#allocation6 + $0x70] sm:$0xff]
        %v692 = vld [vmem:[#allocation6 + $0x78] sm:$0xff]
        %v693 = vld [vmem:[#allocation6 + $0x80] sm:$0xff]
        %v694 = vld [vmem:[#allocation6 + $0x88] sm:$0xff]
        %v695 = vld [vmem:[#allocation6 + $0x90] sm:$0xff]
        %v696 = vld [vmem:[#allocation6 + $0x98] sm:$0xff]
        %v697 = vld [vmem:[#allocation6 + $0xa0] sm:$0xff]
        %v698 = vld [vmem:[#allocation6 + $0xa8] sm:$0xff]
        %v699 = vld [vmem:[#allocation6 + $0xb0] sm:$0xff]
        %v700 = vld [vmem:[#allocation6 + $0xb8] sm:$0xff]
        %v701 = vld [vmem:[#allocation6 + $0xc0] sm:$0xff]
        %v702 = vld [vmem:[#allocation6 + $0xc8] sm:$0xff]
        %v703 = vld [vmem:[#allocation6 + $0xd0] sm:$0xff]
        %v704 = vld [vmem:[#allocation6 + $0xd8] sm:$0xff]
        %v705 = vld [vmem:[#allocation6 + $0xe0] sm:$0xff]
        %v706 = vld [vmem:[#allocation6 + $0xe8] sm:$0xff]
        %v707 = vld [vmem:[#allocation6 + $0xf0] sm:$0xff]
        %v708 = vld [vmem:[#allocation6 + $0xf8] sm:$0xff]
        %v709 = vld [vmem:[#allocation6 + $0x100] sm:$0xff]
        %v710 = vld [vmem:[#allocation6 + $0x108] sm:$0xff]
        %v711 = vld [vmem:[#allocation6 + $0x110] sm:$0xff]
        %v712 = vld [vmem:[#allocation6 + $0x118] sm:$0xff]
        %v713 = vld [vmem:[#allocation6 + $0x120] sm:$0xff]
        %v714 = vld [vmem:[#allocation6 + $0x128] sm:$0xff]
        %v715 = vld [vmem:[#allocation6 + $0x130] sm:$0xff]
        %v716 = vld [vmem:[#allocation6 + $0x138] sm:$0xff]
        %v717 = vld [vmem:[#allocation6 + $0x140] sm:$0xff]
        %v718 = vld [vmem:[#allocation6 + $0x148] sm:$0xff]
        %v719 = vld [vmem:[#allocation6 + $0x150] sm:$0xff]
        %v720 = vld [vmem:[#allocation6 + $0x158] sm:$0xff]
        %v721 = vld [vmem:[#allocation6 + $0x160] sm:$0xff]
        %v722 = vld [vmem:[#allocation6 + $0x168] sm:$0xff]
        %v723 = vld [vmem:[#allocation6 + $0x170] sm:$0xff]
        %v724 = vld [vmem:[#allocation6 + $0x178] sm:$0xff]
        %v725 = vld [vmem:[#allocation6 + $0x180] sm:$0xff]
        %v726 = vld [vmem:[#allocation6 + $0x188] sm:$0xff]
        %v727 = vld [vmem:[#allocation6 + $0x190] sm:$0xff]
        %v728 = vld [vmem:[#allocation6 + $0x198] sm:$0xff]
        %v729 = vld [vmem:[#allocation6 + $0x1a0] sm:$0xff]
        %v730 = vld [vmem:[#allocation6 + $0x1a8] sm:$0xff]
        %v731 = vld [vmem:[#allocation6 + $0x1b0] sm:$0xff]
        %v732 = vld [vmem:[#allocation6 + $0x1b8] sm:$0xff]
        %v733 = vld [vmem:[#allocation6 + $0x1c0] sm:$0xff]
        %v734 = vld [vmem:[#allocation6 + $0x1c8] sm:$0xff]
        %v735 = vld [vmem:[#allocation6 + $0x1d0] sm:$0xff]
        %v736 = vld [vmem:[#allocation6 + $0x1d8] sm:$0xff]
        %v737 = vld [vmem:[#allocation6 + $0x1e0] sm:$0xff]
        %v738 = vld [vmem:[#allocation6 + $0x1e8] sm:$0xff]
        %v739 = vld [vmem:[#allocation6 + $0x1f0] sm:$0xff]
        %v740 = vld [vmem:[#allocation6 + $0x1f8] sm:$0xff]
        %v805 = vunpack.c.l.b16 %v677
        %v806 = vunpack.c.h.b16 %v677
        %v807 = vunpack.c.l.b16 %v678
        %v808 = vunpack.c.h.b16 %v678
        %v809 = vunpack.c.l.b16 %v679
        %v810 = vunpack.c.h.b16 %v679
        %v811 = vunpack.c.l.b16 %v680
        %v812 = vunpack.c.h.b16 %v680
        %v813 = vunpack.c.l.b16 %v681
        %v814 = vunpack.c.h.b16 %v681
        %v815 = vunpack.c.l.b16 %v682
        %v816 = vunpack.c.h.b16 %v682
        %v817 = vunpack.c.l.b16 %v683
        %v818 = vunpack.c.h.b16 %v683
        %v819 = vunpack.c.l.b16 %v684
        %v820 = vunpack.c.h.b16 %v684
        %v821 = vunpack.c.l.b16 %v685
        %v822 = vunpack.c.h.b16 %v685
        %v823 = vunpack.c.l.b16 %v686
        %v824 = vunpack.c.h.b16 %v686
        %v825 = vunpack.c.l.b16 %v687
        %v826 = vunpack.c.h.b16 %v687
        %v827 = vunpack.c.l.b16 %v688
        %v828 = vunpack.c.h.b16 %v688
        %v829 = vunpack.c.l.b16 %v689
        %v830 = vunpack.c.h.b16 %v689
        %v831 = vunpack.c.l.b16 %v690
        %v832 = vunpack.c.h.b16 %v690
        %v833 = vunpack.c.l.b16 %v691
        %v834 = vunpack.c.h.b16 %v691
        %v835 = vunpack.c.l.b16 %v692
        %v836 = vunpack.c.h.b16 %v692
        %v837 = vunpack.c.l.b16 %v693
        %v838 = vunpack.c.h.b16 %v693
        %v839 = vunpack.c.l.b16 %v694
        %v840 = vunpack.c.h.b16 %v694
        %v841 = vunpack.c.l.b16 %v695
        %v842 = vunpack.c.h.b16 %v695
        %v843 = vunpack.c.l.b16 %v696
        %v844 = vunpack.c.h.b16 %v696
        %v845 = vunpack.c.l.b16 %v697
        %v846 = vunpack.c.h.b16 %v697
        %v847 = vunpack.c.l.b16 %v698
        %v848 = vunpack.c.h.b16 %v698
        %v849 = vunpack.c.l.b16 %v699
        %v850 = vunpack.c.h.b16 %v699
        %v851 = vunpack.c.l.b16 %v700
        %v852 = vunpack.c.h.b16 %v700
        %v853 = vunpack.c.l.b16 %v701
        %v854 = vunpack.c.h.b16 %v701
        %v855 = vunpack.c.l.b16 %v702
        %v856 = vunpack.c.h.b16 %v702
        %v857 = vunpack.c.l.b16 %v703
        %v858 = vunpack.c.h.b16 %v703
        %v859 = vunpack.c.l.b16 %v704
        %v860 = vunpack.c.h.b16 %v704
        %v861 = vunpack.c.l.b16 %v705
        %v862 = vunpack.c.h.b16 %v705
        %v863 = vunpack.c.l.b16 %v706
        %v864 = vunpack.c.h.b16 %v706
        %v865 = vunpack.c.l.b16 %v707
        %v866 = vunpack.c.h.b16 %v707
        %v867 = vunpack.c.l.b16 %v708
        %v868 = vunpack.c.h.b16 %v708
        %v869 = vunpack.c.l.b16 %v709
        %v870 = vunpack.c.h.b16 %v709
        %v871 = vunpack.c.l.b16 %v710
        %v872 = vunpack.c.h.b16 %v710
        %v873 = vunpack.c.l.b16 %v711
        %v874 = vunpack.c.h.b16 %v711
        %v875 = vunpack.c.l.b16 %v712
        %v876 = vunpack.c.h.b16 %v712
        %v877 = vunpack.c.l.b16 %v713
        %v878 = vunpack.c.h.b16 %v713
        %v879 = vunpack.c.l.b16 %v714
        %v880 = vunpack.c.h.b16 %v714
        %v881 = vunpack.c.l.b16 %v715
        %v882 = vunpack.c.h.b16 %v715
        %v883 = vunpack.c.l.b16 %v716
        %v884 = vunpack.c.h.b16 %v716
        %v885 = vunpack.c.l.b16 %v717
        %v886 = vunpack.c.h.b16 %v717
        %v887 = vunpack.c.l.b16 %v718
        %v888 = vunpack.c.h.b16 %v718
        %v889 = vunpack.c.l.b16 %v719
        %v890 = vunpack.c.h.b16 %v719
        %v891 = vunpack.c.l.b16 %v720
        %v892 = vunpack.c.h.b16 %v720
        %v893 = vunpack.c.l.b16 %v721
        %v894 = vunpack.c.h.b16 %v721
        %v895 = vunpack.c.l.b16 %v722
        %v896 = vunpack.c.h.b16 %v722
        %v897 = vunpack.c.l.b16 %v723
        %v898 = vunpack.c.h.b16 %v723
        %v899 = vunpack.c.l.b16 %v724
        %v900 = vunpack.c.h.b16 %v724
        %v901 = vunpack.c.l.b16 %v725
        %v902 = vunpack.c.h.b16 %v725
        %v903 = vunpack.c.l.b16 %v726
        %v904 = vunpack.c.h.b16 %v726
        %v905 = vunpack.c.l.b16 %v727
        %v906 = vunpack.c.h.b16 %v727
        %v907 = vunpack.c.l.b16 %v728
        %v908 = vunpack.c.h.b16 %v728
        %v909 = vunpack.c.l.b16 %v729
        %v910 = vunpack.c.h.b16 %v729
        %v911 = vunpack.c.l.b16 %v730
        %v912 = vunpack.c.h.b16 %v730
        %v913 = vunpack.c.l.b16 %v731
        %v914 = vunpack.c.h.b16 %v731
        %v915 = vunpack.c.l.b16 %v732
        %v916 = vunpack.c.h.b16 %v732
        %v917 = vunpack.c.l.b16 %v733
        %v918 = vunpack.c.h.b16 %v733
        %v919 = vunpack.c.l.b16 %v734
        %v920 = vunpack.c.h.b16 %v734
        %v921 = vunpack.c.l.b16 %v735
        %v922 = vunpack.c.h.b16 %v735
        %v923 = vunpack.c.l.b16 %v736
        %v924 = vunpack.c.h.b16 %v736
        %v925 = vunpack.c.l.b16 %v737
        %v926 = vunpack.c.h.b16 %v737
        %v927 = vunpack.c.l.b16 %v738
        %v928 = vunpack.c.h.b16 %v738
        %v929 = vunpack.c.l.b16 %v739
        %v930 = vunpack.c.h.b16 %v739
        %v931 = vunpack.c.l.b16 %v740
        %v932 = vunpack.c.h.b16 %v740
        %v933 = vpack.c.b16 %v813, %v805
        %v934 = vpack.c.b16 %v814, %v806
        %v935 = vpack.c.b16 %v815, %v807
        %v936 = vpack.c.b16 %v816, %v808
        %v937 = vpack.c.b16 %v817, %v809
        %v938 = vpack.c.b16 %v818, %v810
        %v939 = vpack.c.b16 %v819, %v811
        %v940 = vpack.c.b16 %v820, %v812
        %v941 = vpack.c.b16 %v829, %v821
        %v942 = vpack.c.b16 %v830, %v822
        %v943 = vpack.c.b16 %v831, %v823
        %v944 = vpack.c.b16 %v832, %v824
        %v945 = vpack.c.b16 %v833, %v825
        %v946 = vpack.c.b16 %v834, %v826
        %v947 = vpack.c.b16 %v835, %v827
        %v948 = vpack.c.b16 %v836, %v828
        %v949 = vpack.c.b16 %v845, %v837
        %v950 = vpack.c.b16 %v846, %v838
        %v951 = vpack.c.b16 %v847, %v839
        %v952 = vpack.c.b16 %v848, %v840
        %v953 = vpack.c.b16 %v849, %v841
        %v954 = vpack.c.b16 %v850, %v842
        %v955 = vpack.c.b16 %v851, %v843
        %v956 = vpack.c.b16 %v852, %v844
        %v957 = vpack.c.b16 %v861, %v853
        %v958 = vpack.c.b16 %v862, %v854
        %v959 = vpack.c.b16 %v863, %v855
        %v960 = vpack.c.b16 %v864, %v856
        %v961 = vpack.c.b16 %v865, %v857
        %v962 = vpack.c.b16 %v866, %v858
        %v963 = vpack.c.b16 %v867, %v859
        %v964 = vpack.c.b16 %v868, %v860
        %v965 = vpack.c.b16 %v877, %v869
        %v966 = vpack.c.b16 %v878, %v870
        %v967 = vpack.c.b16 %v879, %v871
        %v968 = vpack.c.b16 %v880, %v872
        %v969 = vpack.c.b16 %v881, %v873
        %v970 = vpack.c.b16 %v882, %v874
        %v971 = vpack.c.b16 %v883, %v875
        %v972 = vpack.c.b16 %v884, %v876
        %v973 = vpack.c.b16 %v893, %v885
        %v974 = vpack.c.b16 %v894, %v886
        %v975 = vpack.c.b16 %v895, %v887
        %v976 = vpack.c.b16 %v896, %v888
        %v977 = vpack.c.b16 %v897, %v889
        %v978 = vpack.c.b16 %v898, %v890
        %v979 = vpack.c.b16 %v899, %v891
        %v980 = vpack.c.b16 %v900, %v892
        %v981 = vpack.c.b16 %v909, %v901
        %v982 = vpack.c.b16 %v910, %v902
        %v983 = vpack.c.b16 %v911, %v903
        %v984 = vpack.c.b16 %v912, %v904
        %v985 = vpack.c.b16 %v913, %v905
        %v986 = vpack.c.b16 %v914, %v906
        %v987 = vpack.c.b16 %v915, %v907
        %v988 = vpack.c.b16 %v916, %v908
        %v989 = vpack.c.b16 %v925, %v917
        %v990 = vpack.c.b16 %v926, %v918
        %v991 = vpack.c.b16 %v927, %v919
        %v992 = vpack.c.b16 %v928, %v920
        %v993 = vpack.c.b16 %v929, %v921
        %v994 = vpack.c.b16 %v930, %v922
        %v995 = vpack.c.b16 %v931, %v923
        %v996 = vpack.c.b16 %v932, %v924
        %1061 = vmatpush.bf16.msra.mxu0 %v989
        %1062 = vmatpush.bf16.msra.mxu0 %v981
        %1063 = vmatpush.bf16.msra.mxu0 %v973
        %1064 = vmatpush.bf16.msra.mxu0 %v965
        %1065 = vmatpush.bf16.msra.mxu0 %v957
        %1066 = vmatpush.bf16.msra.mxu0 %v949
        %1067 = vmatpush.bf16.msra.mxu0 %v941
        %1068 = vmatpush.bf16.msra.mxu0 %v933
        %1069 = vmatmul.bf16.gmra.mxu0 %v676
        %v1070 = vpop.f32.mrf.mxu0
        %v1071 = vadd.f32 0.0, %v1070
        %v1072 = vpop.f32.mrf.mxu0
        %v1073 = vadd.f32 0.0, %v1072
        %1074 = vdwg.mxu0
        %1075 = vmatpush.bf16.msra.mxu0 %v990
        %1076 = vmatpush.bf16.msra.mxu0 %v982
        %1077 = vmatpush.bf16.msra.mxu0 %v974
        %1078 = vmatpush.bf16.msra.mxu0 %v966
        %1079 = vmatpush.bf16.msra.mxu0 %v958
        %1080 = vmatpush.bf16.msra.mxu0 %v950
        %1081 = vmatpush.bf16.msra.mxu0 %v942
        %1082 = vmatpush.bf16.msra.mxu0 %v934
        %1083 = vmatmul.bf16.gmra.mxu0 %v676
        %v1084 = vpop.f32.mrf.mxu0
        %v1085 = vadd.f32 0.0, %v1084
        %v1086 = vpop.f32.mrf.mxu0
        %v1087 = vadd.f32 0.0, %v1086
        %1088 = vdwg.mxu0
        %1089 = vmatpush.bf16.msra.mxu0 %v991
        %1090 = vmatpush.bf16.msra.mxu0 %v983
        %1091 = vmatpush.bf16.msra.mxu0 %v975
        %1092 = vmatpush.bf16.msra.mxu0 %v967
        %1093 = vmatpush.bf16.msra.mxu0 %v959
        %1094 = vmatpush.bf16.msra.mxu0 %v951
        %1095 = vmatpush.bf16.msra.mxu0 %v943
        %1096 = vmatpush.bf16.msra.mxu0 %v935
        %1097 = vmatmul.bf16.gmra.mxu0 %v676
        %v1098 = vpop.f32.mrf.mxu0
        %v1099 = vadd.f32 0.0, %v1098
        %v1100 = vpop.f32.mrf.mxu0
        %v1101 = vadd.f32 0.0, %v1100
        %1102 = vdwg.mxu0
        %1103 = vmatpush.bf16.msra.mxu0 %v992
        %1104 = vmatpush.bf16.msra.mxu0 %v984
        %1105 = vmatpush.bf16.msra.mxu0 %v976
        %1106 = vmatpush.bf16.msra.mxu0 %v968
        %1107 = vmatpush.bf16.msra.mxu0 %v960
        %1108 = vmatpush.bf16.msra.mxu0 %v952
        %1109 = vmatpush.bf16.msra.mxu0 %v944
        %1110 = vmatpush.bf16.msra.mxu0 %v936
        %1111 = vmatmul.bf16.gmra.mxu0 %v676
        %v1112 = vpop.f32.mrf.mxu0
        %v1113 = vadd.f32 0.0, %v1112
        %v1114 = vpop.f32.mrf.mxu0
        %v1115 = vadd.f32 0.0, %v1114
        %1116 = vdwg.mxu0
        %1117 = vmatpush.bf16.msra.mxu0 %v993
        %1118 = vmatpush.bf16.msra.mxu0 %v985
        %1119 = vmatpush.bf16.msra.mxu0 %v977
        %1120 = vmatpush.bf16.msra.mxu0 %v969
        %1121 = vmatpush.bf16.msra.mxu0 %v961
        %1122 = vmatpush.bf16.msra.mxu0 %v953
        %1123 = vmatpush.bf16.msra.mxu0 %v945
        %1124 = vmatpush.bf16.msra.mxu0 %v937
        %1125 = vmatmul.bf16.gmra.mxu0 %v676
        %v1126 = vpop.f32.mrf.mxu0
        %v1127 = vadd.f32 0.0, %v1126
        %v1128 = vpop.f32.mrf.mxu0
        %v1129 = vadd.f32 0.0, %v1128
        %1130 = vdwg.mxu0
        %1131 = vmatpush.bf16.msra.mxu0 %v994
        %1132 = vmatpush.bf16.msra.mxu0 %v986
        %1133 = vmatpush.bf16.msra.mxu0 %v978
        %1134 = vmatpush.bf16.msra.mxu0 %v970
        %1135 = vmatpush.bf16.msra.mxu0 %v962
        %1136 = vmatpush.bf16.msra.mxu0 %v954
        %1137 = vmatpush.bf16.msra.mxu0 %v946
        %1138 = vmatpush.bf16.msra.mxu0 %v938
        %1139 = vmatmul.bf16.gmra.mxu0 %v676
        %v1140 = vpop.f32.mrf.mxu0
        %v1141 = vadd.f32 0.0, %v1140
        %v1142 = vpop.f32.mrf.mxu0
        %v1143 = vadd.f32 0.0, %v1142
        %1144 = vdwg.mxu0
        %1145 = vmatpush.bf16.msra.mxu0 %v995
        %1146 = vmatpush.bf16.msra.mxu0 %v987
        %1147 = vmatpush.bf16.msra.mxu0 %v979
        %1148 = vmatpush.bf16.msra.mxu0 %v971
        %1149 = vmatpush.bf16.msra.mxu0 %v963
        %1150 = vmatpush.bf16.msra.mxu0 %v955
        %1151 = vmatpush.bf16.msra.mxu0 %v947
        %1152 = vmatpush.bf16.msra.mxu0 %v939
        %1153 = vmatmul.bf16.gmra.mxu0 %v676
        %v1154 = vpop.f32.mrf.mxu0
        %v1155 = vadd.f32 0.0, %v1154
        %v1156 = vpop.f32.mrf.mxu0
        %v1157 = vadd.f32 0.0, %v1156
        %1158 = vdwg.mxu0
        %1159 = vmatpush.bf16.msra.mxu0 %v996
        %1160 = vmatpush.bf16.msra.mxu0 %v988
        %1161 = vmatpush.bf16.msra.mxu0 %v980
        %1162 = vmatpush.bf16.msra.mxu0 %v972
        %1163 = vmatpush.bf16.msra.mxu0 %v964
        %1164 = vmatpush.bf16.msra.mxu0 %v956
        %1165 = vmatpush.bf16.msra.mxu0 %v948
        %1166 = vmatpush.bf16.msra.mxu0 %v940
        %1167 = vmatmul.bf16.gmra.mxu0 %v676
        %v1168 = vpop.f32.mrf.mxu0
        %v1169 = vadd.f32 0.0, %v1168
        %v1170 = vpop.f32.mrf.mxu0
        %v1171 = vadd.f32 0.0, %v1170
        %1172 = vdwg.mxu0
        %v1173 = vmax.f32 %v1071, %v1073
        %v1174 = vrot.slane %v1173, 4
        %v1175 = vmax.f32 %v1173, %v1174
        %v1176 = vrot.slane %v1175, 2
        %v1177 = vmax.f32 %v1175, %v1176
        %v1178 = vrot.slane %v1177, 1
        %v1179 = vmax.f32 %v1177, %v1178
        %v1180 = vmax.f32 %v1085, %v1087
        %v1181 = vrot.slane %v1180, 4
        %v1182 = vmax.f32 %v1180, %v1181
        %v1183 = vrot.slane %v1182, 2
        %v1184 = vmax.f32 %v1182, %v1183
        %v1185 = vrot.slane %v1184, 1
        %v1186 = vmax.f32 %v1184, %v1185
        %v1187 = vmax.f32 %v1099, %v1101
        %v1188 = vrot.slane %v1187, 4
        %v1189 = vmax.f32 %v1187, %v1188
        %v1190 = vrot.slane %v1189, 2
        %v1191 = vmax.f32 %v1189, %v1190
        %v1192 = vrot.slane %v1191, 1
        %v1193 = vmax.f32 %v1191, %v1192
        %v1194 = vmax.f32 %v1113, %v1115
        %v1195 = vrot.slane %v1194, 4
        %v1196 = vmax.f32 %v1194, %v1195
        %v1197 = vrot.slane %v1196, 2
        %v1198 = vmax.f32 %v1196, %v1197
        %v1199 = vrot.slane %v1198, 1
        %v1200 = vmax.f32 %v1198, %v1199
        %v1201 = vmax.f32 %v1127, %v1129
        %v1202 = vrot.slane %v1201, 4
        %v1203 = vmax.f32 %v1201, %v1202
        %v1204 = vrot.slane %v1203, 2
        %v1205 = vmax.f32 %v1203, %v1204
        %v1206 = vrot.slane %v1205, 1
        %v1207 = vmax.f32 %v1205, %v1206
        %v1208 = vmax.f32 %v1141, %v1143
        %v1209 = vrot.slane %v1208, 4
        %v1210 = vmax.f32 %v1208, %v1209
        %v1211 = vrot.slane %v1210, 2
        %v1212 = vmax.f32 %v1210, %v1211
        %v1213 = vrot.slane %v1212, 1
        %v1214 = vmax.f32 %v1212, %v1213
        %v1215 = vmax.f32 %v1155, %v1157
        %v1216 = vrot.slane %v1215, 4
        %v1217 = vmax.f32 %v1215, %v1216
        %v1218 = vrot.slane %v1217, 2
        %v1219 = vmax.f32 %v1217, %v1218
        %v1220 = vrot.slane %v1219, 1
        %v1221 = vmax.f32 %v1219, %v1220
        %v1222 = vmax.f32 %v1169, %v1171
        %v1223 = vrot.slane %v1222, 4
        %v1224 = vmax.f32 %v1222, %v1223
        %v1225 = vrot.slane %v1224, 2
        %v1226 = vmax.f32 %v1224, %v1225
        %v1227 = vrot.slane %v1226, 1
        %v1228 = vmax.f32 %v1226, %v1227
        %v1229 = vld [vmem:[#allocation2] sm:$0xff]
        %v1238 = vrot.slane %v1186, 7
        %v1239 = vrot.slane %v1193, 6
        %v1240 = vrot.slane %v1200, 5
        %v1241 = vrot.slane %v1207, 4
        %v1242 = vrot.slane %v1214, 3
        %v1243 = vrot.slane %v1221, 2
        %v1244 = vrot.slane %v1228, 1
        %vm1245 = vcmask 1040384
        %v1246 = vsel %vm1245, %v1179, %v1238
        %vm1247 = vcmask 1042434
        %v1248 = vsel %vm1247, %v1239, %v1240
        %vm1249 = vcmask 1041408
        %v1250 = vsel %vm1249, %v1246, %v1248
        %vm1251 = vcmask 1044484
        %v1252 = vsel %vm1251, %v1241, %v1242
        %vm1253 = vcmask 1046534
        %v1254 = vsel %vm1253, %v1243, %v1244
        %vm1255 = vcmask 1045508
        %v1256 = vsel %vm1255, %v1252, %v1254
        %v1257 = vsel %vm571, %v1250, %v1256
        %v1259 = vmax.f32 %v1229, %v1257
        %1260 = vst [vmem:[#allocation2] sm:$0xff] %v1259
        // Predicated region
        $region97: #{tpu_custom_call.1} parent=71 // pred_check
          %p1261 = pneg %p550
        $region98: #{tpu_custom_call.1} parent=71 // pred_check_branch
          %1263 = sbr.rel (%p1261) target = $region100
        $region99: #{tpu_custom_call.1} parent=71 // pred_region
          %v1264 = vld [vmem:[#allocation2] sm:$0xff]
          %v1265 = vld [vmem:[%s6] sm:$0xff]
          %v1266 = vadd.f32 %v1264, %v1265
          %v1267 = vmax.f32 %v1266, 0.0
          %v1269 = vperm.slane %v1267, 0
          %v1270 = vperm.slane %v1267, 1
          %v1271 = vperm.slane %v1267, 2
          %v1272 = vperm.slane %v1267, 3
          %v1273 = vperm.slane %v1267, 4
          %v1274 = vperm.slane %v1267, 5
          %v1275 = vperm.slane %v1267, 6
          %v1276 = vperm.slane %v1267, 7
          %v1285 = vpack.c.bf16 %v1269, %v1269
          %v1286 = vpack.c.bf16 %v1270, %v1270
          %v1287 = vpack.c.bf16 %v1271, %v1271
          %v1288 = vpack.c.bf16 %v1272, %v1272
          %v1289 = vpack.c.bf16 %v1273, %v1273
          %v1290 = vpack.c.bf16 %v1274, %v1274
          %v1291 = vpack.c.bf16 %v1275, %v1275
          %v1292 = vpack.c.bf16 %v1276, %v1276
          %v1293 = vld [vmem:[#allocation8] sm:$0xff]
          %v1294 = vld [vmem:[#allocation8 + $0x8] sm:$0xff]
          %v1295 = vld [vmem:[#allocation8 + $0x10] sm:$0xff]
          %v1296 = vld [vmem:[#allocation8 + $0x18] sm:$0xff]
          %v1297 = vld [vmem:[#allocation8 + $0x20] sm:$0xff]
          %v1298 = vld [vmem:[#allocation8 + $0x28] sm:$0xff]
          %v1299 = vld [vmem:[#allocation8 + $0x30] sm:$0xff]
          %v1300 = vld [vmem:[#allocation8 + $0x38] sm:$0xff]
          %v1301 = vld [vmem:[#allocation8 + $0x40] sm:$0xff]
          %v1302 = vld [vmem:[#allocation8 + $0x48] sm:$0xff]
          %v1303 = vld [vmem:[#allocation8 + $0x50] sm:$0xff]
          %v1304 = vld [vmem:[#allocation8 + $0x58] sm:$0xff]
          %v1305 = vld [vmem:[#allocation8 + $0x60] sm:$0xff]
          %v1306 = vld [vmem:[#allocation8 + $0x68] sm:$0xff]
          %v1307 = vld [vmem:[#allocation8 + $0x70] sm:$0xff]
          %v1308 = vld [vmem:[#allocation8 + $0x78] sm:$0xff]
          %v1309 = vld [vmem:[#allocation8 + $0x80] sm:$0xff]
          %v1310 = vld [vmem:[#allocation8 + $0x88] sm:$0xff]
          %v1311 = vld [vmem:[#allocation8 + $0x90] sm:$0xff]
          %v1312 = vld [vmem:[#allocation8 + $0x98] sm:$0xff]
          %v1313 = vld [vmem:[#allocation8 + $0xa0] sm:$0xff]
          %v1314 = vld [vmem:[#allocation8 + $0xa8] sm:$0xff]
          %v1315 = vld [vmem:[#allocation8 + $0xb0] sm:$0xff]
          %v1316 = vld [vmem:[#allocation8 + $0xb8] sm:$0xff]
          %v1317 = vld [vmem:[#allocation8 + $0xc0] sm:$0xff]
          %v1318 = vld [vmem:[#allocation8 + $0xc8] sm:$0xff]
          %v1319 = vld [vmem:[#allocation8 + $0xd0] sm:$0xff]
          %v1320 = vld [vmem:[#allocation8 + $0xd8] sm:$0xff]
          %v1321 = vld [vmem:[#allocation8 + $0xe0] sm:$0xff]
          %v1322 = vld [vmem:[#allocation8 + $0xe8] sm:$0xff]
          %v1323 = vld [vmem:[#allocation8 + $0xf0] sm:$0xff]
          %v1324 = vld [vmem:[#allocation8 + $0xf8] sm:$0xff]
          %v1325 = vld [vmem:[#allocation8 + $0x100] sm:$0xff]
          %v1326 = vld [vmem:[#allocation8 + $0x108] sm:$0xff]
          %v1327 = vld [vmem:[#allocation8 + $0x110] sm:$0xff]
          %v1328 = vld [vmem:[#allocation8 + $0x118] sm:$0xff]
          %v1329 = vld [vmem:[#allocation8 + $0x120] sm:$0xff]
          %v1330 = vld [vmem:[#allocation8 + $0x128] sm:$0xff]
          %v1331 = vld [vmem:[#allocation8 + $0x130] sm:$0xff]
          %v1332 = vld [vmem:[#allocation8 + $0x138] sm:$0xff]
          %v1333 = vld [vmem:[#allocation8 + $0x140] sm:$0xff]
          %v1334 = vld [vmem:[#allocation8 + $0x148] sm:$0xff]
          %v1335 = vld [vmem:[#allocation8 + $0x150] sm:$0xff]
          %v1336 = vld [vmem:[#allocation8 + $0x158] sm:$0xff]
          %v1337 = vld [vmem:[#allocation8 + $0x160] sm:$0xff]
          %v1338 = vld [vmem:[#allocation8 + $0x168] sm:$0xff]
          %v1339 = vld [vmem:[#allocation8 + $0x170] sm:$0xff]
          %v1340 = vld [vmem:[#allocation8 + $0x178] sm:$0xff]
          %v1341 = vld [vmem:[#allocation8 + $0x180] sm:$0xff]
          %v1342 = vld [vmem:[#allocation8 + $0x188] sm:$0xff]
          %v1343 = vld [vmem:[#allocation8 + $0x190] sm:$0xff]
          %v1344 = vld [vmem:[#allocation8 + $0x198] sm:$0xff]
          %v1345 = vld [vmem:[#allocation8 + $0x1a0] sm:$0xff]
          %v1346 = vld [vmem:[#allocation8 + $0x1a8] sm:$0xff]
          %v1347 = vld [vmem:[#allocation8 + $0x1b0] sm:$0xff]
          %v1348 = vld [vmem:[#allocation8 + $0x1b8] sm:$0xff]
          %v1349 = vld [vmem:[#allocation8 + $0x1c0] sm:$0xff]
          %v1350 = vld [vmem:[#allocation8 + $0x1c8] sm:$0xff]
          %v1351 = vld [vmem:[#allocation8 + $0x1d0] sm:$0xff]
          %v1352 = vld [vmem:[#allocation8 + $0x1d8] sm:$0xff]
          %v1353 = vld [vmem:[#allocation8 + $0x1e0] sm:$0xff]
          %v1354 = vld [vmem:[#allocation8 + $0x1e8] sm:$0xff]
          %v1355 = vld [vmem:[#allocation8 + $0x1f0] sm:$0xff]
          %v1356 = vld [vmem:[#allocation8 + $0x1f8] sm:$0xff]
          %v1357 = vld [vmem:[#allocation8 + $0x200] sm:$0xff]
          %v1358 = vld [vmem:[#allocation8 + $0x208] sm:$0xff]
          %v1359 = vld [vmem:[#allocation8 + $0x210] sm:$0xff]
          %v1360 = vld [vmem:[#allocation8 + $0x218] sm:$0xff]
          %v1361 = vld [vmem:[#allocation8 + $0x220] sm:$0xff]
          %v1362 = vld [vmem:[#allocation8 + $0x228] sm:$0xff]
          %v1363 = vld [vmem:[#allocation8 + $0x230] sm:$0xff]
          %v1364 = vld [vmem:[#allocation8 + $0x238] sm:$0xff]
          %v1365 = vld [vmem:[#allocation8 + $0x240] sm:$0xff]
          %v1366 = vld [vmem:[#allocation8 + $0x248] sm:$0xff]
          %v1367 = vld [vmem:[#allocation8 + $0x250] sm:$0xff]
          %v1368 = vld [vmem:[#allocation8 + $0x258] sm:$0xff]
          %v1369 = vld [vmem:[#allocation8 + $0x260] sm:$0xff]
          %v1370 = vld [vmem:[#allocation8 + $0x268] sm:$0xff]
          %v1371 = vld [vmem:[#allocation8 + $0x270] sm:$0xff]
          %v1372 = vld [vmem:[#allocation8 + $0x278] sm:$0xff]
          %v1373 = vld [vmem:[#allocation8 + $0x280] sm:$0xff]
          %v1374 = vld [vmem:[#allocation8 + $0x288] sm:$0xff]
          %v1375 = vld [vmem:[#allocation8 + $0x290] sm:$0xff]
          %v1376 = vld [vmem:[#allocation8 + $0x298] sm:$0xff]
          %v1377 = vld [vmem:[#allocation8 + $0x2a0] sm:$0xff]
          %v1378 = vld [vmem:[#allocation8 + $0x2a8] sm:$0xff]
          %v1379 = vld [vmem:[#allocation8 + $0x2b0] sm:$0xff]
          %v1380 = vld [vmem:[#allocation8 + $0x2b8] sm:$0xff]
          %v1381 = vld [vmem:[#allocation8 + $0x2c0] sm:$0xff]
          %v1382 = vld [vmem:[#allocation8 + $0x2c8] sm:$0xff]
          %v1383 = vld [vmem:[#allocation8 + $0x2d0] sm:$0xff]
          %v1384 = vld [vmem:[#allocation8 + $0x2d8] sm:$0xff]
          %v1385 = vld [vmem:[#allocation8 + $0x2e0] sm:$0xff]
          %v1386 = vld [vmem:[#allocation8 + $0x2e8] sm:$0xff]
          %v1387 = vld [vmem:[#allocation8 + $0x2f0] sm:$0xff]
          %v1388 = vld [vmem:[#allocation8 + $0x2f8] sm:$0xff]
          %v1389 = vld [vmem:[#allocation8 + $0x300] sm:$0xff]
          %v1390 = vld [vmem:[#allocation8 + $0x308] sm:$0xff]
          %v1391 = vld [vmem:[#allocation8 + $0x310] sm:$0xff]
          %v1392 = vld [vmem:[#allocation8 + $0x318] sm:$0xff]
          %v1393 = vld [vmem:[#allocation8 + $0x320] sm:$0xff]
          %v1394 = vld [vmem:[#allocation8 + $0x328] sm:$0xff]
          %v1395 = vld [vmem:[#allocation8 + $0x330] sm:$0xff]
          %v1396 = vld [vmem:[#allocation8 + $0x338] sm:$0xff]
          %v1397 = vld [vmem:[#allocation8 + $0x340] sm:$0xff]
          %v1398 = vld [vmem:[#allocation8 + $0x348] sm:$0xff]
          %v1399 = vld [vmem:[#allocation8 + $0x350] sm:$0xff]
          %v1400 = vld [vmem:[#allocation8 + $0x358] sm:$0xff]
          %v1401 = vld [vmem:[#allocation8 + $0x360] sm:$0xff]
          %v1402 = vld [vmem:[#allocation8 + $0x368] sm:$0xff]
          %v1403 = vld [vmem:[#allocation8 + $0x370] sm:$0xff]
          %v1404 = vld [vmem:[#allocation8 + $0x378] sm:$0xff]
          %v1405 = vld [vmem:[#allocation8 + $0x380] sm:$0xff]
          %v1406 = vld [vmem:[#allocation8 + $0x388] sm:$0xff]
          %v1407 = vld [vmem:[#allocation8 + $0x390] sm:$0xff]
          %v1408 = vld [vmem:[#allocation8 + $0x398] sm:$0xff]
          %v1409 = vld [vmem:[#allocation8 + $0x3a0] sm:$0xff]
          %v1410 = vld [vmem:[#allocation8 + $0x3a8] sm:$0xff]
          %v1411 = vld [vmem:[#allocation8 + $0x3b0] sm:$0xff]
          %v1412 = vld [vmem:[#allocation8 + $0x3b8] sm:$0xff]
          %v1413 = vld [vmem:[#allocation8 + $0x3c0] sm:$0xff]
          %v1414 = vld [vmem:[#allocation8 + $0x3c8] sm:$0xff]
          %v1415 = vld [vmem:[#allocation8 + $0x3d0] sm:$0xff]
          %v1416 = vld [vmem:[#allocation8 + $0x3d8] sm:$0xff]
          %v1417 = vld [vmem:[#allocation8 + $0x3e0] sm:$0xff]
          %v1418 = vld [vmem:[#allocation8 + $0x3e8] sm:$0xff]
          %v1419 = vld [vmem:[#allocation8 + $0x3f0] sm:$0xff]
          %v1420 = vld [vmem:[#allocation8 + $0x3f8] sm:$0xff]
          %v1421 = vld [vmem:[#allocation8 + $0x400] sm:$0xff]
          %v1422 = vld [vmem:[#allocation8 + $0x408] sm:$0xff]
          %v1423 = vld [vmem:[#allocation8 + $0x410] sm:$0xff]
          %v1424 = vld [vmem:[#allocation8 + $0x418] sm:$0xff]
          %v1425 = vld [vmem:[#allocation8 + $0x420] sm:$0xff]
          %v1426 = vld [vmem:[#allocation8 + $0x428] sm:$0xff]
          %v1427 = vld [vmem:[#allocation8 + $0x430] sm:$0xff]
          %v1428 = vld [vmem:[#allocation8 + $0x438] sm:$0xff]
          %v1429 = vld [vmem:[#allocation8 + $0x440] sm:$0xff]
          %v1430 = vld [vmem:[#allocation8 + $0x448] sm:$0xff]
          %v1431 = vld [vmem:[#allocation8 + $0x450] sm:$0xff]
          %v1432 = vld [vmem:[#allocation8 + $0x458] sm:$0xff]
          %v1433 = vld [vmem:[#allocation8 + $0x460] sm:$0xff]
          %v1434 = vld [vmem:[#allocation8 + $0x468] sm:$0xff]
          %v1435 = vld [vmem:[#allocation8 + $0x470] sm:$0xff]
          %v1436 = vld [vmem:[#allocation8 + $0x478] sm:$0xff]
          %v1437 = vld [vmem:[#allocation8 + $0x480] sm:$0xff]
          %v1438 = vld [vmem:[#allocation8 + $0x488] sm:$0xff]
          %v1439 = vld [vmem:[#allocation8 + $0x490] sm:$0xff]
          %v1440 = vld [vmem:[#allocation8 + $0x498] sm:$0xff]
          %v1441 = vld [vmem:[#allocation8 + $0x4a0] sm:$0xff]
          %v1442 = vld [vmem:[#allocation8 + $0x4a8] sm:$0xff]
          %v1443 = vld [vmem:[#allocation8 + $0x4b0] sm:$0xff]
          %v1444 = vld [vmem:[#allocation8 + $0x4b8] sm:$0xff]
          %v1445 = vld [vmem:[#allocation8 + $0x4c0] sm:$0xff]
          %v1446 = vld [vmem:[#allocation8 + $0x4c8] sm:$0xff]
          %v1447 = vld [vmem:[#allocation8 + $0x4d0] sm:$0xff]
          %v1448 = vld [vmem:[#allocation8 + $0x4d8] sm:$0xff]
          %v1449 = vld [vmem:[#allocation8 + $0x4e0] sm:$0xff]
          %v1450 = vld [vmem:[#allocation8 + $0x4e8] sm:$0xff]
          %v1451 = vld [vmem:[#allocation8 + $0x4f0] sm:$0xff]
          %v1452 = vld [vmem:[#allocation8 + $0x4f8] sm:$0xff]
          %v1453 = vld [vmem:[#allocation8 + $0x500] sm:$0xff]
          %v1454 = vld [vmem:[#allocation8 + $0x508] sm:$0xff]
          %v1455 = vld [vmem:[#allocation8 + $0x510] sm:$0xff]
          %v1456 = vld [vmem:[#allocation8 + $0x518] sm:$0xff]
          %v1457 = vld [vmem:[#allocation8 + $0x520] sm:$0xff]
          %v1458 = vld [vmem:[#allocation8 + $0x528] sm:$0xff]
          %v1459 = vld [vmem:[#allocation8 + $0x530] sm:$0xff]
          %v1460 = vld [vmem:[#allocation8 + $0x538] sm:$0xff]
          %v1461 = vld [vmem:[#allocation8 + $0x540] sm:$0xff]
          %v1462 = vld [vmem:[#allocation8 + $0x548] sm:$0xff]
          %v1463 = vld [vmem:[#allocation8 + $0x550] sm:$0xff]
          %v1464 = vld [vmem:[#allocation8 + $0x558] sm:$0xff]
          %v1465 = vld [vmem:[#allocation8 + $0x560] sm:$0xff]
          %v1466 = vld [vmem:[#allocation8 + $0x568] sm:$0xff]
          %v1467 = vld [vmem:[#allocation8 + $0x570] sm:$0xff]
          %v1468 = vld [vmem:[#allocation8 + $0x578] sm:$0xff]
          %v1469 = vld [vmem:[#allocation8 + $0x580] sm:$0xff]
          %v1470 = vld [vmem:[#allocation8 + $0x588] sm:$0xff]
          %v1471 = vld [vmem:[#allocation8 + $0x590] sm:$0xff]
          %v1472 = vld [vmem:[#allocation8 + $0x598] sm:$0xff]
          %v1473 = vld [vmem:[#allocation8 + $0x5a0] sm:$0xff]
          %v1474 = vld [vmem:[#allocation8 + $0x5a8] sm:$0xff]
          %v1475 = vld [vmem:[#allocation8 + $0x5b0] sm:$0xff]
          %v1476 = vld [vmem:[#allocation8 + $0x5b8] sm:$0xff]
          %v1477 = vld [vmem:[#allocation8 + $0x5c0] sm:$0xff]
          %v1478 = vld [vmem:[#allocation8 + $0x5c8] sm:$0xff]
          %v1479 = vld [vmem:[#allocation8 + $0x5d0] sm:$0xff]
          %v1480 = vld [vmem:[#allocation8 + $0x5d8] sm:$0xff]
          %v1481 = vld [vmem:[#allocation8 + $0x5e0] sm:$0xff]
          %v1482 = vld [vmem:[#allocation8 + $0x5e8] sm:$0xff]
          %v1483 = vld [vmem:[#allocation8 + $0x5f0] sm:$0xff]
          %v1484 = vld [vmem:[#allocation8 + $0x5f8] sm:$0xff]
          %v1485 = vld [vmem:[#allocation8 + $0x600] sm:$0xff]
          %v1486 = vld [vmem:[#allocation8 + $0x608] sm:$0xff]
          %v1487 = vld [vmem:[#allocation8 + $0x610] sm:$0xff]
          %v1488 = vld [vmem:[#allocation8 + $0x618] sm:$0xff]
          %v1489 = vld [vmem:[#allocation8 + $0x620] sm:$0xff]
          %v1490 = vld [vmem:[#allocation8 + $0x628] sm:$0xff]
          %v1491 = vld [vmem:[#allocation8 + $0x630] sm:$0xff]
          %v1492 = vld [vmem:[#allocation8 + $0x638] sm:$0xff]
          %v1493 = vld [vmem:[#allocation8 + $0x640] sm:$0xff]
          %v1494 = vld [vmem:[#allocation8 + $0x648] sm:$0xff]
          %v1495 = vld [vmem:[#allocation8 + $0x650] sm:$0xff]
          %v1496 = vld [vmem:[#allocation8 + $0x658] sm:$0xff]
          %v1497 = vld [vmem:[#allocation8 + $0x660] sm:$0xff]
          %v1498 = vld [vmem:[#allocation8 + $0x668] sm:$0xff]
          %v1499 = vld [vmem:[#allocation8 + $0x670] sm:$0xff]
          %v1500 = vld [vmem:[#allocation8 + $0x678] sm:$0xff]
          %v1501 = vld [vmem:[#allocation8 + $0x680] sm:$0xff]
          %v1502 = vld [vmem:[#allocation8 + $0x688] sm:$0xff]
          %v1503 = vld [vmem:[#allocation8 + $0x690] sm:$0xff]
          %v1504 = vld [vmem:[#allocation8 + $0x698] sm:$0xff]
          %v1505 = vld [vmem:[#allocation8 + $0x6a0] sm:$0xff]
          %v1506 = vld [vmem:[#allocation8 + $0x6a8] sm:$0xff]
          %v1507 = vld [vmem:[#allocation8 + $0x6b0] sm:$0xff]
          %v1508 = vld [vmem:[#allocation8 + $0x6b8] sm:$0xff]
          %v1509 = vld [vmem:[#allocation8 + $0x6c0] sm:$0xff]
          %v1510 = vld [vmem:[#allocation8 + $0x6c8] sm:$0xff]
          %v1511 = vld [vmem:[#allocation8 + $0x6d0] sm:$0xff]
          %v1512 = vld [vmem:[#allocation8 + $0x6d8] sm:$0xff]
          %v1513 = vld [vmem:[#allocation8 + $0x6e0] sm:$0xff]
          %v1514 = vld [vmem:[#allocation8 + $0x6e8] sm:$0xff]
          %v1515 = vld [vmem:[#allocation8 + $0x6f0] sm:$0xff]
          %v1516 = vld [vmem:[#allocation8 + $0x6f8] sm:$0xff]
          %v1517 = vld [vmem:[#allocation8 + $0x700] sm:$0xff]
          %v1518 = vld [vmem:[#allocation8 + $0x708] sm:$0xff]
          %v1519 = vld [vmem:[#allocation8 + $0x710] sm:$0xff]
          %v1520 = vld [vmem:[#allocation8 + $0x718] sm:$0xff]
          %v1521 = vld [vmem:[#allocation8 + $0x720] sm:$0xff]
          %v1522 = vld [vmem:[#allocation8 + $0x728] sm:$0xff]
          %v1523 = vld [vmem:[#allocation8 + $0x730] sm:$0xff]
          %v1524 = vld [vmem:[#allocation8 + $0x738] sm:$0xff]
          %v1525 = vld [vmem:[#allocation8 + $0x740] sm:$0xff]
          %v1526 = vld [vmem:[#allocation8 + $0x748] sm:$0xff]
          %v1527 = vld [vmem:[#allocation8 + $0x750] sm:$0xff]
          %v1528 = vld [vmem:[#allocation8 + $0x758] sm:$0xff]
          %v1529 = vld [vmem:[#allocation8 + $0x760] sm:$0xff]
          %v1530 = vld [vmem:[#allocation8 + $0x768] sm:$0xff]
          %v1531 = vld [vmem:[#allocation8 + $0x770] sm:$0xff]
          %v1532 = vld [vmem:[#allocation8 + $0x778] sm:$0xff]
          %v1533 = vld [vmem:[#allocation8 + $0x780] sm:$0xff]
          %v1534 = vld [vmem:[#allocation8 + $0x788] sm:$0xff]
          %v1535 = vld [vmem:[#allocation8 + $0x790] sm:$0xff]
          %v1536 = vld [vmem:[#allocation8 + $0x798] sm:$0xff]
          %v1537 = vld [vmem:[#allocation8 + $0x7a0] sm:$0xff]
          %v1538 = vld [vmem:[#allocation8 + $0x7a8] sm:$0xff]
          %v1539 = vld [vmem:[#allocation8 + $0x7b0] sm:$0xff]
          %v1540 = vld [vmem:[#allocation8 + $0x7b8] sm:$0xff]
          %v1541 = vld [vmem:[#allocation8 + $0x7c0] sm:$0xff]
          %v1542 = vld [vmem:[#allocation8 + $0x7c8] sm:$0xff]
          %v1543 = vld [vmem:[#allocation8 + $0x7d0] sm:$0xff]
          %v1544 = vld [vmem:[#allocation8 + $0x7d8] sm:$0xff]
          %v1545 = vld [vmem:[#allocation8 + $0x7e0] sm:$0xff]
          %v1546 = vld [vmem:[#allocation8 + $0x7e8] sm:$0xff]
          %v1547 = vld [vmem:[#allocation8 + $0x7f0] sm:$0xff]
          %v1548 = vld [vmem:[#allocation8 + $0x7f8] sm:$0xff]
          %v1549 = vld [vmem:[%s8] sm:$0xf]
          %v1806 = vunpack.c.l.b16 %v1293
          %v1807 = vunpack.c.h.b16 %v1293
          %v1808 = vunpack.c.l.b16 %v1294
          %v1809 = vunpack.c.h.b16 %v1294
          %v1810 = vunpack.c.l.b16 %v1295
          %v1811 = vunpack.c.h.b16 %v1295
          %v1812 = vunpack.c.l.b16 %v1296
          %v1813 = vunpack.c.h.b16 %v1296
          %v1814 = vunpack.c.l.b16 %v1297
          %v1815 = vunpack.c.h.b16 %v1297
          %v1816 = vunpack.c.l.b16 %v1298
          %v1817 = vunpack.c.h.b16 %v1298
          %v1818 = vunpack.c.l.b16 %v1299
          %v1819 = vunpack.c.h.b16 %v1299
          %v1820 = vunpack.c.l.b16 %v1300
          %v1821 = vunpack.c.h.b16 %v1300
          %v1822 = vunpack.c.l.b16 %v1301
          %v1823 = vunpack.c.h.b16 %v1301
          %v1824 = vunpack.c.l.b16 %v1302
          %v1825 = vunpack.c.h.b16 %v1302
          %v1826 = vunpack.c.l.b16 %v1303
          %v1827 = vunpack.c.h.b16 %v1303
          %v1828 = vunpack.c.l.b16 %v1304
          %v1829 = vunpack.c.h.b16 %v1304
          %v1830 = vunpack.c.l.b16 %v1305
          %v1831 = vunpack.c.h.b16 %v1305
          %v1832 = vunpack.c.l.b16 %v1306
          %v1833 = vunpack.c.h.b16 %v1306
          %v1834 = vunpack.c.l.b16 %v1307
          %v1835 = vunpack.c.h.b16 %v1307
          %v1836 = vunpack.c.l.b16 %v1308
          %v1837 = vunpack.c.h.b16 %v1308
          %v1838 = vunpack.c.l.b16 %v1309
          %v1839 = vunpack.c.h.b16 %v1309
          %v1840 = vunpack.c.l.b16 %v1310
          %v1841 = vunpack.c.h.b16 %v1310
          %v1842 = vunpack.c.l.b16 %v1311
          %v1843 = vunpack.c.h.b16 %v1311
          %v1844 = vunpack.c.l.b16 %v1312
          %v1845 = vunpack.c.h.b16 %v1312
          %v1846 = vunpack.c.l.b16 %v1313
          %v1847 = vunpack.c.h.b16 %v1313
          %v1848 = vunpack.c.l.b16 %v1314
          %v1849 = vunpack.c.h.b16 %v1314
          %v1850 = vunpack.c.l.b16 %v1315
          %v1851 = vunpack.c.h.b16 %v1315
          %v1852 = vunpack.c.l.b16 %v1316
          %v1853 = vunpack.c.h.b16 %v1316
          %v1854 = vunpack.c.l.b16 %v1317
          %v1855 = vunpack.c.h.b16 %v1317
          %v1856 = vunpack.c.l.b16 %v1318
          %v1857 = vunpack.c.h.b16 %v1318
          %v1858 = vunpack.c.l.b16 %v1319
          %v1859 = vunpack.c.h.b16 %v1319
          %v1860 = vunpack.c.l.b16 %v1320
          %v1861 = vunpack.c.h.b16 %v1320
          %v1862 = vunpack.c.l.b16 %v1321
          %v1863 = vunpack.c.h.b16 %v1321
          %v1864 = vunpack.c.l.b16 %v1322
          %v1865 = vunpack.c.h.b16 %v1322
          %v1866 = vunpack.c.l.b16 %v1323
          %v1867 = vunpack.c.h.b16 %v1323
          %v1868 = vunpack.c.l.b16 %v1324
          %v1869 = vunpack.c.h.b16 %v1324
          %v1870 = vunpack.c.l.b16 %v1325
          %v1871 = vunpack.c.h.b16 %v1325
          %v1872 = vunpack.c.l.b16 %v1326
          %v1873 = vunpack.c.h.b16 %v1326
          %v1874 = vunpack.c.l.b16 %v1327
          %v1875 = vunpack.c.h.b16 %v1327
          %v1876 = vunpack.c.l.b16 %v1328
          %v1877 = vunpack.c.h.b16 %v1328
          %v1878 = vunpack.c.l.b16 %v1329
          %v1879 = vunpack.c.h.b16 %v1329
          %v1880 = vunpack.c.l.b16 %v1330
          %v1881 = vunpack.c.h.b16 %v1330
          %v1882 = vunpack.c.l.b16 %v1331
          %v1883 = vunpack.c.h.b16 %v1331
          %v1884 = vunpack.c.l.b16 %v1332
          %v1885 = vunpack.c.h.b16 %v1332
          %v1886 = vunpack.c.l.b16 %v1333
          %v1887 = vunpack.c.h.b16 %v1333
          %v1888 = vunpack.c.l.b16 %v1334
          %v1889 = vunpack.c.h.b16 %v1334
          %v1890 = vunpack.c.l.b16 %v1335
          %v1891 = vunpack.c.h.b16 %v1335
          %v1892 = vunpack.c.l.b16 %v1336
          %v1893 = vunpack.c.h.b16 %v1336
          %v1894 = vunpack.c.l.b16 %v1337
          %v1895 = vunpack.c.h.b16 %v1337
          %v1896 = vunpack.c.l.b16 %v1338
          %v1897 = vunpack.c.h.b16 %v1338
          %v1898 = vunpack.c.l.b16 %v1339
          %v1899 = vunpack.c.h.b16 %v1339
          %v1900 = vunpack.c.l.b16 %v1340
          %v1901 = vunpack.c.h.b16 %v1340
          %v1902 = vunpack.c.l.b16 %v1341
          %v1903 = vunpack.c.h.b16 %v1341
          %v1904 = vunpack.c.l.b16 %v1342
          %v1905 = vunpack.c.h.b16 %v1342
          %v1906 = vunpack.c.l.b16 %v1343
          %v1907 = vunpack.c.h.b16 %v1343
          %v1908 = vunpack.c.l.b16 %v1344
          %v1909 = vunpack.c.h.b16 %v1344
          %v1910 = vunpack.c.l.b16 %v1345
          %v1911 = vunpack.c.h.b16 %v1345
          %v1912 = vunpack.c.l.b16 %v1346
          %v1913 = vunpack.c.h.b16 %v1346
          %v1914 = vunpack.c.l.b16 %v1347
          %v1915 = vunpack.c.h.b16 %v1347
          %v1916 = vunpack.c.l.b16 %v1348
          %v1917 = vunpack.c.h.b16 %v1348
          %v1918 = vunpack.c.l.b16 %v1349
          %v1919 = vunpack.c.h.b16 %v1349
          %v1920 = vunpack.c.l.b16 %v1350
          %v1921 = vunpack.c.h.b16 %v1350
          %v1922 = vunpack.c.l.b16 %v1351
          %v1923 = vunpack.c.h.b16 %v1351
          %v1924 = vunpack.c.l.b16 %v1352
          %v1925 = vunpack.c.h.b16 %v1352
          %v1926 = vunpack.c.l.b16 %v1353
          %v1927 = vunpack.c.h.b16 %v1353
          %v1928 = vunpack.c.l.b16 %v1354
          %v1929 = vunpack.c.h.b16 %v1354
          %v1930 = vunpack.c.l.b16 %v1355
          %v1931 = vunpack.c.h.b16 %v1355
          %v1932 = vunpack.c.l.b16 %v1356
          %v1933 = vunpack.c.h.b16 %v1356
          %v1934 = vunpack.c.l.b16 %v1357
          %v1935 = vunpack.c.h.b16 %v1357
          %v1936 = vunpack.c.l.b16 %v1358
          %v1937 = vunpack.c.h.b16 %v1358
          %v1938 = vunpack.c.l.b16 %v1359
          %v1939 = vunpack.c.h.b16 %v1359
          %v1940 = vunpack.c.l.b16 %v1360
          %v1941 = vunpack.c.h.b16 %v1360
          %v1942 = vunpack.c.l.b16 %v1361
          %v1943 = vunpack.c.h.b16 %v1361
          %v1944 = vunpack.c.l.b16 %v1362
          %v1945 = vunpack.c.h.b16 %v1362
          %v1946 = vunpack.c.l.b16 %v1363
          %v1947 = vunpack.c.h.b16 %v1363
          %v1948 = vunpack.c.l.b16 %v1364
          %v1949 = vunpack.c.h.b16 %v1364
          %v1950 = vunpack.c.l.b16 %v1365
          %v1951 = vunpack.c.h.b16 %v1365
          %v1952 = vunpack.c.l.b16 %v1366
          %v1953 = vunpack.c.h.b16 %v1366
          %v1954 = vunpack.c.l.b16 %v1367
          %v1955 = vunpack.c.h.b16 %v1367
          %v1956 = vunpack.c.l.b16 %v1368
          %v1957 = vunpack.c.h.b16 %v1368
          %v1958 = vunpack.c.l.b16 %v1369
          %v1959 = vunpack.c.h.b16 %v1369
          %v1960 = vunpack.c.l.b16 %v1370
          %v1961 = vunpack.c.h.b16 %v1370
          %v1962 = vunpack.c.l.b16 %v1371
          %v1963 = vunpack.c.h.b16 %v1371
          %v1964 = vunpack.c.l.b16 %v1372
          %v1965 = vunpack.c.h.b16 %v1372
          %v1966 = vunpack.c.l.b16 %v1373
          %v1967 = vunpack.c.h.b16 %v1373
          %v1968 = vunpack.c.l.b16 %v1374
          %v1969 = vunpack.c.h.b16 %v1374
          %v1970 = vunpack.c.l.b16 %v1375
          %v1971 = vunpack.c.h.b16 %v1375
          %v1972 = vunpack.c.l.b16 %v1376
          %v1973 = vunpack.c.h.b16 %v1376
          %v1974 = vunpack.c.l.b16 %v1377
          %v1975 = vunpack.c.h.b16 %v1377
          %v1976 = vunpack.c.l.b16 %v1378
          %v1977 = vunpack.c.h.b16 %v1378
          %v1978 = vunpack.c.l.b16 %v1379
          %v1979 = vunpack.c.h.b16 %v1379
          %v1980 = vunpack.c.l.b16 %v1380
          %v1981 = vunpack.c.h.b16 %v1380
          %v1982 = vunpack.c.l.b16 %v1381
          %v1983 = vunpack.c.h.b16 %v1381
          %v1984 = vunpack.c.l.b16 %v1382
          %v1985 = vunpack.c.h.b16 %v1382
          %v1986 = vunpack.c.l.b16 %v1383
          %v1987 = vunpack.c.h.b16 %v1383
          %v1988 = vunpack.c.l.b16 %v1384
          %v1989 = vunpack.c.h.b16 %v1384
          %v1990 = vunpack.c.l.b16 %v1385
          %v1991 = vunpack.c.h.b16 %v1385
          %v1992 = vunpack.c.l.b16 %v1386
          %v1993 = vunpack.c.h.b16 %v1386
          %v1994 = vunpack.c.l.b16 %v1387
          %v1995 = vunpack.c.h.b16 %v1387
          %v1996 = vunpack.c.l.b16 %v1388
          %v1997 = vunpack.c.h.b16 %v1388
          %v1998 = vunpack.c.l.b16 %v1389
          %v1999 = vunpack.c.h.b16 %v1389
          %v2000 = vunpack.c.l.b16 %v1390
          %v2001 = vunpack.c.h.b16 %v1390
          %v2002 = vunpack.c.l.b16 %v1391
          %v2003 = vunpack.c.h.b16 %v1391
          %v2004 = vunpack.c.l.b16 %v1392
          %v2005 = vunpack.c.h.b16 %v1392
          %v2006 = vunpack.c.l.b16 %v1393
          %v2007 = vunpack.c.h.b16 %v1393
          %v2008 = vunpack.c.l.b16 %v1394
          %v2009 = vunpack.c.h.b16 %v1394
          %v2010 = vunpack.c.l.b16 %v1395
          %v2011 = vunpack.c.h.b16 %v1395
          %v2012 = vunpack.c.l.b16 %v1396
          %v2013 = vunpack.c.h.b16 %v1396
          %v2014 = vunpack.c.l.b16 %v1397
          %v2015 = vunpack.c.h.b16 %v1397
          %v2016 = vunpack.c.l.b16 %v1398
          %v2017 = vunpack.c.h.b16 %v1398
          %v2018 = vunpack.c.l.b16 %v1399
          %v2019 = vunpack.c.h.b16 %v1399
          %v2020 = vunpack.c.l.b16 %v1400
          %v2021 = vunpack.c.h.b16 %v1400
          %v2022 = vunpack.c.l.b16 %v1401
          %v2023 = vunpack.c.h.b16 %v1401
          %v2024 = vunpack.c.l.b16 %v1402
          %v2025 = vunpack.c.h.b16 %v1402
          %v2026 = vunpack.c.l.b16 %v1403
          %v2027 = vunpack.c.h.b16 %v1403
          %v2028 = vunpack.c.l.b16 %v1404
          %v2029 = vunpack.c.h.b16 %v1404
          %v2030 = vunpack.c.l.b16 %v1405
          %v2031 = vunpack.c.h.b16 %v1405
          %v2032 = vunpack.c.l.b16 %v1406
          %v2033 = vunpack.c.h.b16 %v1406
          %v2034 = vunpack.c.l.b16 %v1407
          %v2035 = vunpack.c.h.b16 %v1407
          %v2036 = vunpack.c.l.b16 %v1408
          %v2037 = vunpack.c.h.b16 %v1408
          %v2038 = vunpack.c.l.b16 %v1409
          %v2039 = vunpack.c.h.b16 %v1409
          %v2040 = vunpack.c.l.b16 %v1410
          %v2041 = vunpack.c.h.b16 %v1410
          %v2042 = vunpack.c.l.b16 %v1411
          %v2043 = vunpack.c.h.b16 %v1411
          %v2044 = vunpack.c.l.b16 %v1412
          %v2045 = vunpack.c.h.b16 %v1412
          %v2046 = vunpack.c.l.b16 %v1413
          %v2047 = vunpack.c.h.b16 %v1413
          %v2048 = vunpack.c.l.b16 %v1414
          %v2049 = vunpack.c.h.b16 %v1414
          %v2050 = vunpack.c.l.b16 %v1415
          %v2051 = vunpack.c.h.b16 %v1415
          %v2052 = vunpack.c.l.b16 %v1416
          %v2053 = vunpack.c.h.b16 %v1416
          %v2054 = vunpack.c.l.b16 %v1417
          %v2055 = vunpack.c.h.b16 %v1417
          %v2056 = vunpack.c.l.b16 %v1418
          %v2057 = vunpack.c.h.b16 %v1418
          %v2058 = vunpack.c.l.b16 %v1419
          %v2059 = vunpack.c.h.b16 %v1419
          %v2060 = vunpack.c.l.b16 %v1420
          %v2061 = vunpack.c.h.b16 %v1420
          %v2062 = vunpack.c.l.b16 %v1421
          %v2063 = vunpack.c.h.b16 %v1421
          %v2064 = vunpack.c.l.b16 %v1422
          %v2065 = vunpack.c.h.b16 %v1422
          %v2066 = vunpack.c.l.b16 %v1423
          %v2067 = vunpack.c.h.b16 %v1423
          %v2068 = vunpack.c.l.b16 %v1424
          %v2069 = vunpack.c.h.b16 %v1424
          %v2070 = vunpack.c.l.b16 %v1425
          %v2071 = vunpack.c.h.b16 %v1425
          %v2072 = vunpack.c.l.b16 %v1426
          %v2073 = vunpack.c.h.b16 %v1426
          %v2074 = vunpack.c.l.b16 %v1427
          %v2075 = vunpack.c.h.b16 %v1427
          %v2076 = vunpack.c.l.b16 %v1428
          %v2077 = vunpack.c.h.b16 %v1428
          %v2078 = vunpack.c.l.b16 %v1429
          %v2079 = vunpack.c.h.b16 %v1429
          %v2080 = vunpack.c.l.b16 %v1430
          %v2081 = vunpack.c.h.b16 %v1430
          %v2082 = vunpack.c.l.b16 %v1431
          %v2083 = vunpack.c.h.b16 %v1431
          %v2084 = vunpack.c.l.b16 %v1432
          %v2085 = vunpack.c.h.b16 %v1432
          %v2086 = vunpack.c.l.b16 %v1433
          %v2087 = vunpack.c.h.b16 %v1433
          %v2088 = vunpack.c.l.b16 %v1434
          %v2089 = vunpack.c.h.b16 %v1434
          %v2090 = vunpack.c.l.b16 %v1435
          %v2091 = vunpack.c.h.b16 %v1435
          %v2092 = vunpack.c.l.b16 %v1436
          %v2093 = vunpack.c.h.b16 %v1436
          %v2094 = vunpack.c.l.b16 %v1437
          %v2095 = vunpack.c.h.b16 %v1437
          %v2096 = vunpack.c.l.b16 %v1438
          %v2097 = vunpack.c.h.b16 %v1438
          %v2098 = vunpack.c.l.b16 %v1439
          %v2099 = vunpack.c.h.b16 %v1439
          %v2100 = vunpack.c.l.b16 %v1440
          %v2101 = vunpack.c.h.b16 %v1440
          %v2102 = vunpack.c.l.b16 %v1441
          %v2103 = vunpack.c.h.b16 %v1441
          %v2104 = vunpack.c.l.b16 %v1442
          %v2105 = vunpack.c.h.b16 %v1442
          %v2106 = vunpack.c.l.b16 %v1443
          %v2107 = vunpack.c.h.b16 %v1443
          %v2108 = vunpack.c.l.b16 %v1444
          %v2109 = vunpack.c.h.b16 %v1444
          %v2110 = vunpack.c.l.b16 %v1445
          %v2111 = vunpack.c.h.b16 %v1445
          %v2112 = vunpack.c.l.b16 %v1446
          %v2113 = vunpack.c.h.b16 %v1446
          %v2114 = vunpack.c.l.b16 %v1447
          %v2115 = vunpack.c.h.b16 %v1447
          %v2116 = vunpack.c.l.b16 %v1448
          %v2117 = vunpack.c.h.b16 %v1448
          %v2118 = vunpack.c.l.b16 %v1449
          %v2119 = vunpack.c.h.b16 %v1449
          %v2120 = vunpack.c.l.b16 %v1450
          %v2121 = vunpack.c.h.b16 %v1450
          %v2122 = vunpack.c.l.b16 %v1451
          %v2123 = vunpack.c.h.b16 %v1451
          %v2124 = vunpack.c.l.b16 %v1452
          %v2125 = vunpack.c.h.b16 %v1452
          %v2126 = vunpack.c.l.b16 %v1453
          %v2127 = vunpack.c.h.b16 %v1453
          %v2128 = vunpack.c.l.b16 %v1454
          %v2129 = vunpack.c.h.b16 %v1454
          %v2130 = vunpack.c.l.b16 %v1455
          %v2131 = vunpack.c.h.b16 %v1455
          %v2132 = vunpack.c.l.b16 %v1456
          %v2133 = vunpack.c.h.b16 %v1456
          %v2134 = vunpack.c.l.b16 %v1457
          %v2135 = vunpack.c.h.b16 %v1457
          %v2136 = vunpack.c.l.b16 %v1458
          %v2137 = vunpack.c.h.b16 %v1458
          %v2138 = vunpack.c.l.b16 %v1459
          %v2139 = vunpack.c.h.b16 %v1459
          %v2140 = vunpack.c.l.b16 %v1460
          %v2141 = vunpack.c.h.b16 %v1460
          %v2142 = vunpack.c.l.b16 %v1461
          %v2143 = vunpack.c.h.b16 %v1461
          %v2144 = vunpack.c.l.b16 %v1462
          %v2145 = vunpack.c.h.b16 %v1462
          %v2146 = vunpack.c.l.b16 %v1463
          %v2147 = vunpack.c.h.b16 %v1463
          %v2148 = vunpack.c.l.b16 %v1464
          %v2149 = vunpack.c.h.b16 %v1464
          %v2150 = vunpack.c.l.b16 %v1465
          %v2151 = vunpack.c.h.b16 %v1465
          %v2152 = vunpack.c.l.b16 %v1466
          %v2153 = vunpack.c.h.b16 %v1466
          %v2154 = vunpack.c.l.b16 %v1467
          %v2155 = vunpack.c.h.b16 %v1467
          %v2156 = vunpack.c.l.b16 %v1468
          %v2157 = vunpack.c.h.b16 %v1468
          %v2158 = vunpack.c.l.b16 %v1469
          %v2159 = vunpack.c.h.b16 %v1469
          %v2160 = vunpack.c.l.b16 %v1470
          %v2161 = vunpack.c.h.b16 %v1470
          %v2162 = vunpack.c.l.b16 %v1471
          %v2163 = vunpack.c.h.b16 %v1471
          %v2164 = vunpack.c.l.b16 %v1472
          %v2165 = vunpack.c.h.b16 %v1472
          %v2166 = vunpack.c.l.b16 %v1473
          %v2167 = vunpack.c.h.b16 %v1473
          %v2168 = vunpack.c.l.b16 %v1474
          %v2169 = vunpack.c.h.b16 %v1474
          %v2170 = vunpack.c.l.b16 %v1475
          %v2171 = vunpack.c.h.b16 %v1475
          %v2172 = vunpack.c.l.b16 %v1476
          %v2173 = vunpack.c.h.b16 %v1476
          %v2174 = vunpack.c.l.b16 %v1477
          %v2175 = vunpack.c.h.b16 %v1477
          %v2176 = vunpack.c.l.b16 %v1478
          %v2177 = vunpack.c.h.b16 %v1478
          %v2178 = vunpack.c.l.b16 %v1479
          %v2179 = vunpack.c.h.b16 %v1479
          %v2180 = vunpack.c.l.b16 %v1480
          %v2181 = vunpack.c.h.b16 %v1480
          %v2182 = vunpack.c.l.b16 %v1481
          %v2183 = vunpack.c.h.b16 %v1481
          %v2184 = vunpack.c.l.b16 %v1482
          %v2185 = vunpack.c.h.b16 %v1482
          %v2186 = vunpack.c.l.b16 %v1483
          %v2187 = vunpack.c.h.b16 %v1483
          %v2188 = vunpack.c.l.b16 %v1484
          %v2189 = vunpack.c.h.b16 %v1484
          %v2190 = vunpack.c.l.b16 %v1485
          %v2191 = vunpack.c.h.b16 %v1485
          %v2192 = vunpack.c.l.b16 %v1486
          %v2193 = vunpack.c.h.b16 %v1486
          %v2194 = vunpack.c.l.b16 %v1487
          %v2195 = vunpack.c.h.b16 %v1487
          %v2196 = vunpack.c.l.b16 %v1488
          %v2197 = vunpack.c.h.b16 %v1488
          %v2198 = vunpack.c.l.b16 %v1489
          %v2199 = vunpack.c.h.b16 %v1489
          %v2200 = vunpack.c.l.b16 %v1490
          %v2201 = vunpack.c.h.b16 %v1490
          %v2202 = vunpack.c.l.b16 %v1491
          %v2203 = vunpack.c.h.b16 %v1491
          %v2204 = vunpack.c.l.b16 %v1492
          %v2205 = vunpack.c.h.b16 %v1492
          %v2206 = vunpack.c.l.b16 %v1493
          %v2207 = vunpack.c.h.b16 %v1493
          %v2208 = vunpack.c.l.b16 %v1494
          %v2209 = vunpack.c.h.b16 %v1494
          %v2210 = vunpack.c.l.b16 %v1495
          %v2211 = vunpack.c.h.b16 %v1495
          %v2212 = vunpack.c.l.b16 %v1496
          %v2213 = vunpack.c.h.b16 %v1496
          %v2214 = vunpack.c.l.b16 %v1497
          %v2215 = vunpack.c.h.b16 %v1497
          %v2216 = vunpack.c.l.b16 %v1498
          %v2217 = vunpack.c.h.b16 %v1498
          %v2218 = vunpack.c.l.b16 %v1499
          %v2219 = vunpack.c.h.b16 %v1499
          %v2220 = vunpack.c.l.b16 %v1500
          %v2221 = vunpack.c.h.b16 %v1500
          %v2222 = vunpack.c.l.b16 %v1501
          %v2223 = vunpack.c.h.b16 %v1501
          %v2224 = vunpack.c.l.b16 %v1502
          %v2225 = vunpack.c.h.b16 %v1502
          %v2226 = vunpack.c.l.b16 %v1503
          %v2227 = vunpack.c.h.b16 %v1503
          %v2228 = vunpack.c.l.b16 %v1504
          %v2229 = vunpack.c.h.b16 %v1504
          %v2230 = vunpack.c.l.b16 %v1505
          %v2231 = vunpack.c.h.b16 %v1505
          %v2232 = vunpack.c.l.b16 %v1506
          %v2233 = vunpack.c.h.b16 %v1506
          %v2234 = vunpack.c.l.b16 %v1507
          %v2235 = vunpack.c.h.b16 %v1507
          %v2236 = vunpack.c.l.b16 %v1508
          %v2237 = vunpack.c.h.b16 %v1508
          %v2238 = vunpack.c.l.b16 %v1509
          %v2239 = vunpack.c.h.b16 %v1509
          %v2240 = vunpack.c.l.b16 %v1510
          %v2241 = vunpack.c.h.b16 %v1510
          %v2242 = vunpack.c.l.b16 %v1511
          %v2243 = vunpack.c.h.b16 %v1511
          %v2244 = vunpack.c.l.b16 %v1512
          %v2245 = vunpack.c.h.b16 %v1512
          %v2246 = vunpack.c.l.b16 %v1513
          %v2247 = vunpack.c.h.b16 %v1513
          %v2248 = vunpack.c.l.b16 %v1514
          %v2249 = vunpack.c.h.b16 %v1514
          %v2250 = vunpack.c.l.b16 %v1515
          %v2251 = vunpack.c.h.b16 %v1515
          %v2252 = vunpack.c.l.b16 %v1516
          %v2253 = vunpack.c.h.b16 %v1516
          %v2254 = vunpack.c.l.b16 %v1517
          %v2255 = vunpack.c.h.b16 %v1517
          %v2256 = vunpack.c.l.b16 %v1518
          %v2257 = vunpack.c.h.b16 %v1518
          %v2258 = vunpack.c.l.b16 %v1519
          %v2259 = vunpack.c.h.b16 %v1519
          %v2260 = vunpack.c.l.b16 %v1520
          %v2261 = vunpack.c.h.b16 %v1520
          %v2262 = vunpack.c.l.b16 %v1521
          %v2263 = vunpack.c.h.b16 %v1521
          %v2264 = vunpack.c.l.b16 %v1522
          %v2265 = vunpack.c.h.b16 %v1522
          %v2266 = vunpack.c.l.b16 %v1523
          %v2267 = vunpack.c.h.b16 %v1523
          %v2268 = vunpack.c.l.b16 %v1524
          %v2269 = vunpack.c.h.b16 %v1524
          %v2270 = vunpack.c.l.b16 %v1525
          %v2271 = vunpack.c.h.b16 %v1525
          %v2272 = vunpack.c.l.b16 %v1526
          %v2273 = vunpack.c.h.b16 %v1526
          %v2274 = vunpack.c.l.b16 %v1527
          %v2275 = vunpack.c.h.b16 %v1527
          %v2276 = vunpack.c.l.b16 %v1528
          %v2277 = vunpack.c.h.b16 %v1528
          %v2278 = vunpack.c.l.b16 %v1529
          %v2279 = vunpack.c.h.b16 %v1529
          %v2280 = vunpack.c.l.b16 %v1530
          %v2281 = vunpack.c.h.b16 %v1530
          %v2282 = vunpack.c.l.b16 %v1531
          %v2283 = vunpack.c.h.b16 %v1531
          %v2284 = vunpack.c.l.b16 %v1532
          %v2285 = vunpack.c.h.b16 %v1532
          %v2286 = vunpack.c.l.b16 %v1533
          %v2287 = vunpack.c.h.b16 %v1533
          %v2288 = vunpack.c.l.b16 %v1534
          %v2289 = vunpack.c.h.b16 %v1534
          %v2290 = vunpack.c.l.b16 %v1535
          %v2291 = vunpack.c.h.b16 %v1535
          %v2292 = vunpack.c.l.b16 %v1536
          %v2293 = vunpack.c.h.b16 %v1536
          %v2294 = vunpack.c.l.b16 %v1537
          %v2295 = vunpack.c.h.b16 %v1537
          %v2296 = vunpack.c.l.b16 %v1538
          %v2297 = vunpack.c.h.b16 %v1538
          %v2298 = vunpack.c.l.b16 %v1539
          %v2299 = vunpack.c.h.b16 %v1539
          %v2300 = vunpack.c.l.b16 %v1540
          %v2301 = vunpack.c.h.b16 %v1540
          %v2302 = vunpack.c.l.b16 %v1541
          %v2303 = vunpack.c.h.b16 %v1541
          %v2304 = vunpack.c.l.b16 %v1542
          %v2305 = vunpack.c.h.b16 %v1542
          %v2306 = vunpack.c.l.b16 %v1543
          %v2307 = vunpack.c.h.b16 %v1543
          %v2308 = vunpack.c.l.b16 %v1544
          %v2309 = vunpack.c.h.b16 %v1544
          %v2310 = vunpack.c.l.b16 %v1545
          %v2311 = vunpack.c.h.b16 %v1545
          %v2312 = vunpack.c.l.b16 %v1546
          %v2313 = vunpack.c.h.b16 %v1546
          %v2314 = vunpack.c.l.b16 %v1547
          %v2315 = vunpack.c.h.b16 %v1547
          %v2316 = vunpack.c.l.b16 %v1548
          %v2317 = vunpack.c.h.b16 %v1548
          %v2318 = vpack.c.b16 %v1810, %v1806
          %v2319 = vpack.c.b16 %v1811, %v1807
          %v2320 = vpack.c.b16 %v1812, %v1808
          %v2321 = vpack.c.b16 %v1813, %v1809
          %v2322 = vpack.c.b16 %v1818, %v1814
          %v2323 = vpack.c.b16 %v1819, %v1815
          %v2324 = vpack.c.b16 %v1820, %v1816
          %v2325 = vpack.c.b16 %v1821, %v1817
          %v2326 = vpack.c.b16 %v1826, %v1822
          %v2327 = vpack.c.b16 %v1827, %v1823
          %v2328 = vpack.c.b16 %v1828, %v1824
          %v2329 = vpack.c.b16 %v1829, %v1825
          %v2330 = vpack.c.b16 %v1834, %v1830
          %v2331 = vpack.c.b16 %v1835, %v1831
          %v2332 = vpack.c.b16 %v1836, %v1832
          %v2333 = vpack.c.b16 %v1837, %v1833
          %v2334 = vpack.c.b16 %v1842, %v1838
          %v2335 = vpack.c.b16 %v1843, %v1839
          %v2336 = vpack.c.b16 %v1844, %v1840
          %v2337 = vpack.c.b16 %v1845, %v1841
          %v2338 = vpack.c.b16 %v1850, %v1846
          %v2339 = vpack.c.b16 %v1851, %v1847
          %v2340 = vpack.c.b16 %v1852, %v1848
          %v2341 = vpack.c.b16 %v1853, %v1849
          %v2342 = vpack.c.b16 %v1858, %v1854
          %v2343 = vpack.c.b16 %v1859, %v1855
          %v2344 = vpack.c.b16 %v1860, %v1856
          %v2345 = vpack.c.b16 %v1861, %v1857
          %v2346 = vpack.c.b16 %v1866, %v1862
          %v2347 = vpack.c.b16 %v1867, %v1863
          %v2348 = vpack.c.b16 %v1868, %v1864
          %v2349 = vpack.c.b16 %v1869, %v1865
          %v2350 = vpack.c.b16 %v1874, %v1870
          %v2351 = vpack.c.b16 %v1875, %v1871
          %v2352 = vpack.c.b16 %v1876, %v1872
          %v2353 = vpack.c.b16 %v1877, %v1873
          %v2354 = vpack.c.b16 %v1882, %v1878
          %v2355 = vpack.c.b16 %v1883, %v1879
          %v2356 = vpack.c.b16 %v1884, %v1880
          %v2357 = vpack.c.b16 %v1885, %v1881
          %v2358 = vpack.c.b16 %v1890, %v1886
          %v2359 = vpack.c.b16 %v1891, %v1887
          %v2360 = vpack.c.b16 %v1892, %v1888
          %v2361 = vpack.c.b16 %v1893, %v1889
          %v2362 = vpack.c.b16 %v1898, %v1894
          %v2363 = vpack.c.b16 %v1899, %v1895
          %v2364 = vpack.c.b16 %v1900, %v1896
          %v2365 = vpack.c.b16 %v1901, %v1897
          %v2366 = vpack.c.b16 %v1906, %v1902
          %v2367 = vpack.c.b16 %v1907, %v1903
          %v2368 = vpack.c.b16 %v1908, %v1904
          %v2369 = vpack.c.b16 %v1909, %v1905
          %v2370 = vpack.c.b16 %v1914, %v1910
          %v2371 = vpack.c.b16 %v1915, %v1911
          %v2372 = vpack.c.b16 %v1916, %v1912
          %v2373 = vpack.c.b16 %v1917, %v1913
          %v2374 = vpack.c.b16 %v1922, %v1918
          %v2375 = vpack.c.b16 %v1923, %v1919
          %v2376 = vpack.c.b16 %v1924, %v1920
          %v2377 = vpack.c.b16 %v1925, %v1921
          %v2378 = vpack.c.b16 %v1930, %v1926
          %v2379 = vpack.c.b16 %v1931, %v1927
          %v2380 = vpack.c.b16 %v1932, %v1928
          %v2381 = vpack.c.b16 %v1933, %v1929
          %v2382 = vpack.c.b16 %v1938, %v1934
          %v2383 = vpack.c.b16 %v1939, %v1935
          %v2384 = vpack.c.b16 %v1940, %v1936
          %v2385 = vpack.c.b16 %v1941, %v1937
          %v2386 = vpack.c.b16 %v1946, %v1942
          %v2387 = vpack.c.b16 %v1947, %v1943
          %v2388 = vpack.c.b16 %v1948, %v1944
          %v2389 = vpack.c.b16 %v1949, %v1945
          %v2390 = vpack.c.b16 %v1954, %v1950
          %v2391 = vpack.c.b16 %v1955, %v1951
          %v2392 = vpack.c.b16 %v1956, %v1952
          %v2393 = vpack.c.b16 %v1957, %v1953
          %v2394 = vpack.c.b16 %v1962, %v1958
          %v2395 = vpack.c.b16 %v1963, %v1959
          %v2396 = vpack.c.b16 %v1964, %v1960
          %v2397 = vpack.c.b16 %v1965, %v1961
          %v2398 = vpack.c.b16 %v1970, %v1966
          %v2399 = vpack.c.b16 %v1971, %v1967
          %v2400 = vpack.c.b16 %v1972, %v1968
          %v2401 = vpack.c.b16 %v1973, %v1969
          %v2402 = vpack.c.b16 %v1978, %v1974
          %v2403 = vpack.c.b16 %v1979, %v1975
          %v2404 = vpack.c.b16 %v1980, %v1976
          %v2405 = vpack.c.b16 %v1981, %v1977
          %v2406 = vpack.c.b16 %v1986, %v1982
          %v2407 = vpack.c.b16 %v1987, %v1983
          %v2408 = vpack.c.b16 %v1988, %v1984
          %v2409 = vpack.c.b16 %v1989, %v1985
          %v2410 = vpack.c.b16 %v1994, %v1990
          %v2411 = vpack.c.b16 %v1995, %v1991
          %v2412 = vpack.c.b16 %v1996, %v1992
          %v2413 = vpack.c.b16 %v1997, %v1993
          %v2414 = vpack.c.b16 %v2002, %v1998
          %v2415 = vpack.c.b16 %v2003, %v1999
          %v2416 = vpack.c.b16 %v2004, %v2000
          %v2417 = vpack.c.b16 %v2005, %v2001
          %v2418 = vpack.c.b16 %v2010, %v2006
          %v2419 = vpack.c.b16 %v2011, %v2007
          %v2420 = vpack.c.b16 %v2012, %v2008
          %v2421 = vpack.c.b16 %v2013, %v2009
          %v2422 = vpack.c.b16 %v2018, %v2014
          %v2423 = vpack.c.b16 %v2019, %v2015
          %v2424 = vpack.c.b16 %v2020, %v2016
          %v2425 = vpack.c.b16 %v2021, %v2017
          %v2426 = vpack.c.b16 %v2026, %v2022
          %v2427 = vpack.c.b16 %v2027, %v2023
          %v2428 = vpack.c.b16 %v2028, %v2024
          %v2429 = vpack.c.b16 %v2029, %v2025
          %v2430 = vpack.c.b16 %v2034, %v2030
          %v2431 = vpack.c.b16 %v2035, %v2031
          %v2432 = vpack.c.b16 %v2036, %v2032
          %v2433 = vpack.c.b16 %v2037, %v2033
          %v2434 = vpack.c.b16 %v2042, %v2038
          %v2435 = vpack.c.b16 %v2043, %v2039
          %v2436 = vpack.c.b16 %v2044, %v2040
          %v2437 = vpack.c.b16 %v2045, %v2041
          %v2438 = vpack.c.b16 %v2050, %v2046
          %v2439 = vpack.c.b16 %v2051, %v2047
          %v2440 = vpack.c.b16 %v2052, %v2048
          %v2441 = vpack.c.b16 %v2053, %v2049
          %v2442 = vpack.c.b16 %v2058, %v2054
          %v2443 = vpack.c.b16 %v2059, %v2055
          %v2444 = vpack.c.b16 %v2060, %v2056
          %v2445 = vpack.c.b16 %v2061, %v2057
          %v2446 = vpack.c.b16 %v2066, %v2062
          %v2447 = vpack.c.b16 %v2067, %v2063
          %v2448 = vpack.c.b16 %v2068, %v2064
          %v2449 = vpack.c.b16 %v2069, %v2065
          %v2450 = vpack.c.b16 %v2074, %v2070
          %v2451 = vpack.c.b16 %v2075, %v2071
          %v2452 = vpack.c.b16 %v2076, %v2072
          %v2453 = vpack.c.b16 %v2077, %v2073
          %v2454 = vpack.c.b16 %v2082, %v2078
          %v2455 = vpack.c.b16 %v2083, %v2079
          %v2456 = vpack.c.b16 %v2084, %v2080
          %v2457 = vpack.c.b16 %v2085, %v2081
          %v2458 = vpack.c.b16 %v2090, %v2086
          %v2459 = vpack.c.b16 %v2091, %v2087
          %v2460 = vpack.c.b16 %v2092, %v2088
          %v2461 = vpack.c.b16 %v2093, %v2089
          %v2462 = vpack.c.b16 %v2098, %v2094
          %v2463 = vpack.c.b16 %v2099, %v2095
          %v2464 = vpack.c.b16 %v2100, %v2096
          %v2465 = vpack.c.b16 %v2101, %v2097
          %v2466 = vpack.c.b16 %v2106, %v2102
          %v2467 = vpack.c.b16 %v2107, %v2103
          %v2468 = vpack.c.b16 %v2108, %v2104
          %v2469 = vpack.c.b16 %v2109, %v2105
          %v2470 = vpack.c.b16 %v2114, %v2110
          %v2471 = vpack.c.b16 %v2115, %v2111
          %v2472 = vpack.c.b16 %v2116, %v2112
          %v2473 = vpack.c.b16 %v2117, %v2113
          %v2474 = vpack.c.b16 %v2122, %v2118
          %v2475 = vpack.c.b16 %v2123, %v2119
          %v2476 = vpack.c.b16 %v2124, %v2120
          %v2477 = vpack.c.b16 %v2125, %v2121
          %v2478 = vpack.c.b16 %v2130, %v2126
          %v2479 = vpack.c.b16 %v2131, %v2127
          %v2480 = vpack.c.b16 %v2132, %v2128
          %v2481 = vpack.c.b16 %v2133, %v2129
          %v2482 = vpack.c.b16 %v2138, %v2134
          %v2483 = vpack.c.b16 %v2139, %v2135
          %v2484 = vpack.c.b16 %v2140, %v2136
          %v2485 = vpack.c.b16 %v2141, %v2137
          %v2486 = vpack.c.b16 %v2146, %v2142
          %v2487 = vpack.c.b16 %v2147, %v2143
          %v2488 = vpack.c.b16 %v2148, %v2144
          %v2489 = vpack.c.b16 %v2149, %v2145
          %v2490 = vpack.c.b16 %v2154, %v2150
          %v2491 = vpack.c.b16 %v2155, %v2151
          %v2492 = vpack.c.b16 %v2156, %v2152
          %v2493 = vpack.c.b16 %v2157, %v2153
          %v2494 = vpack.c.b16 %v2162, %v2158
          %v2495 = vpack.c.b16 %v2163, %v2159
          %v2496 = vpack.c.b16 %v2164, %v2160
          %v2497 = vpack.c.b16 %v2165, %v2161
          %v2498 = vpack.c.b16 %v2170, %v2166
          %v2499 = vpack.c.b16 %v2171, %v2167
          %v2500 = vpack.c.b16 %v2172, %v2168
          %v2501 = vpack.c.b16 %v2173, %v2169
          %v2502 = vpack.c.b16 %v2178, %v2174
          %v2503 = vpack.c.b16 %v2179, %v2175
          %v2504 = vpack.c.b16 %v2180, %v2176
          %v2505 = vpack.c.b16 %v2181, %v2177
          %v2506 = vpack.c.b16 %v2186, %v2182
          %v2507 = vpack.c.b16 %v2187, %v2183
          %v2508 = vpack.c.b16 %v2188, %v2184
          %v2509 = vpack.c.b16 %v2189, %v2185
          %v2510 = vpack.c.b16 %v2194, %v2190
          %v2511 = vpack.c.b16 %v2195, %v2191
          %v2512 = vpack.c.b16 %v2196, %v2192
          %v2513 = vpack.c.b16 %v2197, %v2193
          %v2514 = vpack.c.b16 %v2202, %v2198
          %v2515 = vpack.c.b16 %v2203, %v2199
          %v2516 = vpack.c.b16 %v2204, %v2200
          %v2517 = vpack.c.b16 %v2205, %v2201
          %v2518 = vpack.c.b16 %v2210, %v2206
          %v2519 = vpack.c.b16 %v2211, %v2207
          %v2520 = vpack.c.b16 %v2212, %v2208
          %v2521 = vpack.c.b16 %v2213, %v2209
          %v2522 = vpack.c.b16 %v2218, %v2214
          %v2523 = vpack.c.b16 %v2219, %v2215
          %v2524 = vpack.c.b16 %v2220, %v2216
          %v2525 = vpack.c.b16 %v2221, %v2217
          %v2526 = vpack.c.b16 %v2226, %v2222
          %v2527 = vpack.c.b16 %v2227, %v2223
          %v2528 = vpack.c.b16 %v2228, %v2224
          %v2529 = vpack.c.b16 %v2229, %v2225
          %v2530 = vpack.c.b16 %v2234, %v2230
          %v2531 = vpack.c.b16 %v2235, %v2231
          %v2532 = vpack.c.b16 %v2236, %v2232
          %v2533 = vpack.c.b16 %v2237, %v2233
          %v2534 = vpack.c.b16 %v2242, %v2238
          %v2535 = vpack.c.b16 %v2243, %v2239
          %v2536 = vpack.c.b16 %v2244, %v2240
          %v2537 = vpack.c.b16 %v2245, %v2241
          %v2538 = vpack.c.b16 %v2250, %v2246
          %v2539 = vpack.c.b16 %v2251, %v2247
          %v2540 = vpack.c.b16 %v2252, %v2248
          %v2541 = vpack.c.b16 %v2253, %v2249
          %v2542 = vpack.c.b16 %v2258, %v2254
          %v2543 = vpack.c.b16 %v2259, %v2255
          %v2544 = vpack.c.b16 %v2260, %v2256
          %v2545 = vpack.c.b16 %v2261, %v2257
          %v2546 = vpack.c.b16 %v2266, %v2262
          %v2547 = vpack.c.b16 %v2267, %v2263
          %v2548 = vpack.c.b16 %v2268, %v2264
          %v2549 = vpack.c.b16 %v2269, %v2265
          %v2550 = vpack.c.b16 %v2274, %v2270
          %v2551 = vpack.c.b16 %v2275, %v2271
          %v2552 = vpack.c.b16 %v2276, %v2272
          %v2553 = vpack.c.b16 %v2277, %v2273
          %v2554 = vpack.c.b16 %v2282, %v2278
          %v2555 = vpack.c.b16 %v2283, %v2279
          %v2556 = vpack.c.b16 %v2284, %v2280
          %v2557 = vpack.c.b16 %v2285, %v2281
          %v2558 = vpack.c.b16 %v2290, %v2286
          %v2559 = vpack.c.b16 %v2291, %v2287
          %v2560 = vpack.c.b16 %v2292, %v2288
          %v2561 = vpack.c.b16 %v2293, %v2289
          %v2562 = vpack.c.b16 %v2298, %v2294
          %v2563 = vpack.c.b16 %v2299, %v2295
          %v2564 = vpack.c.b16 %v2300, %v2296
          %v2565 = vpack.c.b16 %v2301, %v2297
          %v2566 = vpack.c.b16 %v2306, %v2302
          %v2567 = vpack.c.b16 %v2307, %v2303
          %v2568 = vpack.c.b16 %v2308, %v2304
          %v2569 = vpack.c.b16 %v2309, %v2305
          %v2570 = vpack.c.b16 %v2314, %v2310
          %v2571 = vpack.c.b16 %v2315, %v2311
          %v2572 = vpack.c.b16 %v2316, %v2312
          %v2573 = vpack.c.b16 %v2317, %v2313
          %v2831 = vperm.slane %v1549, 0
          %v2832 = vperm.slane %v1549, 1
          %v2833 = vperm.slane %v1549, 2
          %v2834 = vperm.slane %v1549, 3
          %2839 = vmatpush.bf16.msra.mxu0 %v2346
          %2840 = vmatpush.bf16.msra.mxu0 %v2342
          %2841 = vmatpush.bf16.msra.mxu0 %v2338
          %2842 = vmatpush.bf16.msra.mxu0 %v2334
          %2843 = vmatpush.bf16.msra.mxu0 %v2330
          %2844 = vmatpush.bf16.msra.mxu0 %v2326
          %2845 = vmatpush.bf16.msra.mxu0 %v2322
          %2846 = vmatpush.bf16.msra.mxu0 %v2318
          %2847 = vmatmul.bf16.gmra.mxu0 %v1285
          %v2848 = vpop.f32.mrf.mxu0
          %v2849 = vadd.f32 %v2831, %v2848
          %v2850 = vpop.f32.mrf.mxu0
          %2851 = vdwg.mxu0
          %2852 = vmatpush.bf16.msra.mxu0 %v2378
          %2853 = vmatpush.bf16.msra.mxu0 %v2374
          %2854 = vmatpush.bf16.msra.mxu0 %v2370
          %2855 = vmatpush.bf16.msra.mxu0 %v2366
          %2856 = vmatpush.bf16.msra.mxu0 %v2362
          %2857 = vmatpush.bf16.msra.mxu0 %v2358
          %2858 = vmatpush.bf16.msra.mxu0 %v2354
          %2859 = vmatpush.bf16.msra.mxu0 %v2350
          %2860 = vmatmul.bf16.gmra.mxu0 %v1286
          %v2861 = vpop.f32.mrf.mxu0
          %v2862 = vadd.f32 %v2849, %v2861
          %v2863 = vpop.f32.mrf.mxu0
          %2864 = vdwg.mxu0
          %2865 = vmatpush.bf16.msra.mxu0 %v2410
          %2866 = vmatpush.bf16.msra.mxu0 %v2406
          %2867 = vmatpush.bf16.msra.mxu0 %v2402
          %2868 = vmatpush.bf16.msra.mxu0 %v2398
          %2869 = vmatpush.bf16.msra.mxu0 %v2394
          %2870 = vmatpush.bf16.msra.mxu0 %v2390
          %2871 = vmatpush.bf16.msra.mxu0 %v2386
          %2872 = vmatpush.bf16.msra.mxu0 %v2382
          %2873 = vmatmul.bf16.gmra.mxu0 %v1287
          %v2874 = vpop.f32.mrf.mxu0
          %v2875 = vadd.f32 %v2862, %v2874
          %v2876 = vpop.f32.mrf.mxu0
          %2877 = vdwg.mxu0
          %2878 = vmatpush.bf16.msra.mxu0 %v2442
          %2879 = vmatpush.bf16.msra.mxu0 %v2438
          %2880 = vmatpush.bf16.msra.mxu0 %v2434
          %2881 = vmatpush.bf16.msra.mxu0 %v2430
          %2882 = vmatpush.bf16.msra.mxu0 %v2426
          %2883 = vmatpush.bf16.msra.mxu0 %v2422
          %2884 = vmatpush.bf16.msra.mxu0 %v2418
          %2885 = vmatpush.bf16.msra.mxu0 %v2414
          %2886 = vmatmul.bf16.gmra.mxu0 %v1288
          %v2887 = vpop.f32.mrf.mxu0
          %v2888 = vadd.f32 %v2875, %v2887
          %v2889 = vpop.f32.mrf.mxu0
          %2890 = vdwg.mxu0
          %2891 = vmatpush.bf16.msra.mxu0 %v2474
          %2892 = vmatpush.bf16.msra.mxu0 %v2470
          %2893 = vmatpush.bf16.msra.mxu0 %v2466
          %2894 = vmatpush.bf16.msra.mxu0 %v2462
          %2895 = vmatpush.bf16.msra.mxu0 %v2458
          %2896 = vmatpush.bf16.msra.mxu0 %v2454
          %2897 = vmatpush.bf16.msra.mxu0 %v2450
          %2898 = vmatpush.bf16.msra.mxu0 %v2446
          %2899 = vmatmul.bf16.gmra.mxu0 %v1289
          %v2900 = vpop.f32.mrf.mxu0
          %v2901 = vadd.f32 %v2888, %v2900
          %v2902 = vpop.f32.mrf.mxu0
          %2903 = vdwg.mxu0
          %2904 = vmatpush.bf16.msra.mxu0 %v2506
          %2905 = vmatpush.bf16.msra.mxu0 %v2502
          %2906 = vmatpush.bf16.msra.mxu0 %v2498
          %2907 = vmatpush.bf16.msra.mxu0 %v2494
          %2908 = vmatpush.bf16.msra.mxu0 %v2490
          %2909 = vmatpush.bf16.msra.mxu0 %v2486
          %2910 = vmatpush.bf16.msra.mxu0 %v2482
          %2911 = vmatpush.bf16.msra.mxu0 %v2478
          %2912 = vmatmul.bf16.gmra.mxu0 %v1290
          %v2913 = vpop.f32.mrf.mxu0
          %v2914 = vadd.f32 %v2901, %v2913
          %v2915 = vpop.f32.mrf.mxu0
          %2916 = vdwg.mxu0
          %2917 = vmatpush.bf16.msra.mxu0 %v2538
          %2918 = vmatpush.bf16.msra.mxu0 %v2534
          %2919 = vmatpush.bf16.msra.mxu0 %v2530
          %2920 = vmatpush.bf16.msra.mxu0 %v2526
          %2921 = vmatpush.bf16.msra.mxu0 %v2522
          %2922 = vmatpush.bf16.msra.mxu0 %v2518
          %2923 = vmatpush.bf16.msra.mxu0 %v2514
          %2924 = vmatpush.bf16.msra.mxu0 %v2510
          %2925 = vmatmul.bf16.gmra.mxu0 %v1291
          %v2926 = vpop.f32.mrf.mxu0
          %v2927 = vadd.f32 %v2914, %v2926
          %v2928 = vpop.f32.mrf.mxu0
          %2929 = vdwg.mxu0
          %2930 = vmatpush.bf16.msra.mxu0 %v2570
          %2931 = vmatpush.bf16.msra.mxu0 %v2566
          %2932 = vmatpush.bf16.msra.mxu0 %v2562
          %2933 = vmatpush.bf16.msra.mxu0 %v2558
          %2934 = vmatpush.bf16.msra.mxu0 %v2554
          %2935 = vmatpush.bf16.msra.mxu0 %v2550
          %2936 = vmatpush.bf16.msra.mxu0 %v2546
          %2937 = vmatpush.bf16.msra.mxu0 %v2542
          %2938 = vmatmul.bf16.gmra.mxu0 %v1292
          %v2939 = vpop.f32.mrf.mxu0
          %v2940 = vadd.f32 %v2927, %v2939
          %v2941 = vpop.f32.mrf.mxu0
          %2942 = vdwg.mxu0
          %2943 = vmatpush.bf16.msra.mxu0 %v2347
          %2944 = vmatpush.bf16.msra.mxu0 %v2343
          %2945 = vmatpush.bf16.msra.mxu0 %v2339
          %2946 = vmatpush.bf16.msra.mxu0 %v2335
          %2947 = vmatpush.bf16.msra.mxu0 %v2331
          %2948 = vmatpush.bf16.msra.mxu0 %v2327
          %2949 = vmatpush.bf16.msra.mxu0 %v2323
          %2950 = vmatpush.bf16.msra.mxu0 %v2319
          %2951 = vmatmul.bf16.gmra.mxu0 %v1285
          %v2952 = vpop.f32.mrf.mxu0
          %v2953 = vadd.f32 %v2832, %v2952
          %v2954 = vpop.f32.mrf.mxu0
          %2955 = vdwg.mxu0
          %2956 = vmatpush.bf16.msra.mxu0 %v2379
          %2957 = vmatpush.bf16.msra.mxu0 %v2375
          %2958 = vmatpush.bf16.msra.mxu0 %v2371
          %2959 = vmatpush.bf16.msra.mxu0 %v2367
          %2960 = vmatpush.bf16.msra.mxu0 %v2363
          %2961 = vmatpush.bf16.msra.mxu0 %v2359
          %2962 = vmatpush.bf16.msra.mxu0 %v2355
          %2963 = vmatpush.bf16.msra.mxu0 %v2351
          %2964 = vmatmul.bf16.gmra.mxu0 %v1286
          %v2965 = vpop.f32.mrf.mxu0
          %v2966 = vadd.f32 %v2953, %v2965
          %v2967 = vpop.f32.mrf.mxu0
          %2968 = vdwg.mxu0
          %2969 = vmatpush.bf16.msra.mxu0 %v2411
          %2970 = vmatpush.bf16.msra.mxu0 %v2407
          %2971 = vmatpush.bf16.msra.mxu0 %v2403
          %2972 = vmatpush.bf16.msra.mxu0 %v2399
          %2973 = vmatpush.bf16.msra.mxu0 %v2395
          %2974 = vmatpush.bf16.msra.mxu0 %v2391
          %2975 = vmatpush.bf16.msra.mxu0 %v2387
          %2976 = vmatpush.bf16.msra.mxu0 %v2383
          %2977 = vmatmul.bf16.gmra.mxu0 %v1287
          %v2978 = vpop.f32.mrf.mxu0
          %v2979 = vadd.f32 %v2966, %v2978
          %v2980 = vpop.f32.mrf.mxu0
          %2981 = vdwg.mxu0
          %2982 = vmatpush.bf16.msra.mxu0 %v2443
          %2983 = vmatpush.bf16.msra.mxu0 %v2439
          %2984 = vmatpush.bf16.msra.mxu0 %v2435
          %2985 = vmatpush.bf16.msra.mxu0 %v2431
          %2986 = vmatpush.bf16.msra.mxu0 %v2427
          %2987 = vmatpush.bf16.msra.mxu0 %v2423
          %2988 = vmatpush.bf16.msra.mxu0 %v2419
          %2989 = vmatpush.bf16.msra.mxu0 %v2415
          %2990 = vmatmul.bf16.gmra.mxu0 %v1288
          %v2991 = vpop.f32.mrf.mxu0
          %v2992 = vadd.f32 %v2979, %v2991
          %v2993 = vpop.f32.mrf.mxu0
          %2994 = vdwg.mxu0
          %2995 = vmatpush.bf16.msra.mxu0 %v2475
          %2996 = vmatpush.bf16.msra.mxu0 %v2471
          %2997 = vmatpush.bf16.msra.mxu0 %v2467
          %2998 = vmatpush.bf16.msra.mxu0 %v2463
          %2999 = vmatpush.bf16.msra.mxu0 %v2459
          %3000 = vmatpush.bf16.msra.mxu0 %v2455
          %3001 = vmatpush.bf16.msra.mxu0 %v2451
          %3002 = vmatpush.bf16.msra.mxu0 %v2447
          %3003 = vmatmul.bf16.gmra.mxu0 %v1289
          %v3004 = vpop.f32.mrf.mxu0
          %v3005 = vadd.f32 %v2992, %v3004
          %v3006 = vpop.f32.mrf.mxu0
          %3007 = vdwg.mxu0
          %3008 = vmatpush.bf16.msra.mxu0 %v2507
          %3009 = vmatpush.bf16.msra.mxu0 %v2503
          %3010 = vmatpush.bf16.msra.mxu0 %v2499
          %3011 = vmatpush.bf16.msra.mxu0 %v2495
          %3012 = vmatpush.bf16.msra.mxu0 %v2491
          %3013 = vmatpush.bf16.msra.mxu0 %v2487
          %3014 = vmatpush.bf16.msra.mxu0 %v2483
          %3015 = vmatpush.bf16.msra.mxu0 %v2479
          %3016 = vmatmul.bf16.gmra.mxu0 %v1290
          %v3017 = vpop.f32.mrf.mxu0
          %v3018 = vadd.f32 %v3005, %v3017
          %v3019 = vpop.f32.mrf.mxu0
          %3020 = vdwg.mxu0
          %3021 = vmatpush.bf16.msra.mxu0 %v2539
          %3022 = vmatpush.bf16.msra.mxu0 %v2535
          %3023 = vmatpush.bf16.msra.mxu0 %v2531
          %3024 = vmatpush.bf16.msra.mxu0 %v2527
          %3025 = vmatpush.bf16.msra.mxu0 %v2523
          %3026 = vmatpush.bf16.msra.mxu0 %v2519
          %3027 = vmatpush.bf16.msra.mxu0 %v2515
          %3028 = vmatpush.bf16.msra.mxu0 %v2511
          %3029 = vmatmul.bf16.gmra.mxu0 %v1291
          %v3030 = vpop.f32.mrf.mxu0
          %v3031 = vadd.f32 %v3018, %v3030
          %v3032 = vpop.f32.mrf.mxu0
          %3033 = vdwg.mxu0
          %3034 = vmatpush.bf16.msra.mxu0 %v2571
          %3035 = vmatpush.bf16.msra.mxu0 %v2567
          %3036 = vmatpush.bf16.msra.mxu0 %v2563
          %3037 = vmatpush.bf16.msra.mxu0 %v2559
          %3038 = vmatpush.bf16.msra.mxu0 %v2555
          %3039 = vmatpush.bf16.msra.mxu0 %v2551
          %3040 = vmatpush.bf16.msra.mxu0 %v2547
          %3041 = vmatpush.bf16.msra.mxu0 %v2543
          %3042 = vmatmul.bf16.gmra.mxu0 %v1292
          %v3043 = vpop.f32.mrf.mxu0
          %v3044 = vadd.f32 %v3031, %v3043
          %v3045 = vpop.f32.mrf.mxu0
          %3046 = vdwg.mxu0
          %3047 = vmatpush.bf16.msra.mxu0 %v2348
          %3048 = vmatpush.bf16.msra.mxu0 %v2344
          %3049 = vmatpush.bf16.msra.mxu0 %v2340
          %3050 = vmatpush.bf16.msra.mxu0 %v2336
          %3051 = vmatpush.bf16.msra.mxu0 %v2332
          %3052 = vmatpush.bf16.msra.mxu0 %v2328
          %3053 = vmatpush.bf16.msra.mxu0 %v2324
          %3054 = vmatpush.bf16.msra.mxu0 %v2320
          %3055 = vmatmul.bf16.gmra.mxu0 %v1285
          %v3056 = vpop.f32.mrf.mxu0
          %v3057 = vadd.f32 %v2833, %v3056
          %v3058 = vpop.f32.mrf.mxu0
          %3059 = vdwg.mxu0
          %3060 = vmatpush.bf16.msra.mxu0 %v2380
          %3061 = vmatpush.bf16.msra.mxu0 %v2376
          %3062 = vmatpush.bf16.msra.mxu0 %v2372
          %3063 = vmatpush.bf16.msra.mxu0 %v2368
          %3064 = vmatpush.bf16.msra.mxu0 %v2364
          %3065 = vmatpush.bf16.msra.mxu0 %v2360
          %3066 = vmatpush.bf16.msra.mxu0 %v2356
          %3067 = vmatpush.bf16.msra.mxu0 %v2352
          %3068 = vmatmul.bf16.gmra.mxu0 %v1286
          %v3069 = vpop.f32.mrf.mxu0
          %v3070 = vadd.f32 %v3057, %v3069
          %v3071 = vpop.f32.mrf.mxu0
          %3072 = vdwg.mxu0
          %3073 = vmatpush.bf16.msra.mxu0 %v2412
          %3074 = vmatpush.bf16.msra.mxu0 %v2408
          %3075 = vmatpush.bf16.msra.mxu0 %v2404
          %3076 = vmatpush.bf16.msra.mxu0 %v2400
          %3077 = vmatpush.bf16.msra.mxu0 %v2396
          %3078 = vmatpush.bf16.msra.mxu0 %v2392
          %3079 = vmatpush.bf16.msra.mxu0 %v2388
          %3080 = vmatpush.bf16.msra.mxu0 %v2384
          %3081 = vmatmul.bf16.gmra.mxu0 %v1287
          %v3082 = vpop.f32.mrf.mxu0
          %v3083 = vadd.f32 %v3070, %v3082
          %v3084 = vpop.f32.mrf.mxu0
          %3085 = vdwg.mxu0
          %3086 = vmatpush.bf16.msra.mxu0 %v2444
          %3087 = vmatpush.bf16.msra.mxu0 %v2440
          %3088 = vmatpush.bf16.msra.mxu0 %v2436
          %3089 = vmatpush.bf16.msra.mxu0 %v2432
          %3090 = vmatpush.bf16.msra.mxu0 %v2428
          %3091 = vmatpush.bf16.msra.mxu0 %v2424
          %3092 = vmatpush.bf16.msra.mxu0 %v2420
          %3093 = vmatpush.bf16.msra.mxu0 %v2416
          %3094 = vmatmul.bf16.gmra.mxu0 %v1288
          %v3095 = vpop.f32.mrf.mxu0
          %v3096 = vadd.f32 %v3083, %v3095
          %v3097 = vpop.f32.mrf.mxu0
          %3098 = vdwg.mxu0
          %3099 = vmatpush.bf16.msra.mxu0 %v2476
          %3100 = vmatpush.bf16.msra.mxu0 %v2472
          %3101 = vmatpush.bf16.msra.mxu0 %v2468
          %3102 = vmatpush.bf16.msra.mxu0 %v2464
          %3103 = vmatpush.bf16.msra.mxu0 %v2460
          %3104 = vmatpush.bf16.msra.mxu0 %v2456
          %3105 = vmatpush.bf16.msra.mxu0 %v2452
          %3106 = vmatpush.bf16.msra.mxu0 %v2448
          %3107 = vmatmul.bf16.gmra.mxu0 %v1289
          %v3108 = vpop.f32.mrf.mxu0
          %v3109 = vadd.f32 %v3096, %v3108
          %v3110 = vpop.f32.mrf.mxu0
          %3111 = vdwg.mxu0
          %3112 = vmatpush.bf16.msra.mxu0 %v2508
          %3113 = vmatpush.bf16.msra.mxu0 %v2504
          %3114 = vmatpush.bf16.msra.mxu0 %v2500
          %3115 = vmatpush.bf16.msra.mxu0 %v2496
          %3116 = vmatpush.bf16.msra.mxu0 %v2492
          %3117 = vmatpush.bf16.msra.mxu0 %v2488
          %3118 = vmatpush.bf16.msra.mxu0 %v2484
          %3119 = vmatpush.bf16.msra.mxu0 %v2480
          %3120 = vmatmul.bf16.gmra.mxu0 %v1290
          %v3121 = vpop.f32.mrf.mxu0
          %v3122 = vadd.f32 %v3109, %v3121
          %v3123 = vpop.f32.mrf.mxu0
          %3124 = vdwg.mxu0
          %3125 = vmatpush.bf16.msra.mxu0 %v2540
          %3126 = vmatpush.bf16.msra.mxu0 %v2536
          %3127 = vmatpush.bf16.msra.mxu0 %v2532
          %3128 = vmatpush.bf16.msra.mxu0 %v2528
          %3129 = vmatpush.bf16.msra.mxu0 %v2524
          %3130 = vmatpush.bf16.msra.mxu0 %v2520
          %3131 = vmatpush.bf16.msra.mxu0 %v2516
          %3132 = vmatpush.bf16.msra.mxu0 %v2512
          %3133 = vmatmul.bf16.gmra.mxu0 %v1291
          %v3134 = vpop.f32.mrf.mxu0
          %v3135 = vadd.f32 %v3122, %v3134
          %v3136 = vpop.f32.mrf.mxu0
          %3137 = vdwg.mxu0
          %3138 = vmatpush.bf16.msra.mxu0 %v2572
          %3139 = vmatpush.bf16.msra.mxu0 %v2568
          %3140 = vmatpush.bf16.msra.mxu0 %v2564
          %3141 = vmatpush.bf16.msra.mxu0 %v2560
          %3142 = vmatpush.bf16.msra.mxu0 %v2556
          %3143 = vmatpush.bf16.msra.mxu0 %v2552
          %3144 = vmatpush.bf16.msra.mxu0 %v2548
          %3145 = vmatpush.bf16.msra.mxu0 %v2544
          %3146 = vmatmul.bf16.gmra.mxu0 %v1292
          %v3147 = vpop.f32.mrf.mxu0
          %v3148 = vadd.f32 %v3135, %v3147
          %v3149 = vpop.f32.mrf.mxu0
          %3150 = vdwg.mxu0
          %3151 = vmatpush.bf16.msra.mxu0 %v2349
          %3152 = vmatpush.bf16.msra.mxu0 %v2345
          %3153 = vmatpush.bf16.msra.mxu0 %v2341
          %3154 = vmatpush.bf16.msra.mxu0 %v2337
          %3155 = vmatpush.bf16.msra.mxu0 %v2333
          %3156 = vmatpush.bf16.msra.mxu0 %v2329
          %3157 = vmatpush.bf16.msra.mxu0 %v2325
          %3158 = vmatpush.bf16.msra.mxu0 %v2321
          %3159 = vmatmul.bf16.gmra.mxu0 %v1285
          %v3160 = vpop.f32.mrf.mxu0
          %v3161 = vadd.f32 %v2834, %v3160
          %v3162 = vpop.f32.mrf.mxu0
          %3163 = vdwg.mxu0
          %3164 = vmatpush.bf16.msra.mxu0 %v2381
          %3165 = vmatpush.bf16.msra.mxu0 %v2377
          %3166 = vmatpush.bf16.msra.mxu0 %v2373
          %3167 = vmatpush.bf16.msra.mxu0 %v2369
          %3168 = vmatpush.bf16.msra.mxu0 %v2365
          %3169 = vmatpush.bf16.msra.mxu0 %v2361
          %3170 = vmatpush.bf16.msra.mxu0 %v2357
          %3171 = vmatpush.bf16.msra.mxu0 %v2353
          %3172 = vmatmul.bf16.gmra.mxu0 %v1286
          %v3173 = vpop.f32.mrf.mxu0
          %v3174 = vadd.f32 %v3161, %v3173
          %v3175 = vpop.f32.mrf.mxu0
          %3176 = vdwg.mxu0
          %3177 = vmatpush.bf16.msra.mxu0 %v2413
          %3178 = vmatpush.bf16.msra.mxu0 %v2409
          %3179 = vmatpush.bf16.msra.mxu0 %v2405
          %3180 = vmatpush.bf16.msra.mxu0 %v2401
          %3181 = vmatpush.bf16.msra.mxu0 %v2397
          %3182 = vmatpush.bf16.msra.mxu0 %v2393
          %3183 = vmatpush.bf16.msra.mxu0 %v2389
          %3184 = vmatpush.bf16.msra.mxu0 %v2385
          %3185 = vmatmul.bf16.gmra.mxu0 %v1287
          %v3186 = vpop.f32.mrf.mxu0
          %v3187 = vadd.f32 %v3174, %v3186
          %v3188 = vpop.f32.mrf.mxu0
          %3189 = vdwg.mxu0
          %3190 = vmatpush.bf16.msra.mxu0 %v2445
          %3191 = vmatpush.bf16.msra.mxu0 %v2441
          %3192 = vmatpush.bf16.msra.mxu0 %v2437
          %3193 = vmatpush.bf16.msra.mxu0 %v2433
          %3194 = vmatpush.bf16.msra.mxu0 %v2429
          %3195 = vmatpush.bf16.msra.mxu0 %v2425
          %3196 = vmatpush.bf16.msra.mxu0 %v2421
          %3197 = vmatpush.bf16.msra.mxu0 %v2417
          %3198 = vmatmul.bf16.gmra.mxu0 %v1288
          %v3199 = vpop.f32.mrf.mxu0
          %v3200 = vadd.f32 %v3187, %v3199
          %v3201 = vpop.f32.mrf.mxu0
          %3202 = vdwg.mxu0
          %3203 = vmatpush.bf16.msra.mxu0 %v2477
          %3204 = vmatpush.bf16.msra.mxu0 %v2473
          %3205 = vmatpush.bf16.msra.mxu0 %v2469
          %3206 = vmatpush.bf16.msra.mxu0 %v2465
          %3207 = vmatpush.bf16.msra.mxu0 %v2461
          %3208 = vmatpush.bf16.msra.mxu0 %v2457
          %3209 = vmatpush.bf16.msra.mxu0 %v2453
          %3210 = vmatpush.bf16.msra.mxu0 %v2449
          %3211 = vmatmul.bf16.gmra.mxu0 %v1289
          %v3212 = vpop.f32.mrf.mxu0
          %v3213 = vadd.f32 %v3200, %v3212
          %v3214 = vpop.f32.mrf.mxu0
          %3215 = vdwg.mxu0
          %3216 = vmatpush.bf16.msra.mxu0 %v2509
          %3217 = vmatpush.bf16.msra.mxu0 %v2505
          %3218 = vmatpush.bf16.msra.mxu0 %v2501
          %3219 = vmatpush.bf16.msra.mxu0 %v2497
          %3220 = vmatpush.bf16.msra.mxu0 %v2493
          %3221 = vmatpush.bf16.msra.mxu0 %v2489
          %3222 = vmatpush.bf16.msra.mxu0 %v2485
          %3223 = vmatpush.bf16.msra.mxu0 %v2481
          %3224 = vmatmul.bf16.gmra.mxu0 %v1290
          %v3225 = vpop.f32.mrf.mxu0
          %v3226 = vadd.f32 %v3213, %v3225
          %v3227 = vpop.f32.mrf.mxu0
          %3228 = vdwg.mxu0
          %3229 = vmatpush.bf16.msra.mxu0 %v2541
          %3230 = vmatpush.bf16.msra.mxu0 %v2537
          %3231 = vmatpush.bf16.msra.mxu0 %v2533
          %3232 = vmatpush.bf16.msra.mxu0 %v2529
          %3233 = vmatpush.bf16.msra.mxu0 %v2525
          %3234 = vmatpush.bf16.msra.mxu0 %v2521
          %3235 = vmatpush.bf16.msra.mxu0 %v2517
          %3236 = vmatpush.bf16.msra.mxu0 %v2513
          %3237 = vmatmul.bf16.gmra.mxu0 %v1291
          %v3238 = vpop.f32.mrf.mxu0
          %v3239 = vadd.f32 %v3226, %v3238
          %v3240 = vpop.f32.mrf.mxu0
          %3241 = vdwg.mxu0
          %3242 = vmatpush.bf16.msra.mxu0 %v2573
          %3243 = vmatpush.bf16.msra.mxu0 %v2569
          %3244 = vmatpush.bf16.msra.mxu0 %v2565
          %3245 = vmatpush.bf16.msra.mxu0 %v2561
          %3246 = vmatpush.bf16.msra.mxu0 %v2557
          %3247 = vmatpush.bf16.msra.mxu0 %v2553
          %3248 = vmatpush.bf16.msra.mxu0 %v2549
          %3249 = vmatpush.bf16.msra.mxu0 %v2545
          %3250 = vmatmul.bf16.gmra.mxu0 %v1292
          %v3251 = vpop.f32.mrf.mxu0
          %v3252 = vadd.f32 %v3239, %v3251
          %v3253 = vpop.f32.mrf.mxu0
          %3254 = vdwg.mxu0
          %v3255 = vmax.f32 %v2940, 0.0
          %v3256 = vmax.f32 %v3044, 0.0
          %v3257 = vmax.f32 %v3148, 0.0
          %v3258 = vmax.f32 %v3252, 0.0
          %v3259 = vpack.c.bf16 %v3255, %v3255
          %v3260 = vpack.c.bf16 %v3256, %v3256
          %v3261 = vpack.c.bf16 %v3257, %v3257
          %v3262 = vpack.c.bf16 %v3258, %v3258
          %v3263 = vld [vmem:[#allocation9] sm:$0xff]
          %v3264 = vld [vmem:[#allocation9 + $0x8] sm:$0xff]
          %v3265 = vld [vmem:[#allocation9 + $0x10] sm:$0xff]
          %v3266 = vld [vmem:[#allocation9 + $0x18] sm:$0xff]
          %v3267 = vld [vmem:[#allocation9 + $0x20] sm:$0xff]
          %v3268 = vld [vmem:[#allocation9 + $0x28] sm:$0xff]
          %v3269 = vld [vmem:[#allocation9 + $0x30] sm:$0xff]
          %v3270 = vld [vmem:[#allocation9 + $0x38] sm:$0xff]
          %v3271 = vld [vmem:[#allocation9 + $0x40] sm:$0xff]
          %v3272 = vld [vmem:[#allocation9 + $0x48] sm:$0xff]
          %v3273 = vld [vmem:[#allocation9 + $0x50] sm:$0xff]
          %v3274 = vld [vmem:[#allocation9 + $0x58] sm:$0xff]
          %v3275 = vld [vmem:[#allocation9 + $0x60] sm:$0xff]
          %v3276 = vld [vmem:[#allocation9 + $0x68] sm:$0xff]
          %v3277 = vld [vmem:[#allocation9 + $0x70] sm:$0xff]
          %v3278 = vld [vmem:[#allocation9 + $0x78] sm:$0xff]
          %v3279 = vld [vmem:[#allocation9 + $0x80] sm:$0xff]
          %v3280 = vld [vmem:[#allocation9 + $0x88] sm:$0xff]
          %v3281 = vld [vmem:[#allocation9 + $0x90] sm:$0xff]
          %v3282 = vld [vmem:[#allocation9 + $0x98] sm:$0xff]
          %v3283 = vld [vmem:[#allocation9 + $0xa0] sm:$0xff]
          %v3284 = vld [vmem:[#allocation9 + $0xa8] sm:$0xff]
          %v3285 = vld [vmem:[#allocation9 + $0xb0] sm:$0xff]
          %v3286 = vld [vmem:[#allocation9 + $0xb8] sm:$0xff]
          %v3287 = vld [vmem:[#allocation9 + $0xc0] sm:$0xff]
          %v3288 = vld [vmem:[#allocation9 + $0xc8] sm:$0xff]
          %v3289 = vld [vmem:[#allocation9 + $0xd0] sm:$0xff]
          %v3290 = vld [vmem:[#allocation9 + $0xd8] sm:$0xff]
          %v3291 = vld [vmem:[#allocation9 + $0xe0] sm:$0xff]
          %v3292 = vld [vmem:[#allocation9 + $0xe8] sm:$0xff]
          %v3293 = vld [vmem:[#allocation9 + $0xf0] sm:$0xff]
          %v3294 = vld [vmem:[#allocation9 + $0xf8] sm:$0xff]
          %v3295 = vld [vmem:[#allocation9 + $0x100] sm:$0xff]
          %v3296 = vld [vmem:[#allocation9 + $0x108] sm:$0xff]
          %v3297 = vld [vmem:[#allocation9 + $0x110] sm:$0xff]
          %v3298 = vld [vmem:[#allocation9 + $0x118] sm:$0xff]
          %v3299 = vld [vmem:[#allocation9 + $0x120] sm:$0xff]
          %v3300 = vld [vmem:[#allocation9 + $0x128] sm:$0xff]
          %v3301 = vld [vmem:[#allocation9 + $0x130] sm:$0xff]
          %v3302 = vld [vmem:[#allocation9 + $0x138] sm:$0xff]
          %v3303 = vld [vmem:[#allocation9 + $0x140] sm:$0xff]
          %v3304 = vld [vmem:[#allocation9 + $0x148] sm:$0xff]
          %v3305 = vld [vmem:[#allocation9 + $0x150] sm:$0xff]
          %v3306 = vld [vmem:[#allocation9 + $0x158] sm:$0xff]
          %v3307 = vld [vmem:[#allocation9 + $0x160] sm:$0xff]
          %v3308 = vld [vmem:[#allocation9 + $0x168] sm:$0xff]
          %v3309 = vld [vmem:[#allocation9 + $0x170] sm:$0xff]
          %v3310 = vld [vmem:[#allocation9 + $0x178] sm:$0xff]
          %v3311 = vld [vmem:[#allocation9 + $0x180] sm:$0xff]
          %v3312 = vld [vmem:[#allocation9 + $0x188] sm:$0xff]
          %v3313 = vld [vmem:[#allocation9 + $0x190] sm:$0xff]
          %v3314 = vld [vmem:[#allocation9 + $0x198] sm:$0xff]
          %v3315 = vld [vmem:[#allocation9 + $0x1a0] sm:$0xff]
          %v3316 = vld [vmem:[#allocation9 + $0x1a8] sm:$0xff]
          %v3317 = vld [vmem:[#allocation9 + $0x1b0] sm:$0xff]
          %v3318 = vld [vmem:[#allocation9 + $0x1b8] sm:$0xff]
          %v3319 = vld [vmem:[#allocation9 + $0x1c0] sm:$0xff]
          %v3320 = vld [vmem:[#allocation9 + $0x1c8] sm:$0xff]
          %v3321 = vld [vmem:[#allocation9 + $0x1d0] sm:$0xff]
          %v3322 = vld [vmem:[#allocation9 + $0x1d8] sm:$0xff]
          %v3323 = vld [vmem:[#allocation9 + $0x1e0] sm:$0xff]
          %v3324 = vld [vmem:[#allocation9 + $0x1e8] sm:$0xff]
          %v3325 = vld [vmem:[#allocation9 + $0x1f0] sm:$0xff]
          %v3326 = vld [vmem:[#allocation9 + $0x1f8] sm:$0xff]
          %v3327 = vld [vmem:[%s10] sm:$0x3]
          %v3392 = vunpack.c.l.b16 %v3263
          %v3393 = vunpack.c.h.b16 %v3263
          %v3394 = vunpack.c.l.b16 %v3264
          %v3395 = vunpack.c.h.b16 %v3264
          %v3396 = vunpack.c.l.b16 %v3265
          %v3397 = vunpack.c.h.b16 %v3265
          %v3398 = vunpack.c.l.b16 %v3266
          %v3399 = vunpack.c.h.b16 %v3266
          %v3400 = vunpack.c.l.b16 %v3267
          %v3401 = vunpack.c.h.b16 %v3267
          %v3402 = vunpack.c.l.b16 %v3268
          %v3403 = vunpack.c.h.b16 %v3268
          %v3404 = vunpack.c.l.b16 %v3269
          %v3405 = vunpack.c.h.b16 %v3269
          %v3406 = vunpack.c.l.b16 %v3270
          %v3407 = vunpack.c.h.b16 %v3270
          %v3408 = vunpack.c.l.b16 %v3271
          %v3409 = vunpack.c.h.b16 %v3271
          %v3410 = vunpack.c.l.b16 %v3272
          %v3411 = vunpack.c.h.b16 %v3272
          %v3412 = vunpack.c.l.b16 %v3273
          %v3413 = vunpack.c.h.b16 %v3273
          %v3414 = vunpack.c.l.b16 %v3274
          %v3415 = vunpack.c.h.b16 %v3274
          %v3416 = vunpack.c.l.b16 %v3275
          %v3417 = vunpack.c.h.b16 %v3275
          %v3418 = vunpack.c.l.b16 %v3276
          %v3419 = vunpack.c.h.b16 %v3276
          %v3420 = vunpack.c.l.b16 %v3277
          %v3421 = vunpack.c.h.b16 %v3277
          %v3422 = vunpack.c.l.b16 %v3278
          %v3423 = vunpack.c.h.b16 %v3278
          %v3424 = vunpack.c.l.b16 %v3279
          %v3425 = vunpack.c.h.b16 %v3279
          %v3426 = vunpack.c.l.b16 %v3280
          %v3427 = vunpack.c.h.b16 %v3280
          %v3428 = vunpack.c.l.b16 %v3281
          %v3429 = vunpack.c.h.b16 %v3281
          %v3430 = vunpack.c.l.b16 %v3282
          %v3431 = vunpack.c.h.b16 %v3282
          %v3432 = vunpack.c.l.b16 %v3283
          %v3433 = vunpack.c.h.b16 %v3283
          %v3434 = vunpack.c.l.b16 %v3284
          %v3435 = vunpack.c.h.b16 %v3284
          %v3436 = vunpack.c.l.b16 %v3285
          %v3437 = vunpack.c.h.b16 %v3285
          %v3438 = vunpack.c.l.b16 %v3286
          %v3439 = vunpack.c.h.b16 %v3286
          %v3440 = vunpack.c.l.b16 %v3287
          %v3441 = vunpack.c.h.b16 %v3287
          %v3442 = vunpack.c.l.b16 %v3288
          %v3443 = vunpack.c.h.b16 %v3288
          %v3444 = vunpack.c.l.b16 %v3289
          %v3445 = vunpack.c.h.b16 %v3289
          %v3446 = vunpack.c.l.b16 %v3290
          %v3447 = vunpack.c.h.b16 %v3290
          %v3448 = vunpack.c.l.b16 %v3291
          %v3449 = vunpack.c.h.b16 %v3291
          %v3450 = vunpack.c.l.b16 %v3292
          %v3451 = vunpack.c.h.b16 %v3292
          %v3452 = vunpack.c.l.b16 %v3293
          %v3453 = vunpack.c.h.b16 %v3293
          %v3454 = vunpack.c.l.b16 %v3294
          %v3455 = vunpack.c.h.b16 %v3294
          %v3456 = vunpack.c.l.b16 %v3295
          %v3457 = vunpack.c.h.b16 %v3295
          %v3458 = vunpack.c.l.b16 %v3296
          %v3459 = vunpack.c.h.b16 %v3296
          %v3460 = vunpack.c.l.b16 %v3297
          %v3461 = vunpack.c.h.b16 %v3297
          %v3462 = vunpack.c.l.b16 %v3298
          %v3463 = vunpack.c.h.b16 %v3298
          %v3464 = vunpack.c.l.b16 %v3299
          %v3465 = vunpack.c.h.b16 %v3299
          %v3466 = vunpack.c.l.b16 %v3300
          %v3467 = vunpack.c.h.b16 %v3300
          %v3468 = vunpack.c.l.b16 %v3301
          %v3469 = vunpack.c.h.b16 %v3301
          %v3470 = vunpack.c.l.b16 %v3302
          %v3471 = vunpack.c.h.b16 %v3302
          %v3472 = vunpack.c.l.b16 %v3303
          %v3473 = vunpack.c.h.b16 %v3303
          %v3474 = vunpack.c.l.b16 %v3304
          %v3475 = vunpack.c.h.b16 %v3304
          %v3476 = vunpack.c.l.b16 %v3305
          %v3477 = vunpack.c.h.b16 %v3305
          %v3478 = vunpack.c.l.b16 %v3306
          %v3479 = vunpack.c.h.b16 %v3306
          %v3480 = vunpack.c.l.b16 %v3307
          %v3481 = vunpack.c.h.b16 %v3307
          %v3482 = vunpack.c.l.b16 %v3308
          %v3483 = vunpack.c.h.b16 %v3308
          %v3484 = vunpack.c.l.b16 %v3309
          %v3485 = vunpack.c.h.b16 %v3309
          %v3486 = vunpack.c.l.b16 %v3310
          %v3487 = vunpack.c.h.b16 %v3310
          %v3488 = vunpack.c.l.b16 %v3311
          %v3489 = vunpack.c.h.b16 %v3311
          %v3490 = vunpack.c.l.b16 %v3312
          %v3491 = vunpack.c.h.b16 %v3312
          %v3492 = vunpack.c.l.b16 %v3313
          %v3493 = vunpack.c.h.b16 %v3313
          %v3494 = vunpack.c.l.b16 %v3314
          %v3495 = vunpack.c.h.b16 %v3314
          %v3496 = vunpack.c.l.b16 %v3315
          %v3497 = vunpack.c.h.b16 %v3315
          %v3498 = vunpack.c.l.b16 %v3316
          %v3499 = vunpack.c.h.b16 %v3316
          %v3500 = vunpack.c.l.b16 %v3317
          %v3501 = vunpack.c.h.b16 %v3317
          %v3502 = vunpack.c.l.b16 %v3318
          %v3503 = vunpack.c.h.b16 %v3318
          %v3504 = vunpack.c.l.b16 %v3319
          %v3505 = vunpack.c.h.b16 %v3319
          %v3506 = vunpack.c.l.b16 %v3320
          %v3507 = vunpack.c.h.b16 %v3320
          %v3508 = vunpack.c.l.b16 %v3321
          %v3509 = vunpack.c.h.b16 %v3321
          %v3510 = vunpack.c.l.b16 %v3322
          %v3511 = vunpack.c.h.b16 %v3322
          %v3512 = vunpack.c.l.b16 %v3323
          %v3513 = vunpack.c.h.b16 %v3323
          %v3514 = vunpack.c.l.b16 %v3324
          %v3515 = vunpack.c.h.b16 %v3324
          %v3516 = vunpack.c.l.b16 %v3325
          %v3517 = vunpack.c.h.b16 %v3325
          %v3518 = vunpack.c.l.b16 %v3326
          %v3519 = vunpack.c.h.b16 %v3326
          %v3520 = vpack.c.b16 %v3394, %v3392
          %v3521 = vpack.c.b16 %v3395, %v3393
          %v3522 = vpack.c.b16 %v3398, %v3396
          %v3523 = vpack.c.b16 %v3399, %v3397
          %v3524 = vpack.c.b16 %v3402, %v3400
          %v3525 = vpack.c.b16 %v3403, %v3401
          %v3526 = vpack.c.b16 %v3406, %v3404
          %v3527 = vpack.c.b16 %v3407, %v3405
          %v3528 = vpack.c.b16 %v3410, %v3408
          %v3529 = vpack.c.b16 %v3411, %v3409
          %v3530 = vpack.c.b16 %v3414, %v3412
          %v3531 = vpack.c.b16 %v3415, %v3413
          %v3532 = vpack.c.b16 %v3418, %v3416
          %v3533 = vpack.c.b16 %v3419, %v3417
          %v3534 = vpack.c.b16 %v3422, %v3420
          %v3535 = vpack.c.b16 %v3423, %v3421
          %v3536 = vpack.c.b16 %v3426, %v3424
          %v3537 = vpack.c.b16 %v3427, %v3425
          %v3538 = vpack.c.b16 %v3430, %v3428
          %v3539 = vpack.c.b16 %v3431, %v3429
          %v3540 = vpack.c.b16 %v3434, %v3432
          %v3541 = vpack.c.b16 %v3435, %v3433
          %v3542 = vpack.c.b16 %v3438, %v3436
          %v3543 = vpack.c.b16 %v3439, %v3437
          %v3544 = vpack.c.b16 %v3442, %v3440
          %v3545 = vpack.c.b16 %v3443, %v3441
          %v3546 = vpack.c.b16 %v3446, %v3444
          %v3547 = vpack.c.b16 %v3447, %v3445
          %v3548 = vpack.c.b16 %v3450, %v3448
          %v3549 = vpack.c.b16 %v3451, %v3449
          %v3550 = vpack.c.b16 %v3454, %v3452
          %v3551 = vpack.c.b16 %v3455, %v3453
          %v3552 = vpack.c.b16 %v3458, %v3456
          %v3553 = vpack.c.b16 %v3459, %v3457
          %v3554 = vpack.c.b16 %v3462, %v3460
          %v3555 = vpack.c.b16 %v3463, %v3461
          %v3556 = vpack.c.b16 %v3466, %v3464
          %v3557 = vpack.c.b16 %v3467, %v3465
          %v3558 = vpack.c.b16 %v3470, %v3468
          %v3559 = vpack.c.b16 %v3471, %v3469
          %v3560 = vpack.c.b16 %v3474, %v3472
          %v3561 = vpack.c.b16 %v3475, %v3473
          %v3562 = vpack.c.b16 %v3478, %v3476
          %v3563 = vpack.c.b16 %v3479, %v3477
          %v3564 = vpack.c.b16 %v3482, %v3480
          %v3565 = vpack.c.b16 %v3483, %v3481
          %v3566 = vpack.c.b16 %v3486, %v3484
          %v3567 = vpack.c.b16 %v3487, %v3485
          %v3568 = vpack.c.b16 %v3490, %v3488
          %v3569 = vpack.c.b16 %v3491, %v3489
          %v3570 = vpack.c.b16 %v3494, %v3492
          %v3571 = vpack.c.b16 %v3495, %v3493
          %v3572 = vpack.c.b16 %v3498, %v3496
          %v3573 = vpack.c.b16 %v3499, %v3497
          %v3574 = vpack.c.b16 %v3502, %v3500
          %v3575 = vpack.c.b16 %v3503, %v3501
          %v3576 = vpack.c.b16 %v3506, %v3504
          %v3577 = vpack.c.b16 %v3507, %v3505
          %v3578 = vpack.c.b16 %v3510, %v3508
          %v3579 = vpack.c.b16 %v3511, %v3509
          %v3580 = vpack.c.b16 %v3514, %v3512
          %v3581 = vpack.c.b16 %v3515, %v3513
          %v3582 = vpack.c.b16 %v3518, %v3516
          %v3583 = vpack.c.b16 %v3519, %v3517
          %v3649 = vperm.slane %v3327, 0
          %v3650 = vperm.slane %v3327, 1
          %3653 = vmatpush.bf16.msra.mxu0 %v3534
          %3654 = vmatpush.bf16.msra.mxu0 %v3532
          %3655 = vmatpush.bf16.msra.mxu0 %v3530
          %3656 = vmatpush.bf16.msra.mxu0 %v3528
          %3657 = vmatpush.bf16.msra.mxu0 %v3526
          %3658 = vmatpush.bf16.msra.mxu0 %v3524
          %3659 = vmatpush.bf16.msra.mxu0 %v3522
          %3660 = vmatpush.bf16.msra.mxu0 %v3520
          %3661 = vmatmul.bf16.gmra.mxu0 %v3259
          %v3662 = vpop.f32.mrf.mxu0
          %v3663 = vadd.f32 %v3649, %v3662
          %v3664 = vpop.f32.mrf.mxu0
          %3665 = vdwg.mxu0
          %3666 = vmatpush.bf16.msra.mxu0 %v3550
          %3667 = vmatpush.bf16.msra.mxu0 %v3548
          %3668 = vmatpush.bf16.msra.mxu0 %v3546
          %3669 = vmatpush.bf16.msra.mxu0 %v3544
          %3670 = vmatpush.bf16.msra.mxu0 %v3542
          %3671 = vmatpush.bf16.msra.mxu0 %v3540
          %3672 = vmatpush.bf16.msra.mxu0 %v3538
          %3673 = vmatpush.bf16.msra.mxu0 %v3536
          %3674 = vmatmul.bf16.gmra.mxu0 %v3260
          %v3675 = vpop.f32.mrf.mxu0
          %v3676 = vadd.f32 %v3663, %v3675
          %v3677 = vpop.f32.mrf.mxu0
          %3678 = vdwg.mxu0
          %3679 = vmatpush.bf16.msra.mxu0 %v3566
          %3680 = vmatpush.bf16.msra.mxu0 %v3564
          %3681 = vmatpush.bf16.msra.mxu0 %v3562
          %3682 = vmatpush.bf16.msra.mxu0 %v3560
          %3683 = vmatpush.bf16.msra.mxu0 %v3558
          %3684 = vmatpush.bf16.msra.mxu0 %v3556
          %3685 = vmatpush.bf16.msra.mxu0 %v3554
          %3686 = vmatpush.bf16.msra.mxu0 %v3552
          %3687 = vmatmul.bf16.gmra.mxu0 %v3261
          %v3688 = vpop.f32.mrf.mxu0
          %v3689 = vadd.f32 %v3676, %v3688
          %v3690 = vpop.f32.mrf.mxu0
          %3691 = vdwg.mxu0
          %3692 = vmatpush.bf16.msra.mxu0 %v3582
          %3693 = vmatpush.bf16.msra.mxu0 %v3580
          %3694 = vmatpush.bf16.msra.mxu0 %v3578
          %3695 = vmatpush.bf16.msra.mxu0 %v3576
          %3696 = vmatpush.bf16.msra.mxu0 %v3574
          %3697 = vmatpush.bf16.msra.mxu0 %v3572
          %3698 = vmatpush.bf16.msra.mxu0 %v3570
          %3699 = vmatpush.bf16.msra.mxu0 %v3568
          %3700 = vmatmul.bf16.gmra.mxu0 %v3262
          %v3701 = vpop.f32.mrf.mxu0
          %v3702 = vadd.f32 %v3689, %v3701
          %v3703 = vpop.f32.mrf.mxu0
          %3704 = vdwg.mxu0
          %3705 = vmatpush.bf16.msra.mxu0 %v3535
          %3706 = vmatpush.bf16.msra.mxu0 %v3533
          %3707 = vmatpush.bf16.msra.mxu0 %v3531
          %3708 = vmatpush.bf16.msra.mxu0 %v3529
          %3709 = vmatpush.bf16.msra.mxu0 %v3527
          %3710 = vmatpush.bf16.msra.mxu0 %v3525
          %3711 = vmatpush.bf16.msra.mxu0 %v3523
          %3712 = vmatpush.bf16.msra.mxu0 %v3521
          %3713 = vmatmul.bf16.gmra.mxu0 %v3259
          %v3714 = vpop.f32.mrf.mxu0
          %v3715 = vadd.f32 %v3650, %v3714
          %v3716 = vpop.f32.mrf.mxu0
          %3717 = vdwg.mxu0
          %3718 = vmatpush.bf16.msra.mxu0 %v3551
          %3719 = vmatpush.bf16.msra.mxu0 %v3549
          %3720 = vmatpush.bf16.msra.mxu0 %v3547
          %3721 = vmatpush.bf16.msra.mxu0 %v3545
          %3722 = vmatpush.bf16.msra.mxu0 %v3543
          %3723 = vmatpush.bf16.msra.mxu0 %v3541
          %3724 = vmatpush.bf16.msra.mxu0 %v3539
          %3725 = vmatpush.bf16.msra.mxu0 %v3537
          %3726 = vmatmul.bf16.gmra.mxu0 %v3260
          %v3727 = vpop.f32.mrf.mxu0
          %v3728 = vadd.f32 %v3715, %v3727
          %v3729 = vpop.f32.mrf.mxu0
          %3730 = vdwg.mxu0
          %3731 = vmatpush.bf16.msra.mxu0 %v3567
          %3732 = vmatpush.bf16.msra.mxu0 %v3565
          %3733 = vmatpush.bf16.msra.mxu0 %v3563
          %3734 = vmatpush.bf16.msra.mxu0 %v3561
          %3735 = vmatpush.bf16.msra.mxu0 %v3559
          %3736 = vmatpush.bf16.msra.mxu0 %v3557
          %3737 = vmatpush.bf16.msra.mxu0 %v3555
          %3738 = vmatpush.bf16.msra.mxu0 %v3553
          %3739 = vmatmul.bf16.gmra.mxu0 %v3261
          %v3740 = vpop.f32.mrf.mxu0
          %v3741 = vadd.f32 %v3728, %v3740
          %v3742 = vpop.f32.mrf.mxu0
          %3743 = vdwg.mxu0
          %3744 = vmatpush.bf16.msra.mxu0 %v3583
          %3745 = vmatpush.bf16.msra.mxu0 %v3581
          %3746 = vmatpush.bf16.msra.mxu0 %v3579
          %3747 = vmatpush.bf16.msra.mxu0 %v3577
          %3748 = vmatpush.bf16.msra.mxu0 %v3575
          %3749 = vmatpush.bf16.msra.mxu0 %v3573
          %3750 = vmatpush.bf16.msra.mxu0 %v3571
          %3751 = vmatpush.bf16.msra.mxu0 %v3569
          %3752 = vmatmul.bf16.gmra.mxu0 %v3262
          %v3753 = vpop.f32.mrf.mxu0
          %v3754 = vadd.f32 %v3741, %v3753
          %v3755 = vpop.f32.mrf.mxu0
          %3756 = vdwg.mxu0
          %v3757 = vmax.f32 %v3702, 0.0
          %v3758 = vmax.f32 %v3754, 0.0
          %v3759 = vpack.c.bf16 %v3757, %v3757
          %v3760 = vpack.c.bf16 %v3758, %v3758
          %v3761 = vld [vmem:[#allocation11] sm:$0xf]
          %v3762 = vld [vmem:[#allocation11 + $0x4] sm:$0xf]
          %v3763 = vld [vmem:[#allocation11 + $0x8] sm:$0xf]
          %v3764 = vld [vmem:[#allocation11 + $0xc] sm:$0xf]
          %v3765 = vld [vmem:[#allocation11 + $0x10] sm:$0xf]
          %v3766 = vld [vmem:[#allocation11 + $0x14] sm:$0xf]
          %v3767 = vld [vmem:[#allocation11 + $0x18] sm:$0xf]
          %v3768 = vld [vmem:[#allocation11 + $0x1c] sm:$0xf]
          %v3769 = vld [vmem:[#allocation11 + $0x20] sm:$0xf]
          %v3770 = vld [vmem:[#allocation11 + $0x24] sm:$0xf]
          %v3771 = vld [vmem:[#allocation11 + $0x28] sm:$0xf]
          %v3772 = vld [vmem:[#allocation11 + $0x2c] sm:$0xf]
          %v3773 = vld [vmem:[#allocation11 + $0x30] sm:$0xf]
          %v3774 = vld [vmem:[#allocation11 + $0x34] sm:$0xf]
          %v3775 = vld [vmem:[#allocation11 + $0x38] sm:$0xf]
          %v3776 = vld [vmem:[#allocation11 + $0x3c] sm:$0xf]
          %v3777 = vld [vmem:[#allocation11 + $0x40] sm:$0xf]
          %v3778 = vld [vmem:[#allocation11 + $0x44] sm:$0xf]
          %v3779 = vld [vmem:[#allocation11 + $0x48] sm:$0xf]
          %v3780 = vld [vmem:[#allocation11 + $0x4c] sm:$0xf]
          %v3781 = vld [vmem:[#allocation11 + $0x50] sm:$0xf]
          %v3782 = vld [vmem:[#allocation11 + $0x54] sm:$0xf]
          %v3783 = vld [vmem:[#allocation11 + $0x58] sm:$0xf]
          %v3784 = vld [vmem:[#allocation11 + $0x5c] sm:$0xf]
          %v3785 = vld [vmem:[#allocation11 + $0x60] sm:$0xf]
          %v3786 = vld [vmem:[#allocation11 + $0x64] sm:$0xf]
          %v3787 = vld [vmem:[#allocation11 + $0x68] sm:$0xf]
          %v3788 = vld [vmem:[#allocation11 + $0x6c] sm:$0xf]
          %v3789 = vld [vmem:[#allocation11 + $0x70] sm:$0xf]
          %v3790 = vld [vmem:[#allocation11 + $0x74] sm:$0xf]
          %v3791 = vld [vmem:[#allocation11 + $0x78] sm:$0xf]
          %v3792 = vld [vmem:[#allocation11 + $0x7c] sm:$0xf]
          %v3793 = vld [vmem:[%s12] sm:$0x1]
          %v3826 = vunpack.c.l.b16 %v3761
          %v3827 = vunpack.c.l.b16 %v3762
          %v3828 = vunpack.c.l.b16 %v3763
          %v3829 = vunpack.c.l.b16 %v3764
          %v3830 = vunpack.c.l.b16 %v3765
          %v3831 = vunpack.c.l.b16 %v3766
          %v3832 = vunpack.c.l.b16 %v3767
          %v3833 = vunpack.c.l.b16 %v3768
          %v3834 = vunpack.c.l.b16 %v3769
          %v3835 = vunpack.c.l.b16 %v3770
          %v3836 = vunpack.c.l.b16 %v3771
          %v3837 = vunpack.c.l.b16 %v3772
          %v3838 = vunpack.c.l.b16 %v3773
          %v3839 = vunpack.c.l.b16 %v3774
          %v3840 = vunpack.c.l.b16 %v3775
          %v3841 = vunpack.c.l.b16 %v3776
          %v3842 = vunpack.c.l.b16 %v3777
          %v3843 = vunpack.c.l.b16 %v3778
          %v3844 = vunpack.c.l.b16 %v3779
          %v3845 = vunpack.c.l.b16 %v3780
          %v3846 = vunpack.c.l.b16 %v3781
          %v3847 = vunpack.c.l.b16 %v3782
          %v3848 = vunpack.c.l.b16 %v3783
          %v3849 = vunpack.c.l.b16 %v3784
          %v3850 = vunpack.c.l.b16 %v3785
          %v3851 = vunpack.c.l.b16 %v3786
          %v3852 = vunpack.c.l.b16 %v3787
          %v3853 = vunpack.c.l.b16 %v3788
          %v3854 = vunpack.c.l.b16 %v3789
          %v3855 = vunpack.c.l.b16 %v3790
          %v3856 = vunpack.c.l.b16 %v3791
          %v3857 = vunpack.c.l.b16 %v3792
          %v3858 = vpack.c.b16 %v3827, %v3826
          %v3859 = vpack.c.b16 %v3829, %v3828
          %v3860 = vpack.c.b16 %v3831, %v3830
          %v3861 = vpack.c.b16 %v3833, %v3832
          %v3862 = vpack.c.b16 %v3835, %v3834
          %v3863 = vpack.c.b16 %v3837, %v3836
          %v3864 = vpack.c.b16 %v3839, %v3838
          %v3865 = vpack.c.b16 %v3841, %v3840
          %v3866 = vpack.c.b16 %v3843, %v3842
          %v3867 = vpack.c.b16 %v3845, %v3844
          %v3868 = vpack.c.b16 %v3847, %v3846
          %v3869 = vpack.c.b16 %v3849, %v3848
          %v3870 = vpack.c.b16 %v3851, %v3850
          %v3871 = vpack.c.b16 %v3853, %v3852
          %v3872 = vpack.c.b16 %v3855, %v3854
          %v3873 = vpack.c.b16 %v3857, %v3856
          %3890 = vmatpush.bf16.msra.mxu0 %v3865
          %3891 = vmatpush.bf16.msra.mxu0 %v3864
          %3892 = vmatpush.bf16.msra.mxu0 %v3863
          %3893 = vmatpush.bf16.msra.mxu0 %v3862
          %3894 = vmatpush.bf16.msra.mxu0 %v3861
          %3895 = vmatpush.bf16.msra.mxu0 %v3860
          %3896 = vmatpush.bf16.msra.mxu0 %v3859
          %3897 = vmatpush.bf16.msra.mxu0 %v3858
          %3898 = vmatmul.bf16.gmra.mxu0 %v3759
          %v3899 = vpop.f32.mrf.mxu0
          %v3900 = vadd.f32 %v3793, %v3899
          %v3901 = vpop.f32.mrf.mxu0
          %3902 = vdwg.mxu0
          %3903 = vmatpush.bf16.msra.mxu0 %v3873
          %3904 = vmatpush.bf16.msra.mxu0 %v3872
          %3905 = vmatpush.bf16.msra.mxu0 %v3871
          %3906 = vmatpush.bf16.msra.mxu0 %v3870
          %3907 = vmatpush.bf16.msra.mxu0 %v3869
          %3908 = vmatpush.bf16.msra.mxu0 %v3868
          %3909 = vmatpush.bf16.msra.mxu0 %v3867
          %3910 = vmatpush.bf16.msra.mxu0 %v3866
          %3911 = vmatmul.bf16.gmra.mxu0 %v3760
          %v3912 = vpop.f32.mrf.mxu0
          %v3913 = vadd.f32 %v3900, %v3912
          %v3914 = vpop.f32.mrf.mxu0
          %3915 = vdwg.mxu0
          %3916 = vst [vmem:[%s538] sm:$0x1] %v3913
        $region100: #{tpu_custom_call.1} parent=71 // pred_fallthru
          _
        %s3917 = sand.u32 %s330, 1
        %s3918 = scalar_lea.sflag [#allocation5], %s3917
        %s3919 = sand.u32 %s330, 1
        %s3920 = scalar_lea.vmem [#allocation12], %s3919
        // Predicated region
        $region101: #{tpu_custom_call.1} parent=71 // pred_check
          %p3921 = pneg %p340
        $region102: #{tpu_custom_call.1} parent=71 // pred_check_branch
          %3923 = sbr.rel (%p3921) target = $region104
        $region103: #{tpu_custom_call.1} parent=71 // pred_region
          %3925 = vsyncadd %s3918, 0
          %s3926 = scalar_lea.hbm %s13, %s34
          %s3928 = sshll.u32 %s3920, 4
          %s3929 = int_to_ptr.vmem [resolvable:$true] %s3928
          %s3930 = sshll.u32 %s3926, 4
          %s3931 = int_to_ptr.hbm [resolvable:$true] %s3930
          %3933 = dma.vmem_to_hbm [thread:$0]  %s3929, 16, %s3931, %s3918
        $region104: #{tpu_custom_call.1} parent=71 // pred_fallthru
          _
      $region72: #{tpu_custom_call.1} parent=5 // pred_fallthru
        _
      %p3934 = scmp.le.s32.totalorder 2, %s25
      // Predicated region
      $region105: #{tpu_custom_call.1} parent=5 // pred_check
        %p3935 = pneg %p3934
      $region106: #{tpu_custom_call.1} parent=5 // pred_check_branch
        %3937 = sbr.rel (%p3935) target = $region108
      $region107: #{tpu_custom_call.1} parent=5 // pred_region
        %s3938 = ssub.s32 %s25, 2
        // Predicated region
        $region109: #{tpu_custom_call.1} parent=107 // pred_check
          %p3939 = pneg %p346
        $region110: #{tpu_custom_call.1} parent=107 // pred_check_branch
          %3941 = sbr.rel (%p3939) target = $region112
        $region111: #{tpu_custom_call.1} parent=107 // pred_region
          %s3942 = sand.u32 %s331, 1
          %s3943 = scalar_lea.sflag [#allocation5], %s3942
          %s3944 = sand.u32 %s331, 1
          %s3945 = scalar_lea.vmem [#allocation12], %s3944
          %3947 = dma.done %s3943, 16
        $region112: #{tpu_custom_call.1} parent=107 // pred_fallthru
          _
      $region108: #{tpu_custom_call.1} parent=5 // pred_fallthru
        _
    $region6: #{tpu_custom_call.1} parent=1 // loop_footer
      %s29 = sadd.s32 1, %s25
    $region7: #{tpu_custom_call.1} parent=1 // loop_footer_branch
      %24 = sbr.rel target = $region3
    $region8: #{tpu_custom_call.1} parent=1 // loop_exit
      _
    %3948 = vsyncpa [#allocation4], 1
    %s3949 = scalar_lea.sflag [#allocation4], 1
    %3950 = vsyncpa %s3949, 1
    %3951 = vsyncpa [#allocation7], 1
    %3952 = vsyncpa [#allocation10], 1
    %3953 = vsyncpa [#allocation5], 1
    %s3954 = scalar_lea.sflag [#allocation5], 1
    %3955 = vsyncpa %s3954, 1

</llo_original>
